<compile_context>
chip_gen: v6e
topology: v6e:2x2x1
jax: 0.10.0
libtpu: 0.0.40
codegen_flags: <defaults>
</compile_context>

<pallas_src>
import jax
import jax.numpy as jnp
from jax import lax
from jax.experimental import pallas as pl
from jax.experimental.pallas import tpu as pltpu


def _mnrl_kernel(a_ref, p_ref, neg_ref, o_ref):
    """One batch-tile of MNRL.

    a_ref   : (TB, D)      anchors
    p_ref   : (TB, D)      positives
    neg_ref : (TB, k*D)    the k negatives of each row, concatenated along lanes
    o_ref   : (TB, 1)      per-row cross-entropy loss (target = positive column)
    """
    eps = 1e-7
    inv_eps = 1.0 / eps
    D = a_ref.shape[-1]
    k = neg_ref.shape[-1] // D

    a = a_ref[...].astype(jnp.float32)          # (TB, D)
    p = p_ref[...].astype(jnp.float32)          # (TB, D)

    # Row-sum as an MXU matmul with a ones column: moves the (2k+3) per-row
    # lane reductions off the 2-unit XLU onto the otherwise-idle MXU.
    ones_col = jnp.ones((D, 1), dtype=jnp.float32)   # hoisted once per grid step

    def rowsum(x):                              # (TB, D) -> (TB, 1), f32 exact
        return jnp.dot(x, ones_col,
                       precision=lax.Precision.HIGHEST,
                       preferred_element_type=jnp.float32)

    # 1 / max(||x||, eps)  ==  min(rsqrt(sum x^2), 1/eps)   (one EUP op per norm)
    inv_a = jnp.minimum(lax.rsqrt(rowsum(a * a)), inv_eps)      # (TB, 1)
    inv_p = jnp.minimum(lax.rsqrt(rowsum(p * p)), inv_eps)      # (TB, 1)

    pos = rowsum(a * p) * (inv_a * inv_p)                       # (TB, 1)

    # Cosine scores are bounded in [-1, 1]; a plain exp-sum is numerically safe,
    # so no running max / second pass is needed.
    s = jnp.exp(pos)
    for j in range(k):                          # k is small & static -> unrolled
        nj = neg_ref[:, j * D:(j + 1) * D].astype(jnp.float32)  # lane-aligned slice
        inv_n = jnp.minimum(lax.rsqrt(rowsum(nj * nj)), inv_eps)
        sj = rowsum(a * nj) * (inv_a * inv_n)                   # (TB, 1)
        s = s + jnp.exp(sj)

    # TODO(synk): torch forward has a `print(scores)` debug side-effect; omitted here.
    # CrossEntropyLoss with target class 0:  loss_i = logsumexp(scores_i) - scores_i[0]
    o_ref[...] = jnp.log(s) - pos


def _vmem_capacity_bytes():
    """Physical VMEM of the current chip; conservative fallback fits every gen."""
    try:
        return int(pltpu.get_tpu_info().vmem_capacity_bytes)
    except Exception:
        return 64 * 1024 * 1024      # v7x per-TC capacity (safe lower bound)


def _choose_block_b(B, D, k, in_itemsizes, vmem_cap_bytes):
    """Largest batch tile (multiple of 8, divides B) whose double-buffered input
    rows plus in-kernel f32 temporaries fit ~45% of physical VMEM, while keeping
    enough tiles for both v7x TensorCores and the DMA pipeline."""
    if B % 8 != 0 or B <= 8:
        return B                                     # single full tile
    isz_a, isz_p, isz_n = in_itemsizes
    per_row = (2 * D * (isz_a + isz_p + k * isz_n)   # double-buffered input rows
               + 8 * D * 4)                          # f32 upcasts / product temporaries
    budget = int(0.45 * vmem_cap_bytes)
    cap = max(8, budget // max(per_row, 1))
    # >= 4 tiles when B allows: both v7x TCs get work and the pipeline overlaps
    # prefetch / compute / writeback (>= 2 tiles minimum otherwise).
    min_tiles = 4 if B >= 32 else 2
    cap = min(cap, B // min_tiles)
    tb = max(8, min(B, (cap // 8) * 8))
    while B % tb != 0:                               # shrink to a divisor of B
        tb -= 8
    return tb


def mnrl_loss(anchor, positive_embeds, negative_embeds, margin=1.0, block_b=None):
    """Pallas implementation of MultipleNegativeRankingLoss.forward.

    anchor:           (B, D)
    positive_embeds:  (B, D)
    negative_embeds:  (B * k, D)   (rows [b*k, (b+1)*k) are anchor b's negatives,
                                    matching torch's .view(-1, k, D).permute(1, 0, 2))
    returns: scalar float32 loss

    `margin` is accepted only for signature parity; the torch forward never uses it.
    """
    B, D = anchor.shape
    k = negative_embeds.shape[0] // B

    # Pad the embedding dim to a lane-tile multiple so every per-negative slice
    # inside the kernel is vreg-aligned (zero-padding does not change dots/norms).
    if D % 128 != 0:
        pad = (-D) % 128
        anchor = jnp.pad(anchor, ((0, 0), (0, pad)))
        positive_embeds = jnp.pad(positive_embeds, ((0, 0), (0, pad)))
        negative_embeds = jnp.pad(negative_embeds, ((0, 0), (0, pad)))
        D = D + pad

    # Free row-major view: (B*k, D) -> (B, k*D). Row b holds that anchor's k
    # negatives concatenated along lanes — no HBM transpose pass.
    neg2d = negative_embeds.reshape(B, k * D)

    isz_a = jnp.dtype(anchor.dtype).itemsize
    isz_p = jnp.dtype(positive_embeds.dtype).itemsize
    isz_n = jnp.dtype(negative_embeds.dtype).itemsize

    vmem_cap = _vmem_capacity_bytes()
    tb = block_b if block_b is not None else _choose_block_b(
        B, D, k, (isz_a, isz_p, isz_n), vmem_cap)
    assert B % tb == 0 and (tb % 8 == 0 or tb == B), (B, tb)
    num_tiles = B // tb

    neg_spec = pl.BlockSpec((tb, k * D), lambda i: (i, 0))
    if tb < 256 and num_tiles >= 3:
        # Small tiles: 3-deep buffering keeps the dominant negatives stream
        # saturated across tile boundaries.
        neg_spec = pl.BlockSpec((tb, k * D), lambda i: (i, 0),
                                pipeline_mode=pl.Buffered(3))

    cost = pl.CostEstimate(
        flops=B * D * (6 * k + 9),
        transcendentals=B * (2 * k + 4),   # (k+2) rsqrt + (k+1) exp + 1 log per row
        bytes_accessed=B * D * (isz_a + isz_p + k * isz_n) + B * 4,
    )

    per_row = pl.pallas_call(
        _mnrl_kernel,
        out_shape=jax.ShapeDtypeStruct((B, 1), jnp.float32),
        grid=(num_tiles,),
        in_specs=[
            pl.BlockSpec((tb, D), lambda i: (i, 0)),
            pl.BlockSpec((tb, D), lambda i: (i, 0)),
            neg_spec,
        ],
        out_specs=pl.BlockSpec((tb, 1), lambda i: (i, 0)),
        compiler_params=pltpu.CompilerParams(
            dimension_semantics=("parallel",),
            vmem_limit_bytes=int(0.75 * vmem_cap),
        ),
        cost_estimate=cost,
    )(anchor, positive_embeds, neg2d)

    # Tiny final reduction (B floats) in plain JAX.
    return jnp.mean(per_row)


if __name__ == "__main__":
    # Small deterministic example: batch=16, embed_dim=128, k=4 negatives/anchor.
    # block_b=8 forces a 2-tile grid so the batch-tiled path is exercised.
    B, D, K = 16, 128, 4
    key = jax.random.PRNGKey(0)
    k1, k2, k3 = jax.random.split(key, 3)
    anchor = jax.random.normal(k1, (B, D), dtype=jnp.float32)
    positive = jax.random.normal(k2, (B, D), dtype=jnp.float32)
    negative = jax.random.normal(k3, (B * K, D), dtype=jnp.float32)

    loss = mnrl_loss(anchor, positive, negative, block_b=8)
    loss = jax.block_until_ready(loss)

    # Pure-JAX reference mirroring the torch forward semantics.
    def ref_loss(a, p, n):
        eps = 1e-7
        kk = n.shape[0] // a.shape[0]
        n3 = n.reshape(a.shape[0], kk, -1).transpose(1, 0, 2)      # (k, B, D)
        an = jnp.maximum(jnp.linalg.norm(a, axis=-1), eps)
        pn = jnp.maximum(jnp.linalg.norm(p, axis=-1), eps)
        nn = jnp.maximum(jnp.linalg.norm(n3, axis=-1), eps)
        pos = jnp.sum(a * p, axis=-1) / (an * pn)
        neg = (jnp.sum(a[None] * n3, axis=-1) / (an[None] * nn)).T
        scores = jnp.concatenate([pos[:, None], neg], axis=-1)
        lse = jax.scipy.special.logsumexp(scores, axis=-1)
        return jnp.mean(lse - scores[:, 0])

    ref = ref_loss(anchor, positive, negative)
    assert jnp.allclose(loss, ref, atol=1e-4, rtol=1e-4), (loss, ref)

    print("KERNEL_OK")
</pallas_src>

<mosaic_0001>
module attributes {stable_mosaic.version = 11 : i64} {
  func.func @_mnrl_kernel(%arg0: i32, %arg1: memref<8x128xf32, #tpu.memory_space<vmem>>, %arg2: memref<8x128xf32, #tpu.memory_space<vmem>>, %arg3: memref<8x512xf32, #tpu.memory_space<vmem>>, %arg4: memref<8x1xf32, #tpu.memory_space<vmem>>) attributes {dimension_semantics = [#tpu.dimension_semantics<parallel>], iteration_bounds = array<i64: 2>, scalar_prefetch = 0 : i64, scratch_operands = 0 : i64, tpu.core_type = #tpu.core_type<tc>, window_params = [{transform_indices = @transform_0, window_bounds = array<i64: 8, 128>}, {transform_indices = @transform_1, window_bounds = array<i64: 8, 128>}, {transform_indices = @transform_2, window_bounds = array<i64: 8, 512>}, {transform_indices = @transform_3, window_bounds = array<i64: 8, 1>}]} {
    %c0 = arith.constant 0 : index
    %c0_0 = arith.constant 0 : index
    %0 = vector.load %arg1[%c0, %c0_0] : memref<8x128xf32, #tpu.memory_space<vmem>>, vector<8x128xf32>
    %c0_1 = arith.constant 0 : index
    %c0_2 = arith.constant 0 : index
    %1 = vector.load %arg2[%c0_1, %c0_2] : memref<8x128xf32, #tpu.memory_space<vmem>>, vector<8x128xf32>
    %cst = arith.constant 1.000000e+00 : f32
    %2 = vector.broadcast %cst : f32 to vector<128x1xf32>
    %3 = arith.mulf %0, %0 : vector<8x128xf32>
    %cst_3 = arith.constant dense<0.000000e+00> : vector<8x1xf32>
    %4 = tpu.matmul %3, %2, %cst_3 {dimension_numbers = #tpu.dot_dimension_numbers<[1], [0], [0], [1], [0, 0, 1, 1], [], []>, precision = #tpu.contract_precision<fp32>} : vector<8x128xf32>, vector<128x1xf32>, vector<8x1xf32> -> vector<8x1xf32>
    %5 = math.rsqrt %4 : vector<8x1xf32>
    %cst_4 = arith.constant 1.000000e+07 : f32
    %6 = vector.broadcast %cst_4 : f32 to vector<8x1xf32>
    %7 = arith.minimumf %5, %6 : vector<8x1xf32>
    %8 = arith.mulf %1, %1 : vector<8x128xf32>
    %cst_5 = arith.constant dense<0.000000e+00> : vector<8x1xf32>
    %9 = tpu.matmul %8, %2, %cst_5 {dimension_numbers = #tpu.dot_dimension_numbers<[1], [0], [0], [1], [0, 0, 1, 1], [], []>, precision = #tpu.contract_precision<fp32>} : vector<8x128xf32>, vector<128x1xf32>, vector<8x1xf32> -> vector<8x1xf32>
    %10 = math.rsqrt %9 : vector<8x1xf32>
    %cst_6 = arith.constant 1.000000e+07 : f32
    %11 = vector.broadcast %cst_6 : f32 to vector<8x1xf32>
    %12 = arith.minimumf %10, %11 : vector<8x1xf32>
    %13 = arith.mulf %0, %1 : vector<8x128xf32>
    %cst_7 = arith.constant dense<0.000000e+00> : vector<8x1xf32>
    %14 = tpu.matmul %13, %2, %cst_7 {dimension_numbers = #tpu.dot_dimension_numbers<[1], [0], [0], [1], [0, 0, 1, 1], [], []>, precision = #tpu.contract_precision<fp32>} : vector<8x128xf32>, vector<128x1xf32>, vector<8x1xf32> -> vector<8x1xf32>
    %15 = arith.mulf %7, %12 : vector<8x1xf32>
    %16 = arith.mulf %14, %15 : vector<8x1xf32>
    %17 = math.exp %16 : vector<8x1xf32>
    %c0_8 = arith.constant 0 : index
    %c0_9 = arith.constant 0 : index
    %18 = vector.load %arg3[%c0_8, %c0_9] : memref<8x512xf32, #tpu.memory_space<vmem>>, vector<8x128xf32>
    %19 = arith.mulf %18, %18 : vector<8x128xf32>
    %cst_10 = arith.constant dense<0.000000e+00> : vector<8x1xf32>
    %20 = tpu.matmul %19, %2, %cst_10 {dimension_numbers = #tpu.dot_dimension_numbers<[1], [0], [0], [1], [0, 0, 1, 1], [], []>, precision = #tpu.contract_precision<fp32>} : vector<8x128xf32>, vector<128x1xf32>, vector<8x1xf32> -> vector<8x1xf32>
    %21 = math.rsqrt %20 : vector<8x1xf32>
    %cst_11 = arith.constant 1.000000e+07 : f32
    %22 = vector.broadcast %cst_11 : f32 to vector<8x1xf32>
    %23 = arith.minimumf %21, %22 : vector<8x1xf32>
    %24 = arith.mulf %0, %18 : vector<8x128xf32>
    %cst_12 = arith.constant dense<0.000000e+00> : vector<8x1xf32>
    %25 = tpu.matmul %24, %2, %cst_12 {dimension_numbers = #tpu.dot_dimension_numbers<[1], [0], [0], [1], [0, 0, 1, 1], [], []>, precision = #tpu.contract_precision<fp32>} : vector<8x128xf32>, vector<128x1xf32>, vector<8x1xf32> -> vector<8x1xf32>
    %26 = arith.mulf %7, %23 : vector<8x1xf32>
    %27 = arith.mulf %25, %26 : vector<8x1xf32>
    %28 = math.exp %27 : vector<8x1xf32>
    %29 = arith.addf %17, %28 : vector<8x1xf32>
    %c0_13 = arith.constant 0 : index
    %c128 = arith.constant 128 : index
    %30 = vector.load %arg3[%c0_13, %c128] : memref<8x512xf32, #tpu.memory_space<vmem>>, vector<8x128xf32>
    %31 = arith.mulf %30, %30 : vector<8x128xf32>
    %cst_14 = arith.constant dense<0.000000e+00> : vector<8x1xf32>
    %32 = tpu.matmul %31, %2, %cst_14 {dimension_numbers = #tpu.dot_dimension_numbers<[1], [0], [0], [1], [0, 0, 1, 1], [], []>, precision = #tpu.contract_precision<fp32>} : vector<8x128xf32>, vector<128x1xf32>, vector<8x1xf32> -> vector<8x1xf32>
    %33 = math.rsqrt %32 : vector<8x1xf32>
    %cst_15 = arith.constant 1.000000e+07 : f32
    %34 = vector.broadcast %cst_15 : f32 to vector<8x1xf32>
    %35 = arith.minimumf %33, %34 : vector<8x1xf32>
    %36 = arith.mulf %0, %30 : vector<8x128xf32>
    %cst_16 = arith.constant dense<0.000000e+00> : vector<8x1xf32>
    %37 = tpu.matmul %36, %2, %cst_16 {dimension_numbers = #tpu.dot_dimension_numbers<[1], [0], [0], [1], [0, 0, 1, 1], [], []>, precision = #tpu.contract_precision<fp32>} : vector<8x128xf32>, vector<128x1xf32>, vector<8x1xf32> -> vector<8x1xf32>
    %38 = arith.mulf %7, %35 : vector<8x1xf32>
    %39 = arith.mulf %37, %38 : vector<8x1xf32>
    %40 = math.exp %39 : vector<8x1xf32>
    %41 = arith.addf %29, %40 : vector<8x1xf32>
    %c0_17 = arith.constant 0 : index
    %c256 = arith.constant 256 : index
    %42 = vector.load %arg3[%c0_17, %c256] : memref<8x512xf32, #tpu.memory_space<vmem>>, vector<8x128xf32>
    %43 = arith.mulf %42, %42 : vector<8x128xf32>
    %cst_18 = arith.constant dense<0.000000e+00> : vector<8x1xf32>
    %44 = tpu.matmul %43, %2, %cst_18 {dimension_numbers = #tpu.dot_dimension_numbers<[1], [0], [0], [1], [0, 0, 1, 1], [], []>, precision = #tpu.contract_precision<fp32>} : vector<8x128xf32>, vector<128x1xf32>, vector<8x1xf32> -> vector<8x1xf32>
    %45 = math.rsqrt %44 : vector<8x1xf32>
    %cst_19 = arith.constant 1.000000e+07 : f32
    %46 = vector.broadcast %cst_19 : f32 to vector<8x1xf32>
    %47 = arith.minimumf %45, %46 : vector<8x1xf32>
    %48 = arith.mulf %0, %42 : vector<8x128xf32>
    %cst_20 = arith.constant dense<0.000000e+00> : vector<8x1xf32>
    %49 = tpu.matmul %48, %2, %cst_20 {dimension_numbers = #tpu.dot_dimension_numbers<[1], [0], [0], [1], [0, 0, 1, 1], [], []>, precision = #tpu.contract_precision<fp32>} : vector<8x128xf32>, vector<128x1xf32>, vector<8x1xf32> -> vector<8x1xf32>
    %50 = arith.mulf %7, %47 : vector<8x1xf32>
    %51 = arith.mulf %49, %50 : vector<8x1xf32>
    %52 = math.exp %51 : vector<8x1xf32>
    %53 = arith.addf %41, %52 : vector<8x1xf32>
    %c0_21 = arith.constant 0 : index
    %c384 = arith.constant 384 : index
    %54 = vector.load %arg3[%c0_21, %c384] : memref<8x512xf32, #tpu.memory_space<vmem>>, vector<8x128xf32>
    %55 = arith.mulf %54, %54 : vector<8x128xf32>
    %cst_22 = arith.constant dense<0.000000e+00> : vector<8x1xf32>
    %56 = tpu.matmul %55, %2, %cst_22 {dimension_numbers = #tpu.dot_dimension_numbers<[1], [0], [0], [1], [0, 0, 1, 1], [], []>, precision = #tpu.contract_precision<fp32>} : vector<8x128xf32>, vector<128x1xf32>, vector<8x1xf32> -> vector<8x1xf32>
    %57 = math.rsqrt %56 : vector<8x1xf32>
    %cst_23 = arith.constant 1.000000e+07 : f32
    %58 = vector.broadcast %cst_23 : f32 to vector<8x1xf32>
    %59 = arith.minimumf %57, %58 : vector<8x1xf32>
    %60 = arith.mulf %0, %54 : vector<8x128xf32>
    %cst_24 = arith.constant dense<0.000000e+00> : vector<8x1xf32>
    %61 = tpu.matmul %60, %2, %cst_24 {dimension_numbers = #tpu.dot_dimension_numbers<[1], [0], [0], [1], [0, 0, 1, 1], [], []>, precision = #tpu.contract_precision<fp32>} : vector<8x128xf32>, vector<128x1xf32>, vector<8x1xf32> -> vector<8x1xf32>
    %62 = arith.mulf %7, %59 : vector<8x1xf32>
    %63 = arith.mulf %61, %62 : vector<8x1xf32>
    %64 = math.exp %63 : vector<8x1xf32>
    %65 = arith.addf %53, %64 : vector<8x1xf32>
    %66 = math.log %65 : vector<8x1xf32>
    %67 = arith.subf %66, %16 : vector<8x1xf32>
    %c0_25 = arith.constant 0 : index
    %c0_26 = arith.constant 0 : index
    %68 = vector.load %arg4[%c0_25, %c0_26] : memref<8x1xf32, #tpu.memory_space<vmem>>, vector<8x1xf32>
    tpu.vector_store %arg4[%c0_25, %c0_26], %67 {strides = array<i32>} : memref<8x1xf32, #tpu.memory_space<vmem>>, vector<8x1xf32>,
    return
  }
  func.func @transform_0(%arg0: i32) -> (i32, i32) {
    %c0_i32 = arith.constant 0 : i32
    %c0_i32_0 = arith.constant 0 : i32
    return %arg0, %c0_i32 : i32, i32
  }
  func.func @transform_1(%arg0: i32) -> (i32, i32) {
    %c0_i32 = arith.constant 0 : i32
    %c0_i32_0 = arith.constant 0 : i32
    return %arg0, %c0_i32 : i32, i32
  }
  func.func @transform_2(%arg0: i32) -> (i32, i32) {
    %c0_i32 = arith.constant 0 : i32
    %c0_i32_0 = arith.constant 0 : i32
    return %arg0, %c0_i32 : i32, i32
  }
  func.func @transform_3(%arg0: i32) -> (i32, i32) {
    %c0_i32 = arith.constant 0 : i32
    %c0_i32_0 = arith.constant 0 : i32
    return %arg0, %c0_i32 : i32, i32
  }
}

</mosaic_0001>

<llo_original>
// kernel: tpu_custom_call.1
$region0: #{tpu_custom_call.1}
  #allocation0 [shape = 'u32[]', space=smem, size = 0x4, offset = 0x4, fixed_abs, tag = 'smem constant byte address 0x4 - core index']
  #allocation1 [shape = 'u32[144,128]{1,0:T(1,128)}', space=vmem, size = 0x12000, scoped, tag = 'internal scratch']
  %s0 = inlined_call_operand.hbm [shape: f32[16,128], index: 0, kind: input, shape index: {}]
  %s1 = inlined_call_operand.hbm [shape: f32[16,128], index: 1, kind: input, shape index: {}]
  %s2 = inlined_call_operand.hbm [shape: f32[16,512], index: 2, kind: input, shape index: {}]
  %s3 = inlined_call_operand.vmem [shape: f32[16,1], index: 3, kind: output, shape index: {}]
  %s4 = sld [smem:[#allocation0]]
  $region57: #{tpu_custom_call.1} parent=0
    _
  %s6 = ssub.s32 1, %s4
  %s7 = scalar_select 0, %s6, %s4
  $region1: #{tpu_custom_call.1} parent=0
    #allocation2 [shape = 'u8[8192]{0}', space=vmem, size = 0x2000, scoped, tag = 'input window, operand 0']
    #allocation3 [shape = 's32[2]{0}', space=sflag, size = 0x8, scoped, tag = 'scoped memory for tpu_custom_call.1']
    #allocation4 [shape = 'u8[8192]{0}', space=vmem, size = 0x2000, scoped, tag = 'input window, operand 1']
    #allocation5 [shape = 's32[2]{0}', space=sflag, size = 0x8, scoped, tag = 'scoped memory for tpu_custom_call.1']
    #allocation6 [shape = 'u8[32768]{0}', space=vmem, size = 0x8000, scoped, tag = 'input window, operand 2']
    %8 = vsyncpa [#allocation3], 0
    %s9 = scalar_lea.sflag [#allocation3], 1
    %10 = vsyncpa %s9, 0
    %11 = vsyncpa [#allocation5], 0
    %s12 = scalar_lea.sflag [#allocation5], 1
    %13 = vsyncpa %s12, 0
    loop: start=0, step=1, limit=4
    $region2: #{tpu_custom_call.1} parent=1 // loop_pre_header
      _
    $region3: #{tpu_custom_call.1} parent=1 // loop_header
      %s15 = sphi 0, %s19
      %p16 = scmp.ge.s32.totalorder %s15, 4
      %s25 = sphi 0, %s27
      %s28 = sphi 0, %s25
      %s29 = sphi 0, %s28
      %s45 = sphi 0, %s29
      %s51 = sphi 0, %s53
      %s54 = sphi 0, %s51
      %s55 = sphi 0, %s54
      %s71 = sphi 0, %s55
      %s77 = sphi 0, %s79
      %s80 = sphi 0, %s77
      %s81 = sphi 0, %s80
      %s97 = sphi 0, %s81
      %s103 = sphi 0, %s105
      %s106 = sphi 0, %s103
      %s107 = sphi 0, %s106
      %s123 = sphi 0, %s107
    $region4: #{tpu_custom_call.1} parent=1 // loop_header_branch
      %18 = sbr.rel (%p16) target = $region8
    $region5: #{tpu_custom_call.1} parent=1 // loop_body
      %s20 = ssub.s32 %s15, 1
      %s21 = ssub.s32 %s15, 2
      %s22 = sadd.s32 %s15, 1
      %s23 = ssub.s32 %s15, %s22
      %p24 = scmp.eq.s32.totalorder %s23, 0
      %s26 = sadd.s32 %s25, 1
      %s27 = scalar_select %p24, %s25, %s26
      %p30 = pneg %p24
      %p31 = scmp.eq.s32.totalorder %s15, 1
      %p32 = por %p30, %p31
      %p33 = scmp.ne.s32.totalorder %s25, %s28
      %p34 = scmp.eq.s32.totalorder %s15, 0
      %p35 = por %p33, %p34
      %p36 = scmp.ne.s32.totalorder %s25, %s28
      %p37 = scmp.eq.s32.totalorder %s20, 1
      %p38 = por %p36, %p37
      %p39 = scmp.ne.s32.totalorder %s28, %s29
      %p40 = scmp.eq.s32.totalorder %s20, 0
      %p41 = por %p39, %p40
      %p42 = scmp.ne.s32.totalorder %s28, %s29
      %p43 = scmp.eq.s32.totalorder %s21, 1
      %p44 = por %p42, %p43
      %p46 = scmp.ne.s32.totalorder %s29, %s45
      %p47 = scmp.eq.s32.totalorder %s21, 0
      %p48 = por %p46, %p47
      %s49 = ssub.s32 %s15, %s22
      %p50 = scmp.eq.s32.totalorder %s49, 0
      %s52 = sadd.s32 %s51, 1
      %s53 = scalar_select %p50, %s51, %s52
      %p56 = pneg %p50
      %p57 = scmp.eq.s32.totalorder %s15, 1
      %p58 = por %p56, %p57
      %p59 = scmp.ne.s32.totalorder %s51, %s54
      %p60 = scmp.eq.s32.totalorder %s15, 0
      %p61 = por %p59, %p60
      %p62 = scmp.ne.s32.totalorder %s51, %s54
      %p63 = scmp.eq.s32.totalorder %s20, 1
      %p64 = por %p62, %p63
      %p65 = scmp.ne.s32.totalorder %s54, %s55
      %p66 = scmp.eq.s32.totalorder %s20, 0
      %p67 = por %p65, %p66
      %p68 = scmp.ne.s32.totalorder %s54, %s55
      %p69 = scmp.eq.s32.totalorder %s21, 1
      %p70 = por %p68, %p69
      %p72 = scmp.ne.s32.totalorder %s55, %s71
      %p73 = scmp.eq.s32.totalorder %s21, 0
      %p74 = por %p72, %p73
      %s75 = ssub.s32 %s15, %s22
      %p76 = scmp.eq.s32.totalorder %s75, 0
      %s78 = sadd.s32 %s77, 1
      %s79 = scalar_select %p76, %s77, %s78
      %p82 = pneg %p76
      %p83 = scmp.eq.s32.totalorder %s15, 1
      %p84 = por %p82, %p83
      %p85 = scmp.ne.s32.totalorder %s77, %s80
      %p86 = scmp.eq.s32.totalorder %s15, 0
      %p87 = por %p85, %p86
      %p88 = scmp.ne.s32.totalorder %s77, %s80
      %p89 = scmp.eq.s32.totalorder %s20, 1
      %p90 = por %p88, %p89
      %p91 = scmp.ne.s32.totalorder %s80, %s81
      %p92 = scmp.eq.s32.totalorder %s20, 0
      %p93 = por %p91, %p92
      %p94 = scmp.ne.s32.totalorder %s80, %s81
      %p95 = scmp.eq.s32.totalorder %s21, 1
      %p96 = por %p94, %p95
      %p98 = scmp.ne.s32.totalorder %s81, %s97
      %p99 = scmp.eq.s32.totalorder %s21, 0
      %p100 = por %p98, %p99
      %s101 = ssub.s32 %s15, %s22
      %p102 = scmp.eq.s32.totalorder %s101, 0
      %s104 = sadd.s32 %s103, 1
      %s105 = scalar_select %p102, %s103, %s104
      %p108 = pneg %p102
      %p109 = scmp.eq.s32.totalorder %s15, 1
      %p110 = por %p108, %p109
      %p111 = scmp.ne.s32.totalorder %s103, %s106
      %p112 = scmp.eq.s32.totalorder %s15, 0
      %p113 = por %p111, %p112
      %p114 = scmp.ne.s32.totalorder %s103, %s106
      %p115 = scmp.eq.s32.totalorder %s20, 1
      %p116 = por %p114, %p115
      %p117 = scmp.ne.s32.totalorder %s106, %s107
      %p118 = scmp.eq.s32.totalorder %s20, 0
      %p119 = por %p117, %p118
      %p120 = scmp.ne.s32.totalorder %s106, %s107
      %p121 = scmp.eq.s32.totalorder %s21, 1
      %p122 = por %p120, %p121
      %p124 = scmp.ne.s32.totalorder %s107, %s123
      %p125 = scmp.eq.s32.totalorder %s21, 0
      %p126 = por %p124, %p125
      %p127 = scmp.le.s32.totalorder 1, %s15
      %p128 = scmp.lt.s32.totalorder %s15, 3
      %p129 = pnand %p127, %p128
      %p130 = pneg %p129
      // Predicated region
      $region9: #{tpu_custom_call.1} parent=5 // pred_check
        _
      $region10: #{tpu_custom_call.1} parent=5 // pred_check_branch
        %132 = sbr.rel (%p129) target = $region12
      $region11: #{tpu_custom_call.1} parent=5 // pred_region
        %s133 = ssub.s32 %s15, 1
      $region12: #{tpu_custom_call.1} parent=5 // pred_fallthru
        _
      %p134 = scmp.lt.s32.totalorder %s15, 2
      // Predicated region
      $region13: #{tpu_custom_call.1} parent=5 // pred_check
        %p135 = pneg %p134
      $region14: #{tpu_custom_call.1} parent=5 // pred_check_branch
        %137 = sbr.rel (%p135) target = $region16
      $region15: #{tpu_custom_call.1} parent=5 // pred_region
        // Predicated region
        $region17: #{tpu_custom_call.1} parent=15 // pred_check
          %p138 = pneg %p35
        $region18: #{tpu_custom_call.1} parent=15 // pred_check_branch
          %140 = sbr.rel (%p138) target = $region20
        $region19: #{tpu_custom_call.1} parent=15 // pred_region
          %s141 = sand.u32 %s25, 1
          %s142 = scalar_lea.sflag [#allocation3], %s141
          %s143 = sand.u32 %s25, 1
          %s144 = smul.addr %s143, 8
          %s145 = scalar_lea.vmem [#allocation2], %s144
          %s147 = ssub.s32 128, 128
          %148 = vsyncadd %s142, %s147
          %s149 = smul.addr %s15, 128
          %s150 = scalar_lea.hbm %s0, %s149
          %s152 = sshll.u32 %s145, 4
          %s153 = int_to_ptr.vmem [resolvable:$true] %s152
          %155 = dma.hbm_to_vmem [thread:$0]  %s150, 128, %s153, %s142
        $region20: #{tpu_custom_call.1} parent=15 // pred_fallthru
          _
        // Predicated region
        $region21: #{tpu_custom_call.1} parent=15 // pred_check
          %p156 = pneg %p61
        $region22: #{tpu_custom_call.1} parent=15 // pred_check_branch
          %158 = sbr.rel (%p156) target = $region24
        $region23: #{tpu_custom_call.1} parent=15 // pred_region
          %s159 = sand.u32 %s15, 1
          %s160 = scalar_lea.sflag [#allocation5], %s159
          %s161 = sand.u32 %s51, 1
          %s162 = smul.addr %s161, 8
          %s163 = scalar_lea.vmem [#allocation4], %s162
          %s165 = ssub.s32 128, 128
          %166 = vsyncadd %s160, %s165
          %s167 = smul.addr %s15, 128
          %s168 = scalar_lea.hbm %s1, %s167
          %s170 = sshll.u32 %s163, 4
          %s171 = int_to_ptr.vmem [resolvable:$true] %s170
          %173 = dma.hbm_to_vmem [thread:$0]  %s168, 128, %s171, %s160
        $region24: #{tpu_custom_call.1} parent=15 // pred_fallthru
          _
        // Predicated region
        $region25: #{tpu_custom_call.1} parent=15 // pred_check
          %p174 = pneg %p87
        $region26: #{tpu_custom_call.1} parent=15 // pred_check_branch
          %176 = sbr.rel (%p174) target = $region28
        $region27: #{tpu_custom_call.1} parent=15 // pred_region
          %s177 = sand.u32 %s15, 1
          %s178 = scalar_lea.sflag [#allocation5], %s177
          %s179 = sand.u32 %s77, 1
          %s180 = smul.addr %s179, 32
          %s181 = scalar_lea.vmem [#allocation6], %s180
          %s183 = ssub.s32 512, 512
          %184 = vsyncadd %s178, %s183
          %s185 = smul.addr %s15, 4
          %s186 = smul.addr %s185, 128
          %s187 = scalar_lea.hbm %s2, %s186
          %s189 = sshll.u32 %s181, 4
          %s190 = int_to_ptr.vmem [resolvable:$true] %s189
          %192 = dma.hbm_to_vmem [thread:$0]  %s187, 512, %s190, %s178
        $region28: #{tpu_custom_call.1} parent=15 // pred_fallthru
          _
      $region16: #{tpu_custom_call.1} parent=5 // pred_fallthru
        _
      %p193 = scmp.le.s32.totalorder 1, %s15
      %p194 = scmp.lt.s32.totalorder %s15, 3
      %p195 = pnand %p193, %p194
      %p196 = pneg %p195
      // Predicated region
      $region29: #{tpu_custom_call.1} parent=5 // pred_check
        _
      $region30: #{tpu_custom_call.1} parent=5 // pred_check_branch
        %198 = sbr.rel (%p195) target = $region32
      $region31: #{tpu_custom_call.1} parent=5 // pred_region
        %s199 = ssub.s32 %s15, 1
        %s200 = sand.u32 %s28, 1
        %s201 = scalar_lea.sflag [#allocation3], %s200
        %s202 = sand.u32 %s28, 1
        %s203 = smul.addr %s202, 8
        %s204 = scalar_lea.vmem [#allocation2], %s203
        // Predicated region
        $region33: #{tpu_custom_call.1} parent=31 // pred_check
          %p205 = pneg %p41
        $region34: #{tpu_custom_call.1} parent=31 // pred_check_branch
          %207 = sbr.rel (%p205) target = $region36
        $region35: #{tpu_custom_call.1} parent=31 // pred_region
          %208 = dma.done %s201, 128
        $region36: #{tpu_custom_call.1} parent=31 // pred_fallthru
          _
        %s209 = sand.u32 %s20, 1
        %s210 = scalar_lea.sflag [#allocation5], %s209
        %s211 = sand.u32 %s54, 1
        %s212 = smul.addr %s211, 8
        %s213 = scalar_lea.vmem [#allocation4], %s212
        // Predicated region
        $region37: #{tpu_custom_call.1} parent=31 // pred_check
          %p214 = pneg %p67
        $region38: #{tpu_custom_call.1} parent=31 // pred_check_branch
          %216 = sbr.rel (%p214) target = $region40
        $region39: #{tpu_custom_call.1} parent=31 // pred_region
          %217 = dma.done %s210, 128
        $region40: #{tpu_custom_call.1} parent=31 // pred_fallthru
          _
        %s218 = sand.u32 %s20, 1
        %s219 = scalar_lea.sflag [#allocation5], %s218
        %s220 = sand.u32 %s80, 1
        %s221 = smul.addr %s220, 32
        %s222 = scalar_lea.vmem [#allocation6], %s221
        // Predicated region
        $region41: #{tpu_custom_call.1} parent=31 // pred_check
          %p223 = pneg %p93
        $region42: #{tpu_custom_call.1} parent=31 // pred_check_branch
          %225 = sbr.rel (%p223) target = $region44
        $region43: #{tpu_custom_call.1} parent=31 // pred_region
          %226 = dma.done %s219, 512
        $region44: #{tpu_custom_call.1} parent=31 // pred_fallthru
          _
        %s227 = sand.u32 %s28, 1
        %s228 = scalar_lea.sflag [#allocation3], %s227
        %s229 = sand.u32 %s28, 1
        %s230 = smul.addr %s229, 8
        %s231 = scalar_lea.vmem [#allocation2], %s230
        %p232 = pneg %p41
        %p233 = pneg %p38
        %s234 = sand.u32 %s20, 1
        %s235 = scalar_lea.sflag [#allocation5], %s234
        %s236 = sand.u32 %s54, 1
        %s237 = smul.addr %s236, 8
        %s238 = scalar_lea.vmem [#allocation4], %s237
        %p239 = pneg %p67
        %p240 = pneg %p64
        %s241 = sand.u32 %s20, 1
        %s242 = scalar_lea.sflag [#allocation5], %s241
        %s243 = sand.u32 %s80, 1
        %s244 = smul.addr %s243, 32
        %s245 = scalar_lea.vmem [#allocation6], %s244
        %p246 = pneg %p93
        %p247 = pneg %p90
        %p248 = pneg %p119
        %p249 = pneg %p116
        %p250 = scmp.lt.s32.totalorder %s20, 1
        %s251 = scalar_select %p250, %s20, 1
        %s252 = smul.addr %s251, 8
        %s253 = scalar_lea.vmem %s3, %s252
        %p254 = scmp.lt.s32.totalorder %s20, 1
        %s255 = scalar_select %p254, %s20, 1
        %s256 = smul.addr %s255, 8
        %s257 = scalar_lea.vmem %s3, %s256
        %v258 = vld [vmem:[%s204] sm:$0xff]
        %v259 = vld [vmem:[%s213] sm:$0xff]
        %v260 = vmul.f32 %v258, %v258
        %261 = vmatprep.subr.mxu0 0.0
        %262 = vmatpush1.msra.mxu0 1.0
        %263 = vmatprep.subr.mxu0 0.0
        %264 = vmatpush1.msra.mxu0 1.0
        %265 = vmatprep.subr.mxu0 0.0
        %266 = vmatpush1.msra.mxu0 1.0
        %267 = vmatprep.subr.mxu0 0.0
        %268 = vmatpush1.msra.mxu0 1.0
        %269 = vmatprep.subr.mxu0 0.0
        %270 = vmatpush1.msra.mxu0 1.0
        %271 = vmatprep.subr.mxu0 0.0
        %272 = vmatpush1.msra.mxu0 1.0
        %273 = vmatprep.subr.mxu0 0.0
        %274 = vmatpush1.msra.mxu0 1.0
        %275 = vmatprep.subr.mxu0 0.0
        %276 = vmatpush1.msra.mxu0 1.0
        %277 = vmatprep.subr.mxu0 0.0
        %278 = vmatpush1.msra.mxu0 1.0
        %279 = vmatprep.subr.mxu0 0.0
        %280 = vmatpush1.msra.mxu0 1.0
        %281 = vmatprep.subr.mxu0 0.0
        %282 = vmatpush1.msra.mxu0 1.0
        %283 = vmatprep.subr.mxu0 0.0
        %284 = vmatpush1.msra.mxu0 1.0
        %285 = vmatprep.subr.mxu0 0.0
        %286 = vmatpush1.msra.mxu0 1.0
        %287 = vmatprep.subr.mxu0 0.0
        %288 = vmatpush1.msra.mxu0 1.0
        %289 = vmatprep.subr.mxu0 0.0
        %290 = vmatpush1.msra.mxu0 1.0
        %291 = vmatprep.subr.mxu0 0.0
        %292 = vmatpush1.msra.mxu0 1.0
        %293 = vmatprep.subr.mxu0 0.0
        %294 = vmatpush2.msra.mxu0 0.0
        %295 = vmatprep.subr.mxu0 0.0
        %296 = vmatpush2.msra.mxu0 0.0
        %297 = vmatprep.subr.mxu0 0.0
        %298 = vmatpush2.msra.mxu0 0.0
        %299 = vmatprep.subr.mxu0 0.0
        %300 = vmatpush2.msra.mxu0 0.0
        %301 = vmatprep.subr.mxu0 0.0
        %302 = vmatpush2.msra.mxu0 0.0
        %303 = vmatprep.subr.mxu0 0.0
        %304 = vmatpush2.msra.mxu0 0.0
        %305 = vmatprep.subr.mxu0 0.0
        %306 = vmatpush2.msra.mxu0 0.0
        %307 = vmatprep.subr.mxu0 0.0
        %308 = vmatpush2.msra.mxu0 0.0
        %309 = vmatprep.subr.mxu0 0.0
        %310 = vmatpush2.msra.mxu0 0.0
        %311 = vmatprep.subr.mxu0 0.0
        %312 = vmatpush2.msra.mxu0 0.0
        %313 = vmatprep.subr.mxu0 0.0
        %314 = vmatpush2.msra.mxu0 0.0
        %315 = vmatprep.subr.mxu0 0.0
        %316 = vmatpush2.msra.mxu0 0.0
        %317 = vmatprep.subr.mxu0 0.0
        %318 = vmatpush2.msra.mxu0 0.0
        %319 = vmatprep.subr.mxu0 0.0
        %320 = vmatpush2.msra.mxu0 0.0
        %321 = vmatprep.subr.mxu0 0.0
        %322 = vmatpush2.msra.mxu0 0.0
        %323 = vmatprep.subr.mxu0 0.0
        %324 = vmatpush2.msra.mxu0 0.0
        %325 = vmatprep.mubr.f32.mxu0 0.0
        %v326 = vand.u32 %v260, 4294901760
        %v327 = vsub.f32 %v260, %v326
        %v328 = vand.u32 %v327, 4294901760
        %v329 = vsub.f32 %v327, %v328
        %v330 = vand.u32 %v329, 4294901760
        %331 = vmatmul.mubr.f32.gmra.mxu0 %v330
        %v332 = vpop.f32.mrf.mxu0
        %v333 = vadd.f32 0.0, %v332
        %v334 = vpop.f32.mrf.mxu0
        %335 = vdwg.mxu0
        %336 = vmatprep.subr.mxu0 0.0
        %337 = vmatpush1.msra.mxu0 0.0
        %338 = vmatprep.subr.mxu0 0.0
        %339 = vmatpush1.msra.mxu0 0.0
        %340 = vmatprep.subr.mxu0 0.0
        %341 = vmatpush1.msra.mxu0 0.0
        %342 = vmatprep.subr.mxu0 0.0
        %343 = vmatpush1.msra.mxu0 0.0
        %344 = vmatprep.subr.mxu0 0.0
        %345 = vmatpush1.msra.mxu0 0.0
        %346 = vmatprep.subr.mxu0 0.0
        %347 = vmatpush1.msra.mxu0 0.0
        %348 = vmatprep.subr.mxu0 0.0
        %349 = vmatpush1.msra.mxu0 0.0
        %350 = vmatprep.subr.mxu0 0.0
        %351 = vmatpush1.msra.mxu0 0.0
        %352 = vmatprep.subr.mxu0 0.0
        %353 = vmatpush1.msra.mxu0 0.0
        %354 = vmatprep.subr.mxu0 0.0
        %355 = vmatpush1.msra.mxu0 0.0
        %356 = vmatprep.subr.mxu0 0.0
        %357 = vmatpush1.msra.mxu0 0.0
        %358 = vmatprep.subr.mxu0 0.0
        %359 = vmatpush1.msra.mxu0 0.0
        %360 = vmatprep.subr.mxu0 0.0
        %361 = vmatpush1.msra.mxu0 0.0
        %362 = vmatprep.subr.mxu0 0.0
        %363 = vmatpush1.msra.mxu0 0.0
        %364 = vmatprep.subr.mxu0 0.0
        %365 = vmatpush1.msra.mxu0 0.0
        %366 = vmatprep.subr.mxu0 0.0
        %367 = vmatpush1.msra.mxu0 0.0
        %368 = vmatprep.subr.mxu0 0.0
        %369 = vmatpush2.msra.mxu0 0.0
        %370 = vmatprep.subr.mxu0 0.0
        %371 = vmatpush2.msra.mxu0 0.0
        %372 = vmatprep.subr.mxu0 0.0
        %373 = vmatpush2.msra.mxu0 0.0
        %374 = vmatprep.subr.mxu0 0.0
        %375 = vmatpush2.msra.mxu0 0.0
        %376 = vmatprep.subr.mxu0 0.0
        %377 = vmatpush2.msra.mxu0 0.0
        %378 = vmatprep.subr.mxu0 0.0
        %379 = vmatpush2.msra.mxu0 0.0
        %380 = vmatprep.subr.mxu0 0.0
        %381 = vmatpush2.msra.mxu0 0.0
        %382 = vmatprep.subr.mxu0 0.0
        %383 = vmatpush2.msra.mxu0 0.0
        %384 = vmatprep.subr.mxu0 0.0
        %385 = vmatpush2.msra.mxu0 0.0
        %386 = vmatprep.subr.mxu0 0.0
        %387 = vmatpush2.msra.mxu0 0.0
        %388 = vmatprep.subr.mxu0 0.0
        %389 = vmatpush2.msra.mxu0 0.0
        %390 = vmatprep.subr.mxu0 0.0
        %391 = vmatpush2.msra.mxu0 0.0
        %392 = vmatprep.subr.mxu0 0.0
        %393 = vmatpush2.msra.mxu0 0.0
        %394 = vmatprep.subr.mxu0 0.0
        %395 = vmatpush2.msra.mxu0 0.0
        %396 = vmatprep.subr.mxu0 0.0
        %397 = vmatpush2.msra.mxu0 0.0
        %398 = vmatprep.subr.mxu0 0.0
        %399 = vmatpush2.msra.mxu0 0.0
        %400 = vmatprep.mubr.f32.mxu0 0.0
        %v401 = vand.u32 %v260, 4294901760
        %402 = vmatmul.mubr.f32.gmra.mxu0 %v401
        %v403 = vpop.f32.mrf.mxu0
        %v404 = vadd.f32 %v333, %v403
        %v405 = vpop.f32.mrf.mxu0
        %406 = vdwg.mxu0
        %407 = vmatprep.subr.mxu0 0.0
        %408 = vmatpush1.msra.mxu0 0.0
        %409 = vmatprep.subr.mxu0 0.0
        %410 = vmatpush1.msra.mxu0 0.0
        %411 = vmatprep.subr.mxu0 0.0
        %412 = vmatpush1.msra.mxu0 0.0
        %413 = vmatprep.subr.mxu0 0.0
        %414 = vmatpush1.msra.mxu0 0.0
        %415 = vmatprep.subr.mxu0 0.0
        %416 = vmatpush1.msra.mxu0 0.0
        %417 = vmatprep.subr.mxu0 0.0
        %418 = vmatpush1.msra.mxu0 0.0
        %419 = vmatprep.subr.mxu0 0.0
        %420 = vmatpush1.msra.mxu0 0.0
        %421 = vmatprep.subr.mxu0 0.0
        %422 = vmatpush1.msra.mxu0 0.0
        %423 = vmatprep.subr.mxu0 0.0
        %424 = vmatpush1.msra.mxu0 0.0
        %425 = vmatprep.subr.mxu0 0.0
        %426 = vmatpush1.msra.mxu0 0.0
        %427 = vmatprep.subr.mxu0 0.0
        %428 = vmatpush1.msra.mxu0 0.0
        %429 = vmatprep.subr.mxu0 0.0
        %430 = vmatpush1.msra.mxu0 0.0
        %431 = vmatprep.subr.mxu0 0.0
        %432 = vmatpush1.msra.mxu0 0.0
        %433 = vmatprep.subr.mxu0 0.0
        %434 = vmatpush1.msra.mxu0 0.0
        %435 = vmatprep.subr.mxu0 0.0
        %436 = vmatpush1.msra.mxu0 0.0
        %437 = vmatprep.subr.mxu0 0.0
        %438 = vmatpush1.msra.mxu0 0.0
        %439 = vmatprep.subr.mxu0 0.0
        %440 = vmatpush2.msra.mxu0 0.0
        %441 = vmatprep.subr.mxu0 0.0
        %442 = vmatpush2.msra.mxu0 0.0
        %443 = vmatprep.subr.mxu0 0.0
        %444 = vmatpush2.msra.mxu0 0.0
        %445 = vmatprep.subr.mxu0 0.0
        %446 = vmatpush2.msra.mxu0 0.0
        %447 = vmatprep.subr.mxu0 0.0
        %448 = vmatpush2.msra.mxu0 0.0
        %449 = vmatprep.subr.mxu0 0.0
        %450 = vmatpush2.msra.mxu0 0.0
        %451 = vmatprep.subr.mxu0 0.0
        %452 = vmatpush2.msra.mxu0 0.0
        %453 = vmatprep.subr.mxu0 0.0
        %454 = vmatpush2.msra.mxu0 0.0
        %455 = vmatprep.subr.mxu0 0.0
        %456 = vmatpush2.msra.mxu0 0.0
        %457 = vmatprep.subr.mxu0 0.0
        %458 = vmatpush2.msra.mxu0 0.0
        %459 = vmatprep.subr.mxu0 0.0
        %460 = vmatpush2.msra.mxu0 0.0
        %461 = vmatprep.subr.mxu0 0.0
        %462 = vmatpush2.msra.mxu0 0.0
        %463 = vmatprep.subr.mxu0 0.0
        %464 = vmatpush2.msra.mxu0 0.0
        %465 = vmatprep.subr.mxu0 0.0
        %466 = vmatpush2.msra.mxu0 0.0
        %467 = vmatprep.subr.mxu0 0.0
        %468 = vmatpush2.msra.mxu0 0.0
        %469 = vmatprep.subr.mxu0 0.0
        %470 = vmatpush2.msra.mxu0 0.0
        %471 = vmatprep.mubr.f32.mxu0 0.0
        %v472 = vand.u32 %v260, 4294901760
        %v473 = vsub.f32 %v260, %v472
        %474 = vmatmul.mubr.f32.gmra.mxu0 %v473
        %v475 = vpop.f32.mrf.mxu0
        %v476 = vadd.f32 %v404, %v475
        %v477 = vpop.f32.mrf.mxu0
        %478 = vdwg.mxu0
        %479 = vmatprep.subr.mxu0 0.0
        %480 = vmatpush1.msra.mxu0 1.0
        %481 = vmatprep.subr.mxu0 0.0
        %482 = vmatpush1.msra.mxu0 1.0
        %483 = vmatprep.subr.mxu0 0.0
        %484 = vmatpush1.msra.mxu0 1.0
        %485 = vmatprep.subr.mxu0 0.0
        %486 = vmatpush1.msra.mxu0 1.0
        %487 = vmatprep.subr.mxu0 0.0
        %488 = vmatpush1.msra.mxu0 1.0
        %489 = vmatprep.subr.mxu0 0.0
        %490 = vmatpush1.msra.mxu0 1.0
        %491 = vmatprep.subr.mxu0 0.0
        %492 = vmatpush1.msra.mxu0 1.0
        %493 = vmatprep.subr.mxu0 0.0
        %494 = vmatpush1.msra.mxu0 1.0
        %495 = vmatprep.subr.mxu0 0.0
        %496 = vmatpush1.msra.mxu0 1.0
        %497 = vmatprep.subr.mxu0 0.0
        %498 = vmatpush1.msra.mxu0 1.0
        %499 = vmatprep.subr.mxu0 0.0
        %500 = vmatpush1.msra.mxu0 1.0
        %501 = vmatprep.subr.mxu0 0.0
        %502 = vmatpush1.msra.mxu0 1.0
        %503 = vmatprep.subr.mxu0 0.0
        %504 = vmatpush1.msra.mxu0 1.0
        %505 = vmatprep.subr.mxu0 0.0
        %506 = vmatpush1.msra.mxu0 1.0
        %507 = vmatprep.subr.mxu0 0.0
        %508 = vmatpush1.msra.mxu0 1.0
        %509 = vmatprep.subr.mxu0 0.0
        %510 = vmatpush1.msra.mxu0 1.0
        %511 = vmatprep.subr.mxu0 0.0
        %512 = vmatpush2.msra.mxu0 0.0
        %513 = vmatprep.subr.mxu0 0.0
        %514 = vmatpush2.msra.mxu0 0.0
        %515 = vmatprep.subr.mxu0 0.0
        %516 = vmatpush2.msra.mxu0 0.0
        %517 = vmatprep.subr.mxu0 0.0
        %518 = vmatpush2.msra.mxu0 0.0
        %519 = vmatprep.subr.mxu0 0.0
        %520 = vmatpush2.msra.mxu0 0.0
        %521 = vmatprep.subr.mxu0 0.0
        %522 = vmatpush2.msra.mxu0 0.0
        %523 = vmatprep.subr.mxu0 0.0
        %524 = vmatpush2.msra.mxu0 0.0
        %525 = vmatprep.subr.mxu0 0.0
        %526 = vmatpush2.msra.mxu0 0.0
        %527 = vmatprep.subr.mxu0 0.0
        %528 = vmatpush2.msra.mxu0 0.0
        %529 = vmatprep.subr.mxu0 0.0
        %530 = vmatpush2.msra.mxu0 0.0
        %531 = vmatprep.subr.mxu0 0.0
        %532 = vmatpush2.msra.mxu0 0.0
        %533 = vmatprep.subr.mxu0 0.0
        %534 = vmatpush2.msra.mxu0 0.0
        %535 = vmatprep.subr.mxu0 0.0
        %536 = vmatpush2.msra.mxu0 0.0
        %537 = vmatprep.subr.mxu0 0.0
        %538 = vmatpush2.msra.mxu0 0.0
        %539 = vmatprep.subr.mxu0 0.0
        %540 = vmatpush2.msra.mxu0 0.0
        %541 = vmatprep.subr.mxu0 0.0
        %542 = vmatpush2.msra.mxu0 0.0
        %543 = vmatprep.mubr.f32.mxu0 0.0
        %v544 = vand.u32 %v260, 4294901760
        %v545 = vsub.f32 %v260, %v544
        %v546 = vand.u32 %v545, 4294901760
        %547 = vmatmul.mubr.f32.gmra.mxu0 %v546
        %v548 = vpop.f32.mrf.mxu0
        %v549 = vadd.f32 %v476, %v548
        %v550 = vpop.f32.mrf.mxu0
        %551 = vdwg.mxu0
        %552 = vmatprep.subr.mxu0 0.0
        %553 = vmatpush1.msra.mxu0 0.0
        %554 = vmatprep.subr.mxu0 0.0
        %555 = vmatpush1.msra.mxu0 0.0
        %556 = vmatprep.subr.mxu0 0.0
        %557 = vmatpush1.msra.mxu0 0.0
        %558 = vmatprep.subr.mxu0 0.0
        %559 = vmatpush1.msra.mxu0 0.0
        %560 = vmatprep.subr.mxu0 0.0
        %561 = vmatpush1.msra.mxu0 0.0
        %562 = vmatprep.subr.mxu0 0.0
        %563 = vmatpush1.msra.mxu0 0.0
        %564 = vmatprep.subr.mxu0 0.0
        %565 = vmatpush1.msra.mxu0 0.0
        %566 = vmatprep.subr.mxu0 0.0
        %567 = vmatpush1.msra.mxu0 0.0
        %568 = vmatprep.subr.mxu0 0.0
        %569 = vmatpush1.msra.mxu0 0.0
        %570 = vmatprep.subr.mxu0 0.0
        %571 = vmatpush1.msra.mxu0 0.0
        %572 = vmatprep.subr.mxu0 0.0
        %573 = vmatpush1.msra.mxu0 0.0
        %574 = vmatprep.subr.mxu0 0.0
        %575 = vmatpush1.msra.mxu0 0.0
        %576 = vmatprep.subr.mxu0 0.0
        %577 = vmatpush1.msra.mxu0 0.0
        %578 = vmatprep.subr.mxu0 0.0
        %579 = vmatpush1.msra.mxu0 0.0
        %580 = vmatprep.subr.mxu0 0.0
        %581 = vmatpush1.msra.mxu0 0.0
        %582 = vmatprep.subr.mxu0 0.0
        %583 = vmatpush1.msra.mxu0 0.0
        %584 = vmatprep.subr.mxu0 0.0
        %585 = vmatpush2.msra.mxu0 0.0
        %586 = vmatprep.subr.mxu0 0.0
        %587 = vmatpush2.msra.mxu0 0.0
        %588 = vmatprep.subr.mxu0 0.0
        %589 = vmatpush2.msra.mxu0 0.0
        %590 = vmatprep.subr.mxu0 0.0
        %591 = vmatpush2.msra.mxu0 0.0
        %592 = vmatprep.subr.mxu0 0.0
        %593 = vmatpush2.msra.mxu0 0.0
        %594 = vmatprep.subr.mxu0 0.0
        %595 = vmatpush2.msra.mxu0 0.0
        %596 = vmatprep.subr.mxu0 0.0
        %597 = vmatpush2.msra.mxu0 0.0
        %598 = vmatprep.subr.mxu0 0.0
        %599 = vmatpush2.msra.mxu0 0.0
        %600 = vmatprep.subr.mxu0 0.0
        %601 = vmatpush2.msra.mxu0 0.0
        %602 = vmatprep.subr.mxu0 0.0
        %603 = vmatpush2.msra.mxu0 0.0
        %604 = vmatprep.subr.mxu0 0.0
        %605 = vmatpush2.msra.mxu0 0.0
        %606 = vmatprep.subr.mxu0 0.0
        %607 = vmatpush2.msra.mxu0 0.0
        %608 = vmatprep.subr.mxu0 0.0
        %609 = vmatpush2.msra.mxu0 0.0
        %610 = vmatprep.subr.mxu0 0.0
        %611 = vmatpush2.msra.mxu0 0.0
        %612 = vmatprep.subr.mxu0 0.0
        %613 = vmatpush2.msra.mxu0 0.0
        %614 = vmatprep.subr.mxu0 0.0
        %615 = vmatpush2.msra.mxu0 0.0
        %616 = vmatprep.mubr.f32.mxu0 0.0
        %v617 = vand.u32 %v260, 4294901760
        %618 = vmatmul.mubr.f32.gmra.mxu0 %v617
        %v619 = vpop.f32.mrf.mxu0
        %v620 = vadd.f32 %v549, %v619
        %v621 = vpop.f32.mrf.mxu0
        %622 = vdwg.mxu0
        %623 = vmatprep.subr.mxu0 0.0
        %624 = vmatpush1.msra.mxu0 1.0
        %625 = vmatprep.subr.mxu0 0.0
        %626 = vmatpush1.msra.mxu0 1.0
        %627 = vmatprep.subr.mxu0 0.0
        %628 = vmatpush1.msra.mxu0 1.0
        %629 = vmatprep.subr.mxu0 0.0
        %630 = vmatpush1.msra.mxu0 1.0
        %631 = vmatprep.subr.mxu0 0.0
        %632 = vmatpush1.msra.mxu0 1.0
        %633 = vmatprep.subr.mxu0 0.0
        %634 = vmatpush1.msra.mxu0 1.0
        %635 = vmatprep.subr.mxu0 0.0
        %636 = vmatpush1.msra.mxu0 1.0
        %637 = vmatprep.subr.mxu0 0.0
        %638 = vmatpush1.msra.mxu0 1.0
        %639 = vmatprep.subr.mxu0 0.0
        %640 = vmatpush1.msra.mxu0 1.0
        %641 = vmatprep.subr.mxu0 0.0
        %642 = vmatpush1.msra.mxu0 1.0
        %643 = vmatprep.subr.mxu0 0.0
        %644 = vmatpush1.msra.mxu0 1.0
        %645 = vmatprep.subr.mxu0 0.0
        %646 = vmatpush1.msra.mxu0 1.0
        %647 = vmatprep.subr.mxu0 0.0
        %648 = vmatpush1.msra.mxu0 1.0
        %649 = vmatprep.subr.mxu0 0.0
        %650 = vmatpush1.msra.mxu0 1.0
        %651 = vmatprep.subr.mxu0 0.0
        %652 = vmatpush1.msra.mxu0 1.0
        %653 = vmatprep.subr.mxu0 0.0
        %654 = vmatpush1.msra.mxu0 1.0
        %655 = vmatprep.subr.mxu0 0.0
        %656 = vmatpush2.msra.mxu0 0.0
        %657 = vmatprep.subr.mxu0 0.0
        %658 = vmatpush2.msra.mxu0 0.0
        %659 = vmatprep.subr.mxu0 0.0
        %660 = vmatpush2.msra.mxu0 0.0
        %661 = vmatprep.subr.mxu0 0.0
        %662 = vmatpush2.msra.mxu0 0.0
        %663 = vmatprep.subr.mxu0 0.0
        %664 = vmatpush2.msra.mxu0 0.0
        %665 = vmatprep.subr.mxu0 0.0
        %666 = vmatpush2.msra.mxu0 0.0
        %667 = vmatprep.subr.mxu0 0.0
        %668 = vmatpush2.msra.mxu0 0.0
        %669 = vmatprep.subr.mxu0 0.0
        %670 = vmatpush2.msra.mxu0 0.0
        %671 = vmatprep.subr.mxu0 0.0
        %672 = vmatpush2.msra.mxu0 0.0
        %673 = vmatprep.subr.mxu0 0.0
        %674 = vmatpush2.msra.mxu0 0.0
        %675 = vmatprep.subr.mxu0 0.0
        %676 = vmatpush2.msra.mxu0 0.0
        %677 = vmatprep.subr.mxu0 0.0
        %678 = vmatpush2.msra.mxu0 0.0
        %679 = vmatprep.subr.mxu0 0.0
        %680 = vmatpush2.msra.mxu0 0.0
        %681 = vmatprep.subr.mxu0 0.0
        %682 = vmatpush2.msra.mxu0 0.0
        %683 = vmatprep.subr.mxu0 0.0
        %684 = vmatpush2.msra.mxu0 0.0
        %685 = vmatprep.subr.mxu0 0.0
        %686 = vmatpush2.msra.mxu0 0.0
        %687 = vmatprep.mubr.f32.mxu0 0.0
        %v688 = vand.u32 %v260, 4294901760
        %689 = vmatmul.mubr.f32.gmra.mxu0 %v688
        %v690 = vpop.f32.mrf.mxu0
        %v691 = vadd.f32 %v620, %v690
        %v692 = vpop.f32.mrf.mxu0
        %693 = vdwg.mxu0
        %v694 = vrsqrt.pop %v691
        %v695 = vmin.f32 %v694, 10000000.0
        %v696 = vmul.f32 %v259, %v259
        %697 = vmatprep.subr.mxu0 0.0
        %698 = vmatpush1.msra.mxu0 1.0
        %699 = vmatprep.subr.mxu0 0.0
        %700 = vmatpush1.msra.mxu0 1.0
        %701 = vmatprep.subr.mxu0 0.0
        %702 = vmatpush1.msra.mxu0 1.0
        %703 = vmatprep.subr.mxu0 0.0
        %704 = vmatpush1.msra.mxu0 1.0
        %705 = vmatprep.subr.mxu0 0.0
        %706 = vmatpush1.msra.mxu0 1.0
        %707 = vmatprep.subr.mxu0 0.0
        %708 = vmatpush1.msra.mxu0 1.0
        %709 = vmatprep.subr.mxu0 0.0
        %710 = vmatpush1.msra.mxu0 1.0
        %711 = vmatprep.subr.mxu0 0.0
        %712 = vmatpush1.msra.mxu0 1.0
        %713 = vmatprep.subr.mxu0 0.0
        %714 = vmatpush1.msra.mxu0 1.0
        %715 = vmatprep.subr.mxu0 0.0
        %716 = vmatpush1.msra.mxu0 1.0
        %717 = vmatprep.subr.mxu0 0.0
        %718 = vmatpush1.msra.mxu0 1.0
        %719 = vmatprep.subr.mxu0 0.0
        %720 = vmatpush1.msra.mxu0 1.0
        %721 = vmatprep.subr.mxu0 0.0
        %722 = vmatpush1.msra.mxu0 1.0
        %723 = vmatprep.subr.mxu0 0.0
        %724 = vmatpush1.msra.mxu0 1.0
        %725 = vmatprep.subr.mxu0 0.0
        %726 = vmatpush1.msra.mxu0 1.0
        %727 = vmatprep.subr.mxu0 0.0
        %728 = vmatpush1.msra.mxu0 1.0
        %729 = vmatprep.subr.mxu0 0.0
        %730 = vmatpush2.msra.mxu0 0.0
        %731 = vmatprep.subr.mxu0 0.0
        %732 = vmatpush2.msra.mxu0 0.0
        %733 = vmatprep.subr.mxu0 0.0
        %734 = vmatpush2.msra.mxu0 0.0
        %735 = vmatprep.subr.mxu0 0.0
        %736 = vmatpush2.msra.mxu0 0.0
        %737 = vmatprep.subr.mxu0 0.0
        %738 = vmatpush2.msra.mxu0 0.0
        %739 = vmatprep.subr.mxu0 0.0
        %740 = vmatpush2.msra.mxu0 0.0
        %741 = vmatprep.subr.mxu0 0.0
        %742 = vmatpush2.msra.mxu0 0.0
        %743 = vmatprep.subr.mxu0 0.0
        %744 = vmatpush2.msra.mxu0 0.0
        %745 = vmatprep.subr.mxu0 0.0
        %746 = vmatpush2.msra.mxu0 0.0
        %747 = vmatprep.subr.mxu0 0.0
        %748 = vmatpush2.msra.mxu0 0.0
        %749 = vmatprep.subr.mxu0 0.0
        %750 = vmatpush2.msra.mxu0 0.0
        %751 = vmatprep.subr.mxu0 0.0
        %752 = vmatpush2.msra.mxu0 0.0
        %753 = vmatprep.subr.mxu0 0.0
        %754 = vmatpush2.msra.mxu0 0.0
        %755 = vmatprep.subr.mxu0 0.0
        %756 = vmatpush2.msra.mxu0 0.0
        %757 = vmatprep.subr.mxu0 0.0
        %758 = vmatpush2.msra.mxu0 0.0
        %759 = vmatprep.subr.mxu0 0.0
        %760 = vmatpush2.msra.mxu0 0.0
        %761 = vmatprep.mubr.f32.mxu0 0.0
        %v762 = vand.u32 %v696, 4294901760
        %v763 = vsub.f32 %v696, %v762
        %v764 = vand.u32 %v763, 4294901760
        %v765 = vsub.f32 %v763, %v764
        %v766 = vand.u32 %v765, 4294901760
        %767 = vmatmul.mubr.f32.gmra.mxu0 %v766
        %v768 = vpop.f32.mrf.mxu0
        %v769 = vadd.f32 0.0, %v768
        %v770 = vpop.f32.mrf.mxu0
        %771 = vdwg.mxu0
        %772 = vmatprep.subr.mxu0 0.0
        %773 = vmatpush1.msra.mxu0 0.0
        %774 = vmatprep.subr.mxu0 0.0
        %775 = vmatpush1.msra.mxu0 0.0
        %776 = vmatprep.subr.mxu0 0.0
        %777 = vmatpush1.msra.mxu0 0.0
        %778 = vmatprep.subr.mxu0 0.0
        %779 = vmatpush1.msra.mxu0 0.0
        %780 = vmatprep.subr.mxu0 0.0
        %781 = vmatpush1.msra.mxu0 0.0
        %782 = vmatprep.subr.mxu0 0.0
        %783 = vmatpush1.msra.mxu0 0.0
        %784 = vmatprep.subr.mxu0 0.0
        %785 = vmatpush1.msra.mxu0 0.0
        %786 = vmatprep.subr.mxu0 0.0
        %787 = vmatpush1.msra.mxu0 0.0
        %788 = vmatprep.subr.mxu0 0.0
        %789 = vmatpush1.msra.mxu0 0.0
        %790 = vmatprep.subr.mxu0 0.0
        %791 = vmatpush1.msra.mxu0 0.0
        %792 = vmatprep.subr.mxu0 0.0
        %793 = vmatpush1.msra.mxu0 0.0
        %794 = vmatprep.subr.mxu0 0.0
        %795 = vmatpush1.msra.mxu0 0.0
        %796 = vmatprep.subr.mxu0 0.0
        %797 = vmatpush1.msra.mxu0 0.0
        %798 = vmatprep.subr.mxu0 0.0
        %799 = vmatpush1.msra.mxu0 0.0
        %800 = vmatprep.subr.mxu0 0.0
        %801 = vmatpush1.msra.mxu0 0.0
        %802 = vmatprep.subr.mxu0 0.0
        %803 = vmatpush1.msra.mxu0 0.0
        %804 = vmatprep.subr.mxu0 0.0
        %805 = vmatpush2.msra.mxu0 0.0
        %806 = vmatprep.subr.mxu0 0.0
        %807 = vmatpush2.msra.mxu0 0.0
        %808 = vmatprep.subr.mxu0 0.0
        %809 = vmatpush2.msra.mxu0 0.0
        %810 = vmatprep.subr.mxu0 0.0
        %811 = vmatpush2.msra.mxu0 0.0
        %812 = vmatprep.subr.mxu0 0.0
        %813 = vmatpush2.msra.mxu0 0.0
        %814 = vmatprep.subr.mxu0 0.0
        %815 = vmatpush2.msra.mxu0 0.0
        %816 = vmatprep.subr.mxu0 0.0
        %817 = vmatpush2.msra.mxu0 0.0
        %818 = vmatprep.subr.mxu0 0.0
        %819 = vmatpush2.msra.mxu0 0.0
        %820 = vmatprep.subr.mxu0 0.0
        %821 = vmatpush2.msra.mxu0 0.0
        %822 = vmatprep.subr.mxu0 0.0
        %823 = vmatpush2.msra.mxu0 0.0
        %824 = vmatprep.subr.mxu0 0.0
        %825 = vmatpush2.msra.mxu0 0.0
        %826 = vmatprep.subr.mxu0 0.0
        %827 = vmatpush2.msra.mxu0 0.0
        %828 = vmatprep.subr.mxu0 0.0
        %829 = vmatpush2.msra.mxu0 0.0
        %830 = vmatprep.subr.mxu0 0.0
        %831 = vmatpush2.msra.mxu0 0.0
        %832 = vmatprep.subr.mxu0 0.0
        %833 = vmatpush2.msra.mxu0 0.0
        %834 = vmatprep.subr.mxu0 0.0
        %835 = vmatpush2.msra.mxu0 0.0
        %836 = vmatprep.mubr.f32.mxu0 0.0
        %v837 = vand.u32 %v696, 4294901760
        %838 = vmatmul.mubr.f32.gmra.mxu0 %v837
        %v839 = vpop.f32.mrf.mxu0
        %v840 = vadd.f32 %v769, %v839
        %v841 = vpop.f32.mrf.mxu0
        %842 = vdwg.mxu0
        %843 = vmatprep.subr.mxu0 0.0
        %844 = vmatpush1.msra.mxu0 0.0
        %845 = vmatprep.subr.mxu0 0.0
        %846 = vmatpush1.msra.mxu0 0.0
        %847 = vmatprep.subr.mxu0 0.0
        %848 = vmatpush1.msra.mxu0 0.0
        %849 = vmatprep.subr.mxu0 0.0
        %850 = vmatpush1.msra.mxu0 0.0
        %851 = vmatprep.subr.mxu0 0.0
        %852 = vmatpush1.msra.mxu0 0.0
        %853 = vmatprep.subr.mxu0 0.0
        %854 = vmatpush1.msra.mxu0 0.0
        %855 = vmatprep.subr.mxu0 0.0
        %856 = vmatpush1.msra.mxu0 0.0
        %857 = vmatprep.subr.mxu0 0.0
        %858 = vmatpush1.msra.mxu0 0.0
        %859 = vmatprep.subr.mxu0 0.0
        %860 = vmatpush1.msra.mxu0 0.0
        %861 = vmatprep.subr.mxu0 0.0
        %862 = vmatpush1.msra.mxu0 0.0
        %863 = vmatprep.subr.mxu0 0.0
        %864 = vmatpush1.msra.mxu0 0.0
        %865 = vmatprep.subr.mxu0 0.0
        %866 = vmatpush1.msra.mxu0 0.0
        %867 = vmatprep.subr.mxu0 0.0
        %868 = vmatpush1.msra.mxu0 0.0
        %869 = vmatprep.subr.mxu0 0.0
        %870 = vmatpush1.msra.mxu0 0.0
        %871 = vmatprep.subr.mxu0 0.0
        %872 = vmatpush1.msra.mxu0 0.0
        %873 = vmatprep.subr.mxu0 0.0
        %874 = vmatpush1.msra.mxu0 0.0
        %875 = vmatprep.subr.mxu0 0.0
        %876 = vmatpush2.msra.mxu0 0.0
        %877 = vmatprep.subr.mxu0 0.0
        %878 = vmatpush2.msra.mxu0 0.0
        %879 = vmatprep.subr.mxu0 0.0
        %880 = vmatpush2.msra.mxu0 0.0
        %881 = vmatprep.subr.mxu0 0.0
        %882 = vmatpush2.msra.mxu0 0.0
        %883 = vmatprep.subr.mxu0 0.0
        %884 = vmatpush2.msra.mxu0 0.0
        %885 = vmatprep.subr.mxu0 0.0
        %886 = vmatpush2.msra.mxu0 0.0
        %887 = vmatprep.subr.mxu0 0.0
        %888 = vmatpush2.msra.mxu0 0.0
        %889 = vmatprep.subr.mxu0 0.0
        %890 = vmatpush2.msra.mxu0 0.0
        %891 = vmatprep.subr.mxu0 0.0
        %892 = vmatpush2.msra.mxu0 0.0
        %893 = vmatprep.subr.mxu0 0.0
        %894 = vmatpush2.msra.mxu0 0.0
        %895 = vmatprep.subr.mxu0 0.0
        %896 = vmatpush2.msra.mxu0 0.0
        %897 = vmatprep.subr.mxu0 0.0
        %898 = vmatpush2.msra.mxu0 0.0
        %899 = vmatprep.subr.mxu0 0.0
        %900 = vmatpush2.msra.mxu0 0.0
        %901 = vmatprep.subr.mxu0 0.0
        %902 = vmatpush2.msra.mxu0 0.0
        %903 = vmatprep.subr.mxu0 0.0
        %904 = vmatpush2.msra.mxu0 0.0
        %905 = vmatprep.subr.mxu0 0.0
        %906 = vmatpush2.msra.mxu0 0.0
        %907 = vmatprep.mubr.f32.mxu0 0.0
        %v908 = vand.u32 %v696, 4294901760
        %v909 = vsub.f32 %v696, %v908
        %910 = vmatmul.mubr.f32.gmra.mxu0 %v909
        %v911 = vpop.f32.mrf.mxu0
        %v912 = vadd.f32 %v840, %v911
        %v913 = vpop.f32.mrf.mxu0
        %914 = vdwg.mxu0
        %915 = vmatprep.subr.mxu0 0.0
        %916 = vmatpush1.msra.mxu0 1.0
        %917 = vmatprep.subr.mxu0 0.0
        %918 = vmatpush1.msra.mxu0 1.0
        %919 = vmatprep.subr.mxu0 0.0
        %920 = vmatpush1.msra.mxu0 1.0
        %921 = vmatprep.subr.mxu0 0.0
        %922 = vmatpush1.msra.mxu0 1.0
        %923 = vmatprep.subr.mxu0 0.0
        %924 = vmatpush1.msra.mxu0 1.0
        %925 = vmatprep.subr.mxu0 0.0
        %926 = vmatpush1.msra.mxu0 1.0
        %927 = vmatprep.subr.mxu0 0.0
        %928 = vmatpush1.msra.mxu0 1.0
        %929 = vmatprep.subr.mxu0 0.0
        %930 = vmatpush1.msra.mxu0 1.0
        %931 = vmatprep.subr.mxu0 0.0
        %932 = vmatpush1.msra.mxu0 1.0
        %933 = vmatprep.subr.mxu0 0.0
        %934 = vmatpush1.msra.mxu0 1.0
        %935 = vmatprep.subr.mxu0 0.0
        %936 = vmatpush1.msra.mxu0 1.0
        %937 = vmatprep.subr.mxu0 0.0
        %938 = vmatpush1.msra.mxu0 1.0
        %939 = vmatprep.subr.mxu0 0.0
        %940 = vmatpush1.msra.mxu0 1.0
        %941 = vmatprep.subr.mxu0 0.0
        %942 = vmatpush1.msra.mxu0 1.0
        %943 = vmatprep.subr.mxu0 0.0
        %944 = vmatpush1.msra.mxu0 1.0
        %945 = vmatprep.subr.mxu0 0.0
        %946 = vmatpush1.msra.mxu0 1.0
        %947 = vmatprep.subr.mxu0 0.0
        %948 = vmatpush2.msra.mxu0 0.0
        %949 = vmatprep.subr.mxu0 0.0
        %950 = vmatpush2.msra.mxu0 0.0
        %951 = vmatprep.subr.mxu0 0.0
        %952 = vmatpush2.msra.mxu0 0.0
        %953 = vmatprep.subr.mxu0 0.0
        %954 = vmatpush2.msra.mxu0 0.0
        %955 = vmatprep.subr.mxu0 0.0
        %956 = vmatpush2.msra.mxu0 0.0
        %957 = vmatprep.subr.mxu0 0.0
        %958 = vmatpush2.msra.mxu0 0.0
        %959 = vmatprep.subr.mxu0 0.0
        %960 = vmatpush2.msra.mxu0 0.0
        %961 = vmatprep.subr.mxu0 0.0
        %962 = vmatpush2.msra.mxu0 0.0
        %963 = vmatprep.subr.mxu0 0.0
        %964 = vmatpush2.msra.mxu0 0.0
        %965 = vmatprep.subr.mxu0 0.0
        %966 = vmatpush2.msra.mxu0 0.0
        %967 = vmatprep.subr.mxu0 0.0
        %968 = vmatpush2.msra.mxu0 0.0
        %969 = vmatprep.subr.mxu0 0.0
        %970 = vmatpush2.msra.mxu0 0.0
        %971 = vmatprep.subr.mxu0 0.0
        %972 = vmatpush2.msra.mxu0 0.0
        %973 = vmatprep.subr.mxu0 0.0
        %974 = vmatpush2.msra.mxu0 0.0
        %975 = vmatprep.subr.mxu0 0.0
        %976 = vmatpush2.msra.mxu0 0.0
        %977 = vmatprep.subr.mxu0 0.0
        %978 = vmatpush2.msra.mxu0 0.0
        %979 = vmatprep.mubr.f32.mxu0 0.0
        %v980 = vand.u32 %v696, 4294901760
        %v981 = vsub.f32 %v696, %v980
        %v982 = vand.u32 %v981, 4294901760
        %983 = vmatmul.mubr.f32.gmra.mxu0 %v982
        %v984 = vpop.f32.mrf.mxu0
        %v985 = vadd.f32 %v912, %v984
        %v986 = vpop.f32.mrf.mxu0
        %987 = vdwg.mxu0
        %988 = vmatprep.subr.mxu0 0.0
        %989 = vmatpush1.msra.mxu0 0.0
        %990 = vmatprep.subr.mxu0 0.0
        %991 = vmatpush1.msra.mxu0 0.0
        %992 = vmatprep.subr.mxu0 0.0
        %993 = vmatpush1.msra.mxu0 0.0
        %994 = vmatprep.subr.mxu0 0.0
        %995 = vmatpush1.msra.mxu0 0.0
        %996 = vmatprep.subr.mxu0 0.0
        %997 = vmatpush1.msra.mxu0 0.0
        %998 = vmatprep.subr.mxu0 0.0
        %999 = vmatpush1.msra.mxu0 0.0
        %1000 = vmatprep.subr.mxu0 0.0
        %1001 = vmatpush1.msra.mxu0 0.0
        %1002 = vmatprep.subr.mxu0 0.0
        %1003 = vmatpush1.msra.mxu0 0.0
        %1004 = vmatprep.subr.mxu0 0.0
        %1005 = vmatpush1.msra.mxu0 0.0
        %1006 = vmatprep.subr.mxu0 0.0
        %1007 = vmatpush1.msra.mxu0 0.0
        %1008 = vmatprep.subr.mxu0 0.0
        %1009 = vmatpush1.msra.mxu0 0.0
        %1010 = vmatprep.subr.mxu0 0.0
        %1011 = vmatpush1.msra.mxu0 0.0
        %1012 = vmatprep.subr.mxu0 0.0
        %1013 = vmatpush1.msra.mxu0 0.0
        %1014 = vmatprep.subr.mxu0 0.0
        %1015 = vmatpush1.msra.mxu0 0.0
        %1016 = vmatprep.subr.mxu0 0.0
        %1017 = vmatpush1.msra.mxu0 0.0
        %1018 = vmatprep.subr.mxu0 0.0
        %1019 = vmatpush1.msra.mxu0 0.0
        %1020 = vmatprep.subr.mxu0 0.0
        %1021 = vmatpush2.msra.mxu0 0.0
        %1022 = vmatprep.subr.mxu0 0.0
        %1023 = vmatpush2.msra.mxu0 0.0
        %1024 = vmatprep.subr.mxu0 0.0
        %1025 = vmatpush2.msra.mxu0 0.0
        %1026 = vmatprep.subr.mxu0 0.0
        %1027 = vmatpush2.msra.mxu0 0.0
        %1028 = vmatprep.subr.mxu0 0.0
        %1029 = vmatpush2.msra.mxu0 0.0
        %1030 = vmatprep.subr.mxu0 0.0
        %1031 = vmatpush2.msra.mxu0 0.0
        %1032 = vmatprep.subr.mxu0 0.0
        %1033 = vmatpush2.msra.mxu0 0.0
        %1034 = vmatprep.subr.mxu0 0.0
        %1035 = vmatpush2.msra.mxu0 0.0
        %1036 = vmatprep.subr.mxu0 0.0
        %1037 = vmatpush2.msra.mxu0 0.0
        %1038 = vmatprep.subr.mxu0 0.0
        %1039 = vmatpush2.msra.mxu0 0.0
        %1040 = vmatprep.subr.mxu0 0.0
        %1041 = vmatpush2.msra.mxu0 0.0
        %1042 = vmatprep.subr.mxu0 0.0
        %1043 = vmatpush2.msra.mxu0 0.0
        %1044 = vmatprep.subr.mxu0 0.0
        %1045 = vmatpush2.msra.mxu0 0.0
        %1046 = vmatprep.subr.mxu0 0.0
        %1047 = vmatpush2.msra.mxu0 0.0
        %1048 = vmatprep.subr.mxu0 0.0
        %1049 = vmatpush2.msra.mxu0 0.0
        %1050 = vmatprep.subr.mxu0 0.0
        %1051 = vmatpush2.msra.mxu0 0.0
        %1052 = vmatprep.mubr.f32.mxu0 0.0
        %v1053 = vand.u32 %v696, 4294901760
        %1054 = vmatmul.mubr.f32.gmra.mxu0 %v1053
        %v1055 = vpop.f32.mrf.mxu0
        %v1056 = vadd.f32 %v985, %v1055
        %v1057 = vpop.f32.mrf.mxu0
        %1058 = vdwg.mxu0
        %1059 = vmatprep.subr.mxu0 0.0
        %1060 = vmatpush1.msra.mxu0 1.0
        %1061 = vmatprep.subr.mxu0 0.0
        %1062 = vmatpush1.msra.mxu0 1.0
        %1063 = vmatprep.subr.mxu0 0.0
        %1064 = vmatpush1.msra.mxu0 1.0
        %1065 = vmatprep.subr.mxu0 0.0
        %1066 = vmatpush1.msra.mxu0 1.0
        %1067 = vmatprep.subr.mxu0 0.0
        %1068 = vmatpush1.msra.mxu0 1.0
        %1069 = vmatprep.subr.mxu0 0.0
        %1070 = vmatpush1.msra.mxu0 1.0
        %1071 = vmatprep.subr.mxu0 0.0
        %1072 = vmatpush1.msra.mxu0 1.0
        %1073 = vmatprep.subr.mxu0 0.0
        %1074 = vmatpush1.msra.mxu0 1.0
        %1075 = vmatprep.subr.mxu0 0.0
        %1076 = vmatpush1.msra.mxu0 1.0
        %1077 = vmatprep.subr.mxu0 0.0
        %1078 = vmatpush1.msra.mxu0 1.0
        %1079 = vmatprep.subr.mxu0 0.0
        %1080 = vmatpush1.msra.mxu0 1.0
        %1081 = vmatprep.subr.mxu0 0.0
        %1082 = vmatpush1.msra.mxu0 1.0
        %1083 = vmatprep.subr.mxu0 0.0
        %1084 = vmatpush1.msra.mxu0 1.0
        %1085 = vmatprep.subr.mxu0 0.0
        %1086 = vmatpush1.msra.mxu0 1.0
        %1087 = vmatprep.subr.mxu0 0.0
        %1088 = vmatpush1.msra.mxu0 1.0
        %1089 = vmatprep.subr.mxu0 0.0
        %1090 = vmatpush1.msra.mxu0 1.0
        %1091 = vmatprep.subr.mxu0 0.0
        %1092 = vmatpush2.msra.mxu0 0.0
        %1093 = vmatprep.subr.mxu0 0.0
        %1094 = vmatpush2.msra.mxu0 0.0
        %1095 = vmatprep.subr.mxu0 0.0
        %1096 = vmatpush2.msra.mxu0 0.0
        %1097 = vmatprep.subr.mxu0 0.0
        %1098 = vmatpush2.msra.mxu0 0.0
        %1099 = vmatprep.subr.mxu0 0.0
        %1100 = vmatpush2.msra.mxu0 0.0
        %1101 = vmatprep.subr.mxu0 0.0
        %1102 = vmatpush2.msra.mxu0 0.0
        %1103 = vmatprep.subr.mxu0 0.0
        %1104 = vmatpush2.msra.mxu0 0.0
        %1105 = vmatprep.subr.mxu0 0.0
        %1106 = vmatpush2.msra.mxu0 0.0
        %1107 = vmatprep.subr.mxu0 0.0
        %1108 = vmatpush2.msra.mxu0 0.0
        %1109 = vmatprep.subr.mxu0 0.0
        %1110 = vmatpush2.msra.mxu0 0.0
        %1111 = vmatprep.subr.mxu0 0.0
        %1112 = vmatpush2.msra.mxu0 0.0
        %1113 = vmatprep.subr.mxu0 0.0
        %1114 = vmatpush2.msra.mxu0 0.0
        %1115 = vmatprep.subr.mxu0 0.0
        %1116 = vmatpush2.msra.mxu0 0.0
        %1117 = vmatprep.subr.mxu0 0.0
        %1118 = vmatpush2.msra.mxu0 0.0
        %1119 = vmatprep.subr.mxu0 0.0
        %1120 = vmatpush2.msra.mxu0 0.0
        %1121 = vmatprep.subr.mxu0 0.0
        %1122 = vmatpush2.msra.mxu0 0.0
        %1123 = vmatprep.mubr.f32.mxu0 0.0
        %v1124 = vand.u32 %v696, 4294901760
        %1125 = vmatmul.mubr.f32.gmra.mxu0 %v1124
        %v1126 = vpop.f32.mrf.mxu0
        %v1127 = vadd.f32 %v1056, %v1126
        %v1128 = vpop.f32.mrf.mxu0
        %1129 = vdwg.mxu0
        %v1130 = vrsqrt.pop %v1127
        %v1131 = vmin.f32 %v1130, 10000000.0
        %v1132 = vmul.f32 %v258, %v259
        %1133 = vmatprep.subr.mxu0 0.0
        %1134 = vmatpush1.msra.mxu0 1.0
        %1135 = vmatprep.subr.mxu0 0.0
        %1136 = vmatpush1.msra.mxu0 1.0
        %1137 = vmatprep.subr.mxu0 0.0
        %1138 = vmatpush1.msra.mxu0 1.0
        %1139 = vmatprep.subr.mxu0 0.0
        %1140 = vmatpush1.msra.mxu0 1.0
        %1141 = vmatprep.subr.mxu0 0.0
        %1142 = vmatpush1.msra.mxu0 1.0
        %1143 = vmatprep.subr.mxu0 0.0
        %1144 = vmatpush1.msra.mxu0 1.0
        %1145 = vmatprep.subr.mxu0 0.0
        %1146 = vmatpush1.msra.mxu0 1.0
        %1147 = vmatprep.subr.mxu0 0.0
        %1148 = vmatpush1.msra.mxu0 1.0
        %1149 = vmatprep.subr.mxu0 0.0
        %1150 = vmatpush1.msra.mxu0 1.0
        %1151 = vmatprep.subr.mxu0 0.0
        %1152 = vmatpush1.msra.mxu0 1.0
        %1153 = vmatprep.subr.mxu0 0.0
        %1154 = vmatpush1.msra.mxu0 1.0
        %1155 = vmatprep.subr.mxu0 0.0
        %1156 = vmatpush1.msra.mxu0 1.0
        %1157 = vmatprep.subr.mxu0 0.0
        %1158 = vmatpush1.msra.mxu0 1.0
        %1159 = vmatprep.subr.mxu0 0.0
        %1160 = vmatpush1.msra.mxu0 1.0
        %1161 = vmatprep.subr.mxu0 0.0
        %1162 = vmatpush1.msra.mxu0 1.0
        %1163 = vmatprep.subr.mxu0 0.0
        %1164 = vmatpush1.msra.mxu0 1.0
        %1165 = vmatprep.subr.mxu0 0.0
        %1166 = vmatpush2.msra.mxu0 0.0
        %1167 = vmatprep.subr.mxu0 0.0
        %1168 = vmatpush2.msra.mxu0 0.0
        %1169 = vmatprep.subr.mxu0 0.0
        %1170 = vmatpush2.msra.mxu0 0.0
        %1171 = vmatprep.subr.mxu0 0.0
        %1172 = vmatpush2.msra.mxu0 0.0
        %1173 = vmatprep.subr.mxu0 0.0
        %1174 = vmatpush2.msra.mxu0 0.0
        %1175 = vmatprep.subr.mxu0 0.0
        %1176 = vmatpush2.msra.mxu0 0.0
        %1177 = vmatprep.subr.mxu0 0.0
        %1178 = vmatpush2.msra.mxu0 0.0
        %1179 = vmatprep.subr.mxu0 0.0
        %1180 = vmatpush2.msra.mxu0 0.0
        %1181 = vmatprep.subr.mxu0 0.0
        %1182 = vmatpush2.msra.mxu0 0.0
        %1183 = vmatprep.subr.mxu0 0.0
        %1184 = vmatpush2.msra.mxu0 0.0
        %1185 = vmatprep.subr.mxu0 0.0
        %1186 = vmatpush2.msra.mxu0 0.0
        %1187 = vmatprep.subr.mxu0 0.0
        %1188 = vmatpush2.msra.mxu0 0.0
        %1189 = vmatprep.subr.mxu0 0.0
        %1190 = vmatpush2.msra.mxu0 0.0
        %1191 = vmatprep.subr.mxu0 0.0
        %1192 = vmatpush2.msra.mxu0 0.0
        %1193 = vmatprep.subr.mxu0 0.0
        %1194 = vmatpush2.msra.mxu0 0.0
        %1195 = vmatprep.subr.mxu0 0.0
        %1196 = vmatpush2.msra.mxu0 0.0
        %1197 = vmatprep.mubr.f32.mxu0 0.0
        %v1198 = vand.u32 %v1132, 4294901760
        %v1199 = vsub.f32 %v1132, %v1198
        %v1200 = vand.u32 %v1199, 4294901760
        %v1201 = vsub.f32 %v1199, %v1200
        %v1202 = vand.u32 %v1201, 4294901760
        %1203 = vmatmul.mubr.f32.gmra.mxu0 %v1202
        %v1204 = vpop.f32.mrf.mxu0
        %v1205 = vadd.f32 0.0, %v1204
        %v1206 = vpop.f32.mrf.mxu0
        %1207 = vdwg.mxu0
        %1208 = vmatprep.subr.mxu0 0.0
        %1209 = vmatpush1.msra.mxu0 0.0
        %1210 = vmatprep.subr.mxu0 0.0
        %1211 = vmatpush1.msra.mxu0 0.0
        %1212 = vmatprep.subr.mxu0 0.0
        %1213 = vmatpush1.msra.mxu0 0.0
        %1214 = vmatprep.subr.mxu0 0.0
        %1215 = vmatpush1.msra.mxu0 0.0
        %1216 = vmatprep.subr.mxu0 0.0
        %1217 = vmatpush1.msra.mxu0 0.0
        %1218 = vmatprep.subr.mxu0 0.0
        %1219 = vmatpush1.msra.mxu0 0.0
        %1220 = vmatprep.subr.mxu0 0.0
        %1221 = vmatpush1.msra.mxu0 0.0
        %1222 = vmatprep.subr.mxu0 0.0
        %1223 = vmatpush1.msra.mxu0 0.0
        %1224 = vmatprep.subr.mxu0 0.0
        %1225 = vmatpush1.msra.mxu0 0.0
        %1226 = vmatprep.subr.mxu0 0.0
        %1227 = vmatpush1.msra.mxu0 0.0
        %1228 = vmatprep.subr.mxu0 0.0
        %1229 = vmatpush1.msra.mxu0 0.0
        %1230 = vmatprep.subr.mxu0 0.0
        %1231 = vmatpush1.msra.mxu0 0.0
        %1232 = vmatprep.subr.mxu0 0.0
        %1233 = vmatpush1.msra.mxu0 0.0
        %1234 = vmatprep.subr.mxu0 0.0
        %1235 = vmatpush1.msra.mxu0 0.0
        %1236 = vmatprep.subr.mxu0 0.0
        %1237 = vmatpush1.msra.mxu0 0.0
        %1238 = vmatprep.subr.mxu0 0.0
        %1239 = vmatpush1.msra.mxu0 0.0
        %1240 = vmatprep.subr.mxu0 0.0
        %1241 = vmatpush2.msra.mxu0 0.0
        %1242 = vmatprep.subr.mxu0 0.0
        %1243 = vmatpush2.msra.mxu0 0.0
        %1244 = vmatprep.subr.mxu0 0.0
        %1245 = vmatpush2.msra.mxu0 0.0
        %1246 = vmatprep.subr.mxu0 0.0
        %1247 = vmatpush2.msra.mxu0 0.0
        %1248 = vmatprep.subr.mxu0 0.0
        %1249 = vmatpush2.msra.mxu0 0.0
        %1250 = vmatprep.subr.mxu0 0.0
        %1251 = vmatpush2.msra.mxu0 0.0
        %1252 = vmatprep.subr.mxu0 0.0
        %1253 = vmatpush2.msra.mxu0 0.0
        %1254 = vmatprep.subr.mxu0 0.0
        %1255 = vmatpush2.msra.mxu0 0.0
        %1256 = vmatprep.subr.mxu0 0.0
        %1257 = vmatpush2.msra.mxu0 0.0
        %1258 = vmatprep.subr.mxu0 0.0
        %1259 = vmatpush2.msra.mxu0 0.0
        %1260 = vmatprep.subr.mxu0 0.0
        %1261 = vmatpush2.msra.mxu0 0.0
        %1262 = vmatprep.subr.mxu0 0.0
        %1263 = vmatpush2.msra.mxu0 0.0
        %1264 = vmatprep.subr.mxu0 0.0
        %1265 = vmatpush2.msra.mxu0 0.0
        %1266 = vmatprep.subr.mxu0 0.0
        %1267 = vmatpush2.msra.mxu0 0.0
        %1268 = vmatprep.subr.mxu0 0.0
        %1269 = vmatpush2.msra.mxu0 0.0
        %1270 = vmatprep.subr.mxu0 0.0
        %1271 = vmatpush2.msra.mxu0 0.0
        %1272 = vmatprep.mubr.f32.mxu0 0.0
        %v1273 = vand.u32 %v1132, 4294901760
        %1274 = vmatmul.mubr.f32.gmra.mxu0 %v1273
        %v1275 = vpop.f32.mrf.mxu0
        %v1276 = vadd.f32 %v1205, %v1275
        %v1277 = vpop.f32.mrf.mxu0
        %1278 = vdwg.mxu0
        %1279 = vmatprep.subr.mxu0 0.0
        %1280 = vmatpush1.msra.mxu0 0.0
        %1281 = vmatprep.subr.mxu0 0.0
        %1282 = vmatpush1.msra.mxu0 0.0
        %1283 = vmatprep.subr.mxu0 0.0
        %1284 = vmatpush1.msra.mxu0 0.0
        %1285 = vmatprep.subr.mxu0 0.0
        %1286 = vmatpush1.msra.mxu0 0.0
        %1287 = vmatprep.subr.mxu0 0.0
        %1288 = vmatpush1.msra.mxu0 0.0
        %1289 = vmatprep.subr.mxu0 0.0
        %1290 = vmatpush1.msra.mxu0 0.0
        %1291 = vmatprep.subr.mxu0 0.0
        %1292 = vmatpush1.msra.mxu0 0.0
        %1293 = vmatprep.subr.mxu0 0.0
        %1294 = vmatpush1.msra.mxu0 0.0
        %1295 = vmatprep.subr.mxu0 0.0
        %1296 = vmatpush1.msra.mxu0 0.0
        %1297 = vmatprep.subr.mxu0 0.0
        %1298 = vmatpush1.msra.mxu0 0.0
        %1299 = vmatprep.subr.mxu0 0.0
        %1300 = vmatpush1.msra.mxu0 0.0
        %1301 = vmatprep.subr.mxu0 0.0
        %1302 = vmatpush1.msra.mxu0 0.0
        %1303 = vmatprep.subr.mxu0 0.0
        %1304 = vmatpush1.msra.mxu0 0.0
        %1305 = vmatprep.subr.mxu0 0.0
        %1306 = vmatpush1.msra.mxu0 0.0
        %1307 = vmatprep.subr.mxu0 0.0
        %1308 = vmatpush1.msra.mxu0 0.0
        %1309 = vmatprep.subr.mxu0 0.0
        %1310 = vmatpush1.msra.mxu0 0.0
        %1311 = vmatprep.subr.mxu0 0.0
        %1312 = vmatpush2.msra.mxu0 0.0
        %1313 = vmatprep.subr.mxu0 0.0
        %1314 = vmatpush2.msra.mxu0 0.0
        %1315 = vmatprep.subr.mxu0 0.0
        %1316 = vmatpush2.msra.mxu0 0.0
        %1317 = vmatprep.subr.mxu0 0.0
        %1318 = vmatpush2.msra.mxu0 0.0
        %1319 = vmatprep.subr.mxu0 0.0
        %1320 = vmatpush2.msra.mxu0 0.0
        %1321 = vmatprep.subr.mxu0 0.0
        %1322 = vmatpush2.msra.mxu0 0.0
        %1323 = vmatprep.subr.mxu0 0.0
        %1324 = vmatpush2.msra.mxu0 0.0
        %1325 = vmatprep.subr.mxu0 0.0
        %1326 = vmatpush2.msra.mxu0 0.0
        %1327 = vmatprep.subr.mxu0 0.0
        %1328 = vmatpush2.msra.mxu0 0.0
        %1329 = vmatprep.subr.mxu0 0.0
        %1330 = vmatpush2.msra.mxu0 0.0
        %1331 = vmatprep.subr.mxu0 0.0
        %1332 = vmatpush2.msra.mxu0 0.0
        %1333 = vmatprep.subr.mxu0 0.0
        %1334 = vmatpush2.msra.mxu0 0.0
        %1335 = vmatprep.subr.mxu0 0.0
        %1336 = vmatpush2.msra.mxu0 0.0
        %1337 = vmatprep.subr.mxu0 0.0
        %1338 = vmatpush2.msra.mxu0 0.0
        %1339 = vmatprep.subr.mxu0 0.0
        %1340 = vmatpush2.msra.mxu0 0.0
        %1341 = vmatprep.subr.mxu0 0.0
        %1342 = vmatpush2.msra.mxu0 0.0
        %1343 = vmatprep.mubr.f32.mxu0 0.0
        %v1344 = vand.u32 %v1132, 4294901760
        %v1345 = vsub.f32 %v1132, %v1344
        %1346 = vmatmul.mubr.f32.gmra.mxu0 %v1345
        %v1347 = vpop.f32.mrf.mxu0
        %v1348 = vadd.f32 %v1276, %v1347
        %v1349 = vpop.f32.mrf.mxu0
        %1350 = vdwg.mxu0
        %1351 = vmatprep.subr.mxu0 0.0
        %1352 = vmatpush1.msra.mxu0 1.0
        %1353 = vmatprep.subr.mxu0 0.0
        %1354 = vmatpush1.msra.mxu0 1.0
        %1355 = vmatprep.subr.mxu0 0.0
        %1356 = vmatpush1.msra.mxu0 1.0
        %1357 = vmatprep.subr.mxu0 0.0
        %1358 = vmatpush1.msra.mxu0 1.0
        %1359 = vmatprep.subr.mxu0 0.0
        %1360 = vmatpush1.msra.mxu0 1.0
        %1361 = vmatprep.subr.mxu0 0.0
        %1362 = vmatpush1.msra.mxu0 1.0
        %1363 = vmatprep.subr.mxu0 0.0
        %1364 = vmatpush1.msra.mxu0 1.0
        %1365 = vmatprep.subr.mxu0 0.0
        %1366 = vmatpush1.msra.mxu0 1.0
        %1367 = vmatprep.subr.mxu0 0.0
        %1368 = vmatpush1.msra.mxu0 1.0
        %1369 = vmatprep.subr.mxu0 0.0
        %1370 = vmatpush1.msra.mxu0 1.0
        %1371 = vmatprep.subr.mxu0 0.0
        %1372 = vmatpush1.msra.mxu0 1.0
        %1373 = vmatprep.subr.mxu0 0.0
        %1374 = vmatpush1.msra.mxu0 1.0
        %1375 = vmatprep.subr.mxu0 0.0
        %1376 = vmatpush1.msra.mxu0 1.0
        %1377 = vmatprep.subr.mxu0 0.0
        %1378 = vmatpush1.msra.mxu0 1.0
        %1379 = vmatprep.subr.mxu0 0.0
        %1380 = vmatpush1.msra.mxu0 1.0
        %1381 = vmatprep.subr.mxu0 0.0
        %1382 = vmatpush1.msra.mxu0 1.0
        %1383 = vmatprep.subr.mxu0 0.0
        %1384 = vmatpush2.msra.mxu0 0.0
        %1385 = vmatprep.subr.mxu0 0.0
        %1386 = vmatpush2.msra.mxu0 0.0
        %1387 = vmatprep.subr.mxu0 0.0
        %1388 = vmatpush2.msra.mxu0 0.0
        %1389 = vmatprep.subr.mxu0 0.0
        %1390 = vmatpush2.msra.mxu0 0.0
        %1391 = vmatprep.subr.mxu0 0.0
        %1392 = vmatpush2.msra.mxu0 0.0
        %1393 = vmatprep.subr.mxu0 0.0
        %1394 = vmatpush2.msra.mxu0 0.0
        %1395 = vmatprep.subr.mxu0 0.0
        %1396 = vmatpush2.msra.mxu0 0.0
        %1397 = vmatprep.subr.mxu0 0.0
        %1398 = vmatpush2.msra.mxu0 0.0
        %1399 = vmatprep.subr.mxu0 0.0
        %1400 = vmatpush2.msra.mxu0 0.0
        %1401 = vmatprep.subr.mxu0 0.0
        %1402 = vmatpush2.msra.mxu0 0.0
        %1403 = vmatprep.subr.mxu0 0.0
        %1404 = vmatpush2.msra.mxu0 0.0
        %1405 = vmatprep.subr.mxu0 0.0
        %1406 = vmatpush2.msra.mxu0 0.0
        %1407 = vmatprep.subr.mxu0 0.0
        %1408 = vmatpush2.msra.mxu0 0.0
        %1409 = vmatprep.subr.mxu0 0.0
        %1410 = vmatpush2.msra.mxu0 0.0
        %1411 = vmatprep.subr.mxu0 0.0
        %1412 = vmatpush2.msra.mxu0 0.0
        %1413 = vmatprep.subr.mxu0 0.0
        %1414 = vmatpush2.msra.mxu0 0.0
        %1415 = vmatprep.mubr.f32.mxu0 0.0
        %v1416 = vand.u32 %v1132, 4294901760
        %v1417 = vsub.f32 %v1132, %v1416
        %v1418 = vand.u32 %v1417, 4294901760
        %1419 = vmatmul.mubr.f32.gmra.mxu0 %v1418
        %v1420 = vpop.f32.mrf.mxu0
        %v1421 = vadd.f32 %v1348, %v1420
        %v1422 = vpop.f32.mrf.mxu0
        %1423 = vdwg.mxu0
        %1424 = vmatprep.subr.mxu0 0.0
        %1425 = vmatpush1.msra.mxu0 0.0
        %1426 = vmatprep.subr.mxu0 0.0
        %1427 = vmatpush1.msra.mxu0 0.0
        %1428 = vmatprep.subr.mxu0 0.0
        %1429 = vmatpush1.msra.mxu0 0.0
        %1430 = vmatprep.subr.mxu0 0.0
        %1431 = vmatpush1.msra.mxu0 0.0
        %1432 = vmatprep.subr.mxu0 0.0
        %1433 = vmatpush1.msra.mxu0 0.0
        %1434 = vmatprep.subr.mxu0 0.0
        %1435 = vmatpush1.msra.mxu0 0.0
        %1436 = vmatprep.subr.mxu0 0.0
        %1437 = vmatpush1.msra.mxu0 0.0
        %1438 = vmatprep.subr.mxu0 0.0
        %1439 = vmatpush1.msra.mxu0 0.0
        %1440 = vmatprep.subr.mxu0 0.0
        %1441 = vmatpush1.msra.mxu0 0.0
        %1442 = vmatprep.subr.mxu0 0.0
        %1443 = vmatpush1.msra.mxu0 0.0
        %1444 = vmatprep.subr.mxu0 0.0
        %1445 = vmatpush1.msra.mxu0 0.0
        %1446 = vmatprep.subr.mxu0 0.0
        %1447 = vmatpush1.msra.mxu0 0.0
        %1448 = vmatprep.subr.mxu0 0.0
        %1449 = vmatpush1.msra.mxu0 0.0
        %1450 = vmatprep.subr.mxu0 0.0
        %1451 = vmatpush1.msra.mxu0 0.0
        %1452 = vmatprep.subr.mxu0 0.0
        %1453 = vmatpush1.msra.mxu0 0.0
        %1454 = vmatprep.subr.mxu0 0.0
        %1455 = vmatpush1.msra.mxu0 0.0
        %1456 = vmatprep.subr.mxu0 0.0
        %1457 = vmatpush2.msra.mxu0 0.0
        %1458 = vmatprep.subr.mxu0 0.0
        %1459 = vmatpush2.msra.mxu0 0.0
        %1460 = vmatprep.subr.mxu0 0.0
        %1461 = vmatpush2.msra.mxu0 0.0
        %1462 = vmatprep.subr.mxu0 0.0
        %1463 = vmatpush2.msra.mxu0 0.0
        %1464 = vmatprep.subr.mxu0 0.0
        %1465 = vmatpush2.msra.mxu0 0.0
        %1466 = vmatprep.subr.mxu0 0.0
        %1467 = vmatpush2.msra.mxu0 0.0
        %1468 = vmatprep.subr.mxu0 0.0
        %1469 = vmatpush2.msra.mxu0 0.0
        %1470 = vmatprep.subr.mxu0 0.0
        %1471 = vmatpush2.msra.mxu0 0.0
        %1472 = vmatprep.subr.mxu0 0.0
        %1473 = vmatpush2.msra.mxu0 0.0
        %1474 = vmatprep.subr.mxu0 0.0
        %1475 = vmatpush2.msra.mxu0 0.0
        %1476 = vmatprep.subr.mxu0 0.0
        %1477 = vmatpush2.msra.mxu0 0.0
        %1478 = vmatprep.subr.mxu0 0.0
        %1479 = vmatpush2.msra.mxu0 0.0
        %1480 = vmatprep.subr.mxu0 0.0
        %1481 = vmatpush2.msra.mxu0 0.0
        %1482 = vmatprep.subr.mxu0 0.0
        %1483 = vmatpush2.msra.mxu0 0.0
        %1484 = vmatprep.subr.mxu0 0.0
        %1485 = vmatpush2.msra.mxu0 0.0
        %1486 = vmatprep.subr.mxu0 0.0
        %1487 = vmatpush2.msra.mxu0 0.0
        %1488 = vmatprep.mubr.f32.mxu0 0.0
        %v1489 = vand.u32 %v1132, 4294901760
        %1490 = vmatmul.mubr.f32.gmra.mxu0 %v1489
        %v1491 = vpop.f32.mrf.mxu0
        %v1492 = vadd.f32 %v1421, %v1491
        %v1493 = vpop.f32.mrf.mxu0
        %1494 = vdwg.mxu0
        %1495 = vmatprep.subr.mxu0 0.0
        %1496 = vmatpush1.msra.mxu0 1.0
        %1497 = vmatprep.subr.mxu0 0.0
        %1498 = vmatpush1.msra.mxu0 1.0
        %1499 = vmatprep.subr.mxu0 0.0
        %1500 = vmatpush1.msra.mxu0 1.0
        %1501 = vmatprep.subr.mxu0 0.0
        %1502 = vmatpush1.msra.mxu0 1.0
        %1503 = vmatprep.subr.mxu0 0.0
        %1504 = vmatpush1.msra.mxu0 1.0
        %1505 = vmatprep.subr.mxu0 0.0
        %1506 = vmatpush1.msra.mxu0 1.0
        %1507 = vmatprep.subr.mxu0 0.0
        %1508 = vmatpush1.msra.mxu0 1.0
        %1509 = vmatprep.subr.mxu0 0.0
        %1510 = vmatpush1.msra.mxu0 1.0
        %1511 = vmatprep.subr.mxu0 0.0
        %1512 = vmatpush1.msra.mxu0 1.0
        %1513 = vmatprep.subr.mxu0 0.0
        %1514 = vmatpush1.msra.mxu0 1.0
        %1515 = vmatprep.subr.mxu0 0.0
        %1516 = vmatpush1.msra.mxu0 1.0
        %1517 = vmatprep.subr.mxu0 0.0
        %1518 = vmatpush1.msra.mxu0 1.0
        %1519 = vmatprep.subr.mxu0 0.0
        %1520 = vmatpush1.msra.mxu0 1.0
        %1521 = vmatprep.subr.mxu0 0.0
        %1522 = vmatpush1.msra.mxu0 1.0
        %1523 = vmatprep.subr.mxu0 0.0
        %1524 = vmatpush1.msra.mxu0 1.0
        %1525 = vmatprep.subr.mxu0 0.0
        %1526 = vmatpush1.msra.mxu0 1.0
        %1527 = vmatprep.subr.mxu0 0.0
        %1528 = vmatpush2.msra.mxu0 0.0
        %1529 = vmatprep.subr.mxu0 0.0
        %1530 = vmatpush2.msra.mxu0 0.0
        %1531 = vmatprep.subr.mxu0 0.0
        %1532 = vmatpush2.msra.mxu0 0.0
        %1533 = vmatprep.subr.mxu0 0.0
        %1534 = vmatpush2.msra.mxu0 0.0
        %1535 = vmatprep.subr.mxu0 0.0
        %1536 = vmatpush2.msra.mxu0 0.0
        %1537 = vmatprep.subr.mxu0 0.0
        %1538 = vmatpush2.msra.mxu0 0.0
        %1539 = vmatprep.subr.mxu0 0.0
        %1540 = vmatpush2.msra.mxu0 0.0
        %1541 = vmatprep.subr.mxu0 0.0
        %1542 = vmatpush2.msra.mxu0 0.0
        %1543 = vmatprep.subr.mxu0 0.0
        %1544 = vmatpush2.msra.mxu0 0.0
        %1545 = vmatprep.subr.mxu0 0.0
        %1546 = vmatpush2.msra.mxu0 0.0
        %1547 = vmatprep.subr.mxu0 0.0
        %1548 = vmatpush2.msra.mxu0 0.0
        %1549 = vmatprep.subr.mxu0 0.0
        %1550 = vmatpush2.msra.mxu0 0.0
        %1551 = vmatprep.subr.mxu0 0.0
        %1552 = vmatpush2.msra.mxu0 0.0
        %1553 = vmatprep.subr.mxu0 0.0
        %1554 = vmatpush2.msra.mxu0 0.0
        %1555 = vmatprep.subr.mxu0 0.0
        %1556 = vmatpush2.msra.mxu0 0.0
        %1557 = vmatprep.subr.mxu0 0.0
        %1558 = vmatpush2.msra.mxu0 0.0
        %1559 = vmatprep.mubr.f32.mxu0 0.0
        %v1560 = vand.u32 %v1132, 4294901760
        %1561 = vmatmul.mubr.f32.gmra.mxu0 %v1560
        %v1562 = vpop.f32.mrf.mxu0
        %v1563 = vadd.f32 %v1492, %v1562
        %v1564 = vpop.f32.mrf.mxu0
        %1565 = vdwg.mxu0
        %v1566 = vmul.f32 %v695, %v1131
        %v1567 = vmul.f32 %v1563, %v1566
        %v1568 = vmul.f32 %v1567, 1.442695
        %v1569 = vpow.pop %v1568
        %v1570 = vld [vmem:[%s222] sm:$0xff]
        %v1571 = vmul.f32 %v1570, %v1570
        %1572 = vmatprep.subr.mxu0 0.0
        %1573 = vmatpush1.msra.mxu0 1.0
        %1574 = vmatprep.subr.mxu0 0.0
        %1575 = vmatpush1.msra.mxu0 1.0
        %1576 = vmatprep.subr.mxu0 0.0
        %1577 = vmatpush1.msra.mxu0 1.0
        %1578 = vmatprep.subr.mxu0 0.0
        %1579 = vmatpush1.msra.mxu0 1.0
        %1580 = vmatprep.subr.mxu0 0.0
        %1581 = vmatpush1.msra.mxu0 1.0
        %1582 = vmatprep.subr.mxu0 0.0
        %1583 = vmatpush1.msra.mxu0 1.0
        %1584 = vmatprep.subr.mxu0 0.0
        %1585 = vmatpush1.msra.mxu0 1.0
        %1586 = vmatprep.subr.mxu0 0.0
        %1587 = vmatpush1.msra.mxu0 1.0
        %1588 = vmatprep.subr.mxu0 0.0
        %1589 = vmatpush1.msra.mxu0 1.0
        %1590 = vmatprep.subr.mxu0 0.0
        %1591 = vmatpush1.msra.mxu0 1.0
        %1592 = vmatprep.subr.mxu0 0.0
        %1593 = vmatpush1.msra.mxu0 1.0
        %1594 = vmatprep.subr.mxu0 0.0
        %1595 = vmatpush1.msra.mxu0 1.0
        %1596 = vmatprep.subr.mxu0 0.0
        %1597 = vmatpush1.msra.mxu0 1.0
        %1598 = vmatprep.subr.mxu0 0.0
        %1599 = vmatpush1.msra.mxu0 1.0
        %1600 = vmatprep.subr.mxu0 0.0
        %1601 = vmatpush1.msra.mxu0 1.0
        %1602 = vmatprep.subr.mxu0 0.0
        %1603 = vmatpush1.msra.mxu0 1.0
        %1604 = vmatprep.subr.mxu0 0.0
        %1605 = vmatpush2.msra.mxu0 0.0
        %1606 = vmatprep.subr.mxu0 0.0
        %1607 = vmatpush2.msra.mxu0 0.0
        %1608 = vmatprep.subr.mxu0 0.0
        %1609 = vmatpush2.msra.mxu0 0.0
        %1610 = vmatprep.subr.mxu0 0.0
        %1611 = vmatpush2.msra.mxu0 0.0
        %1612 = vmatprep.subr.mxu0 0.0
        %1613 = vmatpush2.msra.mxu0 0.0
        %1614 = vmatprep.subr.mxu0 0.0
        %1615 = vmatpush2.msra.mxu0 0.0
        %1616 = vmatprep.subr.mxu0 0.0
        %1617 = vmatpush2.msra.mxu0 0.0
        %1618 = vmatprep.subr.mxu0 0.0
        %1619 = vmatpush2.msra.mxu0 0.0
        %1620 = vmatprep.subr.mxu0 0.0
        %1621 = vmatpush2.msra.mxu0 0.0
        %1622 = vmatprep.subr.mxu0 0.0
        %1623 = vmatpush2.msra.mxu0 0.0
        %1624 = vmatprep.subr.mxu0 0.0
        %1625 = vmatpush2.msra.mxu0 0.0
        %1626 = vmatprep.subr.mxu0 0.0
        %1627 = vmatpush2.msra.mxu0 0.0
        %1628 = vmatprep.subr.mxu0 0.0
        %1629 = vmatpush2.msra.mxu0 0.0
        %1630 = vmatprep.subr.mxu0 0.0
        %1631 = vmatpush2.msra.mxu0 0.0
        %1632 = vmatprep.subr.mxu0 0.0
        %1633 = vmatpush2.msra.mxu0 0.0
        %1634 = vmatprep.subr.mxu0 0.0
        %1635 = vmatpush2.msra.mxu0 0.0
        %1636 = vmatprep.mubr.f32.mxu0 0.0
        %v1637 = vand.u32 %v1571, 4294901760
        %v1638 = vsub.f32 %v1571, %v1637
        %v1639 = vand.u32 %v1638, 4294901760
        %v1640 = vsub.f32 %v1638, %v1639
        %v1641 = vand.u32 %v1640, 4294901760
        %1642 = vmatmul.mubr.f32.gmra.mxu0 %v1641
        %v1643 = vpop.f32.mrf.mxu0
        %v1644 = vadd.f32 0.0, %v1643
        %v1645 = vpop.f32.mrf.mxu0
        %1646 = vdwg.mxu0
        %1647 = vmatprep.subr.mxu0 0.0
        %1648 = vmatpush1.msra.mxu0 0.0
        %1649 = vmatprep.subr.mxu0 0.0
        %1650 = vmatpush1.msra.mxu0 0.0
        %1651 = vmatprep.subr.mxu0 0.0
        %1652 = vmatpush1.msra.mxu0 0.0
        %1653 = vmatprep.subr.mxu0 0.0
        %1654 = vmatpush1.msra.mxu0 0.0
        %1655 = vmatprep.subr.mxu0 0.0
        %1656 = vmatpush1.msra.mxu0 0.0
        %1657 = vmatprep.subr.mxu0 0.0
        %1658 = vmatpush1.msra.mxu0 0.0
        %1659 = vmatprep.subr.mxu0 0.0
        %1660 = vmatpush1.msra.mxu0 0.0
        %1661 = vmatprep.subr.mxu0 0.0
        %1662 = vmatpush1.msra.mxu0 0.0
        %1663 = vmatprep.subr.mxu0 0.0
        %1664 = vmatpush1.msra.mxu0 0.0
        %1665 = vmatprep.subr.mxu0 0.0
        %1666 = vmatpush1.msra.mxu0 0.0
        %1667 = vmatprep.subr.mxu0 0.0
        %1668 = vmatpush1.msra.mxu0 0.0
        %1669 = vmatprep.subr.mxu0 0.0
        %1670 = vmatpush1.msra.mxu0 0.0
        %1671 = vmatprep.subr.mxu0 0.0
        %1672 = vmatpush1.msra.mxu0 0.0
        %1673 = vmatprep.subr.mxu0 0.0
        %1674 = vmatpush1.msra.mxu0 0.0
        %1675 = vmatprep.subr.mxu0 0.0
        %1676 = vmatpush1.msra.mxu0 0.0
        %1677 = vmatprep.subr.mxu0 0.0
        %1678 = vmatpush1.msra.mxu0 0.0
        %1679 = vmatprep.subr.mxu0 0.0
        %1680 = vmatpush2.msra.mxu0 0.0
        %1681 = vmatprep.subr.mxu0 0.0
        %1682 = vmatpush2.msra.mxu0 0.0
        %1683 = vmatprep.subr.mxu0 0.0
        %1684 = vmatpush2.msra.mxu0 0.0
        %1685 = vmatprep.subr.mxu0 0.0
        %1686 = vmatpush2.msra.mxu0 0.0
        %1687 = vmatprep.subr.mxu0 0.0
        %1688 = vmatpush2.msra.mxu0 0.0
        %1689 = vmatprep.subr.mxu0 0.0
        %1690 = vmatpush2.msra.mxu0 0.0
        %1691 = vmatprep.subr.mxu0 0.0
        %1692 = vmatpush2.msra.mxu0 0.0
        %1693 = vmatprep.subr.mxu0 0.0
        %1694 = vmatpush2.msra.mxu0 0.0
        %1695 = vmatprep.subr.mxu0 0.0
        %1696 = vmatpush2.msra.mxu0 0.0
        %1697 = vmatprep.subr.mxu0 0.0
        %1698 = vmatpush2.msra.mxu0 0.0
        %1699 = vmatprep.subr.mxu0 0.0
        %1700 = vmatpush2.msra.mxu0 0.0
        %1701 = vmatprep.subr.mxu0 0.0
        %1702 = vmatpush2.msra.mxu0 0.0
        %1703 = vmatprep.subr.mxu0 0.0
        %1704 = vmatpush2.msra.mxu0 0.0
        %1705 = vmatprep.subr.mxu0 0.0
        %1706 = vmatpush2.msra.mxu0 0.0
        %1707 = vmatprep.subr.mxu0 0.0
        %1708 = vmatpush2.msra.mxu0 0.0
        %1709 = vmatprep.subr.mxu0 0.0
        %1710 = vmatpush2.msra.mxu0 0.0
        %1711 = vmatprep.mubr.f32.mxu0 0.0
        %v1712 = vand.u32 %v1571, 4294901760
        %1713 = vmatmul.mubr.f32.gmra.mxu0 %v1712
        %v1714 = vpop.f32.mrf.mxu0
        %v1715 = vadd.f32 %v1644, %v1714
        %v1716 = vpop.f32.mrf.mxu0
        %1717 = vdwg.mxu0
        %1718 = vmatprep.subr.mxu0 0.0
        %1719 = vmatpush1.msra.mxu0 0.0
        %1720 = vmatprep.subr.mxu0 0.0
        %1721 = vmatpush1.msra.mxu0 0.0
        %1722 = vmatprep.subr.mxu0 0.0
        %1723 = vmatpush1.msra.mxu0 0.0
        %1724 = vmatprep.subr.mxu0 0.0
        %1725 = vmatpush1.msra.mxu0 0.0
        %1726 = vmatprep.subr.mxu0 0.0
        %1727 = vmatpush1.msra.mxu0 0.0
        %1728 = vmatprep.subr.mxu0 0.0
        %1729 = vmatpush1.msra.mxu0 0.0
        %1730 = vmatprep.subr.mxu0 0.0
        %1731 = vmatpush1.msra.mxu0 0.0
        %1732 = vmatprep.subr.mxu0 0.0
        %1733 = vmatpush1.msra.mxu0 0.0
        %1734 = vmatprep.subr.mxu0 0.0
        %1735 = vmatpush1.msra.mxu0 0.0
        %1736 = vmatprep.subr.mxu0 0.0
        %1737 = vmatpush1.msra.mxu0 0.0
        %1738 = vmatprep.subr.mxu0 0.0
        %1739 = vmatpush1.msra.mxu0 0.0
        %1740 = vmatprep.subr.mxu0 0.0
        %1741 = vmatpush1.msra.mxu0 0.0
        %1742 = vmatprep.subr.mxu0 0.0
        %1743 = vmatpush1.msra.mxu0 0.0
        %1744 = vmatprep.subr.mxu0 0.0
        %1745 = vmatpush1.msra.mxu0 0.0
        %1746 = vmatprep.subr.mxu0 0.0
        %1747 = vmatpush1.msra.mxu0 0.0
        %1748 = vmatprep.subr.mxu0 0.0
        %1749 = vmatpush1.msra.mxu0 0.0
        %1750 = vmatprep.subr.mxu0 0.0
        %1751 = vmatpush2.msra.mxu0 0.0
        %1752 = vmatprep.subr.mxu0 0.0
        %1753 = vmatpush2.msra.mxu0 0.0
        %1754 = vmatprep.subr.mxu0 0.0
        %1755 = vmatpush2.msra.mxu0 0.0
        %1756 = vmatprep.subr.mxu0 0.0
        %1757 = vmatpush2.msra.mxu0 0.0
        %1758 = vmatprep.subr.mxu0 0.0
        %1759 = vmatpush2.msra.mxu0 0.0
        %1760 = vmatprep.subr.mxu0 0.0
        %1761 = vmatpush2.msra.mxu0 0.0
        %1762 = vmatprep.subr.mxu0 0.0
        %1763 = vmatpush2.msra.mxu0 0.0
        %1764 = vmatprep.subr.mxu0 0.0
        %1765 = vmatpush2.msra.mxu0 0.0
        %1766 = vmatprep.subr.mxu0 0.0
        %1767 = vmatpush2.msra.mxu0 0.0
        %1768 = vmatprep.subr.mxu0 0.0
        %1769 = vmatpush2.msra.mxu0 0.0
        %1770 = vmatprep.subr.mxu0 0.0
        %1771 = vmatpush2.msra.mxu0 0.0
        %1772 = vmatprep.subr.mxu0 0.0
        %1773 = vmatpush2.msra.mxu0 0.0
        %1774 = vmatprep.subr.mxu0 0.0
        %1775 = vmatpush2.msra.mxu0 0.0
        %1776 = vmatprep.subr.mxu0 0.0
        %1777 = vmatpush2.msra.mxu0 0.0
        %1778 = vmatprep.subr.mxu0 0.0
        %1779 = vmatpush2.msra.mxu0 0.0
        %1780 = vmatprep.subr.mxu0 0.0
        %1781 = vmatpush2.msra.mxu0 0.0
        %1782 = vmatprep.mubr.f32.mxu0 0.0
        %v1783 = vand.u32 %v1571, 4294901760
        %v1784 = vsub.f32 %v1571, %v1783
        %1785 = vmatmul.mubr.f32.gmra.mxu0 %v1784
        %v1786 = vpop.f32.mrf.mxu0
        %v1787 = vadd.f32 %v1715, %v1786
        %v1788 = vpop.f32.mrf.mxu0
        %1789 = vdwg.mxu0
        %1790 = vmatprep.subr.mxu0 0.0
        %1791 = vmatpush1.msra.mxu0 1.0
        %1792 = vmatprep.subr.mxu0 0.0
        %1793 = vmatpush1.msra.mxu0 1.0
        %1794 = vmatprep.subr.mxu0 0.0
        %1795 = vmatpush1.msra.mxu0 1.0
        %1796 = vmatprep.subr.mxu0 0.0
        %1797 = vmatpush1.msra.mxu0 1.0
        %1798 = vmatprep.subr.mxu0 0.0
        %1799 = vmatpush1.msra.mxu0 1.0
        %1800 = vmatprep.subr.mxu0 0.0
        %1801 = vmatpush1.msra.mxu0 1.0
        %1802 = vmatprep.subr.mxu0 0.0
        %1803 = vmatpush1.msra.mxu0 1.0
        %1804 = vmatprep.subr.mxu0 0.0
        %1805 = vmatpush1.msra.mxu0 1.0
        %1806 = vmatprep.subr.mxu0 0.0
        %1807 = vmatpush1.msra.mxu0 1.0
        %1808 = vmatprep.subr.mxu0 0.0
        %1809 = vmatpush1.msra.mxu0 1.0
        %1810 = vmatprep.subr.mxu0 0.0
        %1811 = vmatpush1.msra.mxu0 1.0
        %1812 = vmatprep.subr.mxu0 0.0
        %1813 = vmatpush1.msra.mxu0 1.0
        %1814 = vmatprep.subr.mxu0 0.0
        %1815 = vmatpush1.msra.mxu0 1.0
        %1816 = vmatprep.subr.mxu0 0.0
        %1817 = vmatpush1.msra.mxu0 1.0
        %1818 = vmatprep.subr.mxu0 0.0
        %1819 = vmatpush1.msra.mxu0 1.0
        %1820 = vmatprep.subr.mxu0 0.0
        %1821 = vmatpush1.msra.mxu0 1.0
        %1822 = vmatprep.subr.mxu0 0.0
        %1823 = vmatpush2.msra.mxu0 0.0
        %1824 = vmatprep.subr.mxu0 0.0
        %1825 = vmatpush2.msra.mxu0 0.0
        %1826 = vmatprep.subr.mxu0 0.0
        %1827 = vmatpush2.msra.mxu0 0.0
        %1828 = vmatprep.subr.mxu0 0.0
        %1829 = vmatpush2.msra.mxu0 0.0
        %1830 = vmatprep.subr.mxu0 0.0
        %1831 = vmatpush2.msra.mxu0 0.0
        %1832 = vmatprep.subr.mxu0 0.0
        %1833 = vmatpush2.msra.mxu0 0.0
        %1834 = vmatprep.subr.mxu0 0.0
        %1835 = vmatpush2.msra.mxu0 0.0
        %1836 = vmatprep.subr.mxu0 0.0
        %1837 = vmatpush2.msra.mxu0 0.0
        %1838 = vmatprep.subr.mxu0 0.0
        %1839 = vmatpush2.msra.mxu0 0.0
        %1840 = vmatprep.subr.mxu0 0.0
        %1841 = vmatpush2.msra.mxu0 0.0
        %1842 = vmatprep.subr.mxu0 0.0
        %1843 = vmatpush2.msra.mxu0 0.0
        %1844 = vmatprep.subr.mxu0 0.0
        %1845 = vmatpush2.msra.mxu0 0.0
        %1846 = vmatprep.subr.mxu0 0.0
        %1847 = vmatpush2.msra.mxu0 0.0
        %1848 = vmatprep.subr.mxu0 0.0
        %1849 = vmatpush2.msra.mxu0 0.0
        %1850 = vmatprep.subr.mxu0 0.0
        %1851 = vmatpush2.msra.mxu0 0.0
        %1852 = vmatprep.subr.mxu0 0.0
        %1853 = vmatpush2.msra.mxu0 0.0
        %1854 = vmatprep.mubr.f32.mxu0 0.0
        %v1855 = vand.u32 %v1571, 4294901760
        %v1856 = vsub.f32 %v1571, %v1855
        %v1857 = vand.u32 %v1856, 4294901760
        %1858 = vmatmul.mubr.f32.gmra.mxu0 %v1857
        %v1859 = vpop.f32.mrf.mxu0
        %v1860 = vadd.f32 %v1787, %v1859
        %v1861 = vpop.f32.mrf.mxu0
        %1862 = vdwg.mxu0
        %1863 = vmatprep.subr.mxu0 0.0
        %1864 = vmatpush1.msra.mxu0 0.0
        %1865 = vmatprep.subr.mxu0 0.0
        %1866 = vmatpush1.msra.mxu0 0.0
        %1867 = vmatprep.subr.mxu0 0.0
        %1868 = vmatpush1.msra.mxu0 0.0
        %1869 = vmatprep.subr.mxu0 0.0
        %1870 = vmatpush1.msra.mxu0 0.0
        %1871 = vmatprep.subr.mxu0 0.0
        %1872 = vmatpush1.msra.mxu0 0.0
        %1873 = vmatprep.subr.mxu0 0.0
        %1874 = vmatpush1.msra.mxu0 0.0
        %1875 = vmatprep.subr.mxu0 0.0
        %1876 = vmatpush1.msra.mxu0 0.0
        %1877 = vmatprep.subr.mxu0 0.0
        %1878 = vmatpush1.msra.mxu0 0.0
        %1879 = vmatprep.subr.mxu0 0.0
        %1880 = vmatpush1.msra.mxu0 0.0
        %1881 = vmatprep.subr.mxu0 0.0
        %1882 = vmatpush1.msra.mxu0 0.0
        %1883 = vmatprep.subr.mxu0 0.0
        %1884 = vmatpush1.msra.mxu0 0.0
        %1885 = vmatprep.subr.mxu0 0.0
        %1886 = vmatpush1.msra.mxu0 0.0
        %1887 = vmatprep.subr.mxu0 0.0
        %1888 = vmatpush1.msra.mxu0 0.0
        %1889 = vmatprep.subr.mxu0 0.0
        %1890 = vmatpush1.msra.mxu0 0.0
        %1891 = vmatprep.subr.mxu0 0.0
        %1892 = vmatpush1.msra.mxu0 0.0
        %1893 = vmatprep.subr.mxu0 0.0
        %1894 = vmatpush1.msra.mxu0 0.0
        %1895 = vmatprep.subr.mxu0 0.0
        %1896 = vmatpush2.msra.mxu0 0.0
        %1897 = vmatprep.subr.mxu0 0.0
        %1898 = vmatpush2.msra.mxu0 0.0
        %1899 = vmatprep.subr.mxu0 0.0
        %1900 = vmatpush2.msra.mxu0 0.0
        %1901 = vmatprep.subr.mxu0 0.0
        %1902 = vmatpush2.msra.mxu0 0.0
        %1903 = vmatprep.subr.mxu0 0.0
        %1904 = vmatpush2.msra.mxu0 0.0
        %1905 = vmatprep.subr.mxu0 0.0
        %1906 = vmatpush2.msra.mxu0 0.0
        %1907 = vmatprep.subr.mxu0 0.0
        %1908 = vmatpush2.msra.mxu0 0.0
        %1909 = vmatprep.subr.mxu0 0.0
        %1910 = vmatpush2.msra.mxu0 0.0
        %1911 = vmatprep.subr.mxu0 0.0
        %1912 = vmatpush2.msra.mxu0 0.0
        %1913 = vmatprep.subr.mxu0 0.0
        %1914 = vmatpush2.msra.mxu0 0.0
        %1915 = vmatprep.subr.mxu0 0.0
        %1916 = vmatpush2.msra.mxu0 0.0
        %1917 = vmatprep.subr.mxu0 0.0
        %1918 = vmatpush2.msra.mxu0 0.0
        %1919 = vmatprep.subr.mxu0 0.0
        %1920 = vmatpush2.msra.mxu0 0.0
        %1921 = vmatprep.subr.mxu0 0.0
        %1922 = vmatpush2.msra.mxu0 0.0
        %1923 = vmatprep.subr.mxu0 0.0
        %1924 = vmatpush2.msra.mxu0 0.0
        %1925 = vmatprep.subr.mxu0 0.0
        %1926 = vmatpush2.msra.mxu0 0.0
        %1927 = vmatprep.mubr.f32.mxu0 0.0
        %v1928 = vand.u32 %v1571, 4294901760
        %1929 = vmatmul.mubr.f32.gmra.mxu0 %v1928
        %v1930 = vpop.f32.mrf.mxu0
        %v1931 = vadd.f32 %v1860, %v1930
        %v1932 = vpop.f32.mrf.mxu0
        %1933 = vdwg.mxu0
        %1934 = vmatprep.subr.mxu0 0.0
        %1935 = vmatpush1.msra.mxu0 1.0
        %1936 = vmatprep.subr.mxu0 0.0
        %1937 = vmatpush1.msra.mxu0 1.0
        %1938 = vmatprep.subr.mxu0 0.0
        %1939 = vmatpush1.msra.mxu0 1.0
        %1940 = vmatprep.subr.mxu0 0.0
        %1941 = vmatpush1.msra.mxu0 1.0
        %1942 = vmatprep.subr.mxu0 0.0
        %1943 = vmatpush1.msra.mxu0 1.0
        %1944 = vmatprep.subr.mxu0 0.0
        %1945 = vmatpush1.msra.mxu0 1.0
        %1946 = vmatprep.subr.mxu0 0.0
        %1947 = vmatpush1.msra.mxu0 1.0
        %1948 = vmatprep.subr.mxu0 0.0
        %1949 = vmatpush1.msra.mxu0 1.0
        %1950 = vmatprep.subr.mxu0 0.0
        %1951 = vmatpush1.msra.mxu0 1.0
        %1952 = vmatprep.subr.mxu0 0.0
        %1953 = vmatpush1.msra.mxu0 1.0
        %1954 = vmatprep.subr.mxu0 0.0
        %1955 = vmatpush1.msra.mxu0 1.0
        %1956 = vmatprep.subr.mxu0 0.0
        %1957 = vmatpush1.msra.mxu0 1.0
        %1958 = vmatprep.subr.mxu0 0.0
        %1959 = vmatpush1.msra.mxu0 1.0
        %1960 = vmatprep.subr.mxu0 0.0
        %1961 = vmatpush1.msra.mxu0 1.0
        %1962 = vmatprep.subr.mxu0 0.0
        %1963 = vmatpush1.msra.mxu0 1.0
        %1964 = vmatprep.subr.mxu0 0.0
        %1965 = vmatpush1.msra.mxu0 1.0
        %1966 = vmatprep.subr.mxu0 0.0
        %1967 = vmatpush2.msra.mxu0 0.0
        %1968 = vmatprep.subr.mxu0 0.0
        %1969 = vmatpush2.msra.mxu0 0.0
        %1970 = vmatprep.subr.mxu0 0.0
        %1971 = vmatpush2.msra.mxu0 0.0
        %1972 = vmatprep.subr.mxu0 0.0
        %1973 = vmatpush2.msra.mxu0 0.0
        %1974 = vmatprep.subr.mxu0 0.0
        %1975 = vmatpush2.msra.mxu0 0.0
        %1976 = vmatprep.subr.mxu0 0.0
        %1977 = vmatpush2.msra.mxu0 0.0
        %1978 = vmatprep.subr.mxu0 0.0
        %1979 = vmatpush2.msra.mxu0 0.0
        %1980 = vmatprep.subr.mxu0 0.0
        %1981 = vmatpush2.msra.mxu0 0.0
        %1982 = vmatprep.subr.mxu0 0.0
        %1983 = vmatpush2.msra.mxu0 0.0
        %1984 = vmatprep.subr.mxu0 0.0
        %1985 = vmatpush2.msra.mxu0 0.0
        %1986 = vmatprep.subr.mxu0 0.0
        %1987 = vmatpush2.msra.mxu0 0.0
        %1988 = vmatprep.subr.mxu0 0.0
        %1989 = vmatpush2.msra.mxu0 0.0
        %1990 = vmatprep.subr.mxu0 0.0
        %1991 = vmatpush2.msra.mxu0 0.0
        %1992 = vmatprep.subr.mxu0 0.0
        %1993 = vmatpush2.msra.mxu0 0.0
        %1994 = vmatprep.subr.mxu0 0.0
        %1995 = vmatpush2.msra.mxu0 0.0
        %1996 = vmatprep.subr.mxu0 0.0
        %1997 = vmatpush2.msra.mxu0 0.0
        %1998 = vmatprep.mubr.f32.mxu0 0.0
        %v1999 = vand.u32 %v1571, 4294901760
        %2000 = vmatmul.mubr.f32.gmra.mxu0 %v1999
        %v2001 = vpop.f32.mrf.mxu0
        %v2002 = vadd.f32 %v1931, %v2001
        %v2003 = vpop.f32.mrf.mxu0
        %2004 = vdwg.mxu0
        %v2005 = vrsqrt.pop %v2002
        %v2006 = vmin.f32 %v2005, 10000000.0
        %v2007 = vmul.f32 %v258, %v1570
        %2008 = vmatprep.subr.mxu0 0.0
        %2009 = vmatpush1.msra.mxu0 1.0
        %2010 = vmatprep.subr.mxu0 0.0
        %2011 = vmatpush1.msra.mxu0 1.0
        %2012 = vmatprep.subr.mxu0 0.0
        %2013 = vmatpush1.msra.mxu0 1.0
        %2014 = vmatprep.subr.mxu0 0.0
        %2015 = vmatpush1.msra.mxu0 1.0
        %2016 = vmatprep.subr.mxu0 0.0
        %2017 = vmatpush1.msra.mxu0 1.0
        %2018 = vmatprep.subr.mxu0 0.0
        %2019 = vmatpush1.msra.mxu0 1.0
        %2020 = vmatprep.subr.mxu0 0.0
        %2021 = vmatpush1.msra.mxu0 1.0
        %2022 = vmatprep.subr.mxu0 0.0
        %2023 = vmatpush1.msra.mxu0 1.0
        %2024 = vmatprep.subr.mxu0 0.0
        %2025 = vmatpush1.msra.mxu0 1.0
        %2026 = vmatprep.subr.mxu0 0.0
        %2027 = vmatpush1.msra.mxu0 1.0
        %2028 = vmatprep.subr.mxu0 0.0
        %2029 = vmatpush1.msra.mxu0 1.0
        %2030 = vmatprep.subr.mxu0 0.0
        %2031 = vmatpush1.msra.mxu0 1.0
        %2032 = vmatprep.subr.mxu0 0.0
        %2033 = vmatpush1.msra.mxu0 1.0
        %2034 = vmatprep.subr.mxu0 0.0
        %2035 = vmatpush1.msra.mxu0 1.0
        %2036 = vmatprep.subr.mxu0 0.0
        %2037 = vmatpush1.msra.mxu0 1.0
        %2038 = vmatprep.subr.mxu0 0.0
        %2039 = vmatpush1.msra.mxu0 1.0
        %2040 = vmatprep.subr.mxu0 0.0
        %2041 = vmatpush2.msra.mxu0 0.0
        %2042 = vmatprep.subr.mxu0 0.0
        %2043 = vmatpush2.msra.mxu0 0.0
        %2044 = vmatprep.subr.mxu0 0.0
        %2045 = vmatpush2.msra.mxu0 0.0
        %2046 = vmatprep.subr.mxu0 0.0
        %2047 = vmatpush2.msra.mxu0 0.0
        %2048 = vmatprep.subr.mxu0 0.0
        %2049 = vmatpush2.msra.mxu0 0.0
        %2050 = vmatprep.subr.mxu0 0.0
        %2051 = vmatpush2.msra.mxu0 0.0
        %2052 = vmatprep.subr.mxu0 0.0
        %2053 = vmatpush2.msra.mxu0 0.0
        %2054 = vmatprep.subr.mxu0 0.0
        %2055 = vmatpush2.msra.mxu0 0.0
        %2056 = vmatprep.subr.mxu0 0.0
        %2057 = vmatpush2.msra.mxu0 0.0
        %2058 = vmatprep.subr.mxu0 0.0
        %2059 = vmatpush2.msra.mxu0 0.0
        %2060 = vmatprep.subr.mxu0 0.0
        %2061 = vmatpush2.msra.mxu0 0.0
        %2062 = vmatprep.subr.mxu0 0.0
        %2063 = vmatpush2.msra.mxu0 0.0
        %2064 = vmatprep.subr.mxu0 0.0
        %2065 = vmatpush2.msra.mxu0 0.0
        %2066 = vmatprep.subr.mxu0 0.0
        %2067 = vmatpush2.msra.mxu0 0.0
        %2068 = vmatprep.subr.mxu0 0.0
        %2069 = vmatpush2.msra.mxu0 0.0
        %2070 = vmatprep.subr.mxu0 0.0
        %2071 = vmatpush2.msra.mxu0 0.0
        %2072 = vmatprep.mubr.f32.mxu0 0.0
        %v2073 = vand.u32 %v2007, 4294901760
        %v2074 = vsub.f32 %v2007, %v2073
        %v2075 = vand.u32 %v2074, 4294901760
        %v2076 = vsub.f32 %v2074, %v2075
        %v2077 = vand.u32 %v2076, 4294901760
        %2078 = vmatmul.mubr.f32.gmra.mxu0 %v2077
        %v2079 = vpop.f32.mrf.mxu0
        %v2080 = vadd.f32 0.0, %v2079
        %v2081 = vpop.f32.mrf.mxu0
        %2082 = vdwg.mxu0
        %2083 = vmatprep.subr.mxu0 0.0
        %2084 = vmatpush1.msra.mxu0 0.0
        %2085 = vmatprep.subr.mxu0 0.0
        %2086 = vmatpush1.msra.mxu0 0.0
        %2087 = vmatprep.subr.mxu0 0.0
        %2088 = vmatpush1.msra.mxu0 0.0
        %2089 = vmatprep.subr.mxu0 0.0
        %2090 = vmatpush1.msra.mxu0 0.0
        %2091 = vmatprep.subr.mxu0 0.0
        %2092 = vmatpush1.msra.mxu0 0.0
        %2093 = vmatprep.subr.mxu0 0.0
        %2094 = vmatpush1.msra.mxu0 0.0
        %2095 = vmatprep.subr.mxu0 0.0
        %2096 = vmatpush1.msra.mxu0 0.0
        %2097 = vmatprep.subr.mxu0 0.0
        %2098 = vmatpush1.msra.mxu0 0.0
        %2099 = vmatprep.subr.mxu0 0.0
        %2100 = vmatpush1.msra.mxu0 0.0
        %2101 = vmatprep.subr.mxu0 0.0
        %2102 = vmatpush1.msra.mxu0 0.0
        %2103 = vmatprep.subr.mxu0 0.0
        %2104 = vmatpush1.msra.mxu0 0.0
        %2105 = vmatprep.subr.mxu0 0.0
        %2106 = vmatpush1.msra.mxu0 0.0
        %2107 = vmatprep.subr.mxu0 0.0
        %2108 = vmatpush1.msra.mxu0 0.0
        %2109 = vmatprep.subr.mxu0 0.0
        %2110 = vmatpush1.msra.mxu0 0.0
        %2111 = vmatprep.subr.mxu0 0.0
        %2112 = vmatpush1.msra.mxu0 0.0
        %2113 = vmatprep.subr.mxu0 0.0
        %2114 = vmatpush1.msra.mxu0 0.0
        %2115 = vmatprep.subr.mxu0 0.0
        %2116 = vmatpush2.msra.mxu0 0.0
        %2117 = vmatprep.subr.mxu0 0.0
        %2118 = vmatpush2.msra.mxu0 0.0
        %2119 = vmatprep.subr.mxu0 0.0
        %2120 = vmatpush2.msra.mxu0 0.0
        %2121 = vmatprep.subr.mxu0 0.0
        %2122 = vmatpush2.msra.mxu0 0.0
        %2123 = vmatprep.subr.mxu0 0.0
        %2124 = vmatpush2.msra.mxu0 0.0
        %2125 = vmatprep.subr.mxu0 0.0
        %2126 = vmatpush2.msra.mxu0 0.0
        %2127 = vmatprep.subr.mxu0 0.0
        %2128 = vmatpush2.msra.mxu0 0.0
        %2129 = vmatprep.subr.mxu0 0.0
        %2130 = vmatpush2.msra.mxu0 0.0
        %2131 = vmatprep.subr.mxu0 0.0
        %2132 = vmatpush2.msra.mxu0 0.0
        %2133 = vmatprep.subr.mxu0 0.0
        %2134 = vmatpush2.msra.mxu0 0.0
        %2135 = vmatprep.subr.mxu0 0.0
        %2136 = vmatpush2.msra.mxu0 0.0
        %2137 = vmatprep.subr.mxu0 0.0
        %2138 = vmatpush2.msra.mxu0 0.0
        %2139 = vmatprep.subr.mxu0 0.0
        %2140 = vmatpush2.msra.mxu0 0.0
        %2141 = vmatprep.subr.mxu0 0.0
        %2142 = vmatpush2.msra.mxu0 0.0
        %2143 = vmatprep.subr.mxu0 0.0
        %2144 = vmatpush2.msra.mxu0 0.0
        %2145 = vmatprep.subr.mxu0 0.0
        %2146 = vmatpush2.msra.mxu0 0.0
        %2147 = vmatprep.mubr.f32.mxu0 0.0
        %v2148 = vand.u32 %v2007, 4294901760
        %2149 = vmatmul.mubr.f32.gmra.mxu0 %v2148
        %v2150 = vpop.f32.mrf.mxu0
        %v2151 = vadd.f32 %v2080, %v2150
        %v2152 = vpop.f32.mrf.mxu0
        %2153 = vdwg.mxu0
        %2154 = vmatprep.subr.mxu0 0.0
        %2155 = vmatpush1.msra.mxu0 0.0
        %2156 = vmatprep.subr.mxu0 0.0
        %2157 = vmatpush1.msra.mxu0 0.0
        %2158 = vmatprep.subr.mxu0 0.0
        %2159 = vmatpush1.msra.mxu0 0.0
        %2160 = vmatprep.subr.mxu0 0.0
        %2161 = vmatpush1.msra.mxu0 0.0
        %2162 = vmatprep.subr.mxu0 0.0
        %2163 = vmatpush1.msra.mxu0 0.0
        %2164 = vmatprep.subr.mxu0 0.0
        %2165 = vmatpush1.msra.mxu0 0.0
        %2166 = vmatprep.subr.mxu0 0.0
        %2167 = vmatpush1.msra.mxu0 0.0
        %2168 = vmatprep.subr.mxu0 0.0
        %2169 = vmatpush1.msra.mxu0 0.0
        %2170 = vmatprep.subr.mxu0 0.0
        %2171 = vmatpush1.msra.mxu0 0.0
        %2172 = vmatprep.subr.mxu0 0.0
        %2173 = vmatpush1.msra.mxu0 0.0
        %2174 = vmatprep.subr.mxu0 0.0
        %2175 = vmatpush1.msra.mxu0 0.0
        %2176 = vmatprep.subr.mxu0 0.0
        %2177 = vmatpush1.msra.mxu0 0.0
        %2178 = vmatprep.subr.mxu0 0.0
        %2179 = vmatpush1.msra.mxu0 0.0
        %2180 = vmatprep.subr.mxu0 0.0
        %2181 = vmatpush1.msra.mxu0 0.0
        %2182 = vmatprep.subr.mxu0 0.0
        %2183 = vmatpush1.msra.mxu0 0.0
        %2184 = vmatprep.subr.mxu0 0.0
        %2185 = vmatpush1.msra.mxu0 0.0
        %2186 = vmatprep.subr.mxu0 0.0
        %2187 = vmatpush2.msra.mxu0 0.0
        %2188 = vmatprep.subr.mxu0 0.0
        %2189 = vmatpush2.msra.mxu0 0.0
        %2190 = vmatprep.subr.mxu0 0.0
        %2191 = vmatpush2.msra.mxu0 0.0
        %2192 = vmatprep.subr.mxu0 0.0
        %2193 = vmatpush2.msra.mxu0 0.0
        %2194 = vmatprep.subr.mxu0 0.0
        %2195 = vmatpush2.msra.mxu0 0.0
        %2196 = vmatprep.subr.mxu0 0.0
        %2197 = vmatpush2.msra.mxu0 0.0
        %2198 = vmatprep.subr.mxu0 0.0
        %2199 = vmatpush2.msra.mxu0 0.0
        %2200 = vmatprep.subr.mxu0 0.0
        %2201 = vmatpush2.msra.mxu0 0.0
        %2202 = vmatprep.subr.mxu0 0.0
        %2203 = vmatpush2.msra.mxu0 0.0
        %2204 = vmatprep.subr.mxu0 0.0
        %2205 = vmatpush2.msra.mxu0 0.0
        %2206 = vmatprep.subr.mxu0 0.0
        %2207 = vmatpush2.msra.mxu0 0.0
        %2208 = vmatprep.subr.mxu0 0.0
        %2209 = vmatpush2.msra.mxu0 0.0
        %2210 = vmatprep.subr.mxu0 0.0
        %2211 = vmatpush2.msra.mxu0 0.0
        %2212 = vmatprep.subr.mxu0 0.0
        %2213 = vmatpush2.msra.mxu0 0.0
        %2214 = vmatprep.subr.mxu0 0.0
        %2215 = vmatpush2.msra.mxu0 0.0
        %2216 = vmatprep.subr.mxu0 0.0
        %2217 = vmatpush2.msra.mxu0 0.0
        %2218 = vmatprep.mubr.f32.mxu0 0.0
        %v2219 = vand.u32 %v2007, 4294901760
        %v2220 = vsub.f32 %v2007, %v2219
        %2221 = vmatmul.mubr.f32.gmra.mxu0 %v2220
        %v2222 = vpop.f32.mrf.mxu0
        %v2223 = vadd.f32 %v2151, %v2222
        %v2224 = vpop.f32.mrf.mxu0
        %2225 = vdwg.mxu0
        %2226 = vmatprep.subr.mxu0 0.0
        %2227 = vmatpush1.msra.mxu0 1.0
        %2228 = vmatprep.subr.mxu0 0.0
        %2229 = vmatpush1.msra.mxu0 1.0
        %2230 = vmatprep.subr.mxu0 0.0
        %2231 = vmatpush1.msra.mxu0 1.0
        %2232 = vmatprep.subr.mxu0 0.0
        %2233 = vmatpush1.msra.mxu0 1.0
        %2234 = vmatprep.subr.mxu0 0.0
        %2235 = vmatpush1.msra.mxu0 1.0
        %2236 = vmatprep.subr.mxu0 0.0
        %2237 = vmatpush1.msra.mxu0 1.0
        %2238 = vmatprep.subr.mxu0 0.0
        %2239 = vmatpush1.msra.mxu0 1.0
        %2240 = vmatprep.subr.mxu0 0.0
        %2241 = vmatpush1.msra.mxu0 1.0
        %2242 = vmatprep.subr.mxu0 0.0
        %2243 = vmatpush1.msra.mxu0 1.0
        %2244 = vmatprep.subr.mxu0 0.0
        %2245 = vmatpush1.msra.mxu0 1.0
        %2246 = vmatprep.subr.mxu0 0.0
        %2247 = vmatpush1.msra.mxu0 1.0
        %2248 = vmatprep.subr.mxu0 0.0
        %2249 = vmatpush1.msra.mxu0 1.0
        %2250 = vmatprep.subr.mxu0 0.0
        %2251 = vmatpush1.msra.mxu0 1.0
        %2252 = vmatprep.subr.mxu0 0.0
        %2253 = vmatpush1.msra.mxu0 1.0
        %2254 = vmatprep.subr.mxu0 0.0
        %2255 = vmatpush1.msra.mxu0 1.0
        %2256 = vmatprep.subr.mxu0 0.0
        %2257 = vmatpush1.msra.mxu0 1.0
        %2258 = vmatprep.subr.mxu0 0.0
        %2259 = vmatpush2.msra.mxu0 0.0
        %2260 = vmatprep.subr.mxu0 0.0
        %2261 = vmatpush2.msra.mxu0 0.0
        %2262 = vmatprep.subr.mxu0 0.0
        %2263 = vmatpush2.msra.mxu0 0.0
        %2264 = vmatprep.subr.mxu0 0.0
        %2265 = vmatpush2.msra.mxu0 0.0
        %2266 = vmatprep.subr.mxu0 0.0
        %2267 = vmatpush2.msra.mxu0 0.0
        %2268 = vmatprep.subr.mxu0 0.0
        %2269 = vmatpush2.msra.mxu0 0.0
        %2270 = vmatprep.subr.mxu0 0.0
        %2271 = vmatpush2.msra.mxu0 0.0
        %2272 = vmatprep.subr.mxu0 0.0
        %2273 = vmatpush2.msra.mxu0 0.0
        %2274 = vmatprep.subr.mxu0 0.0
        %2275 = vmatpush2.msra.mxu0 0.0
        %2276 = vmatprep.subr.mxu0 0.0
        %2277 = vmatpush2.msra.mxu0 0.0
        %2278 = vmatprep.subr.mxu0 0.0
        %2279 = vmatpush2.msra.mxu0 0.0
        %2280 = vmatprep.subr.mxu0 0.0
        %2281 = vmatpush2.msra.mxu0 0.0
        %2282 = vmatprep.subr.mxu0 0.0
        %2283 = vmatpush2.msra.mxu0 0.0
        %2284 = vmatprep.subr.mxu0 0.0
        %2285 = vmatpush2.msra.mxu0 0.0
        %2286 = vmatprep.subr.mxu0 0.0
        %2287 = vmatpush2.msra.mxu0 0.0
        %2288 = vmatprep.subr.mxu0 0.0
        %2289 = vmatpush2.msra.mxu0 0.0
        %2290 = vmatprep.mubr.f32.mxu0 0.0
        %v2291 = vand.u32 %v2007, 4294901760
        %v2292 = vsub.f32 %v2007, %v2291
        %v2293 = vand.u32 %v2292, 4294901760
        %2294 = vmatmul.mubr.f32.gmra.mxu0 %v2293
        %v2295 = vpop.f32.mrf.mxu0
        %v2296 = vadd.f32 %v2223, %v2295
        %v2297 = vpop.f32.mrf.mxu0
        %2298 = vdwg.mxu0
        %2299 = vmatprep.subr.mxu0 0.0
        %2300 = vmatpush1.msra.mxu0 0.0
        %2301 = vmatprep.subr.mxu0 0.0
        %2302 = vmatpush1.msra.mxu0 0.0
        %2303 = vmatprep.subr.mxu0 0.0
        %2304 = vmatpush1.msra.mxu0 0.0
        %2305 = vmatprep.subr.mxu0 0.0
        %2306 = vmatpush1.msra.mxu0 0.0
        %2307 = vmatprep.subr.mxu0 0.0
        %2308 = vmatpush1.msra.mxu0 0.0
        %2309 = vmatprep.subr.mxu0 0.0
        %2310 = vmatpush1.msra.mxu0 0.0
        %2311 = vmatprep.subr.mxu0 0.0
        %2312 = vmatpush1.msra.mxu0 0.0
        %2313 = vmatprep.subr.mxu0 0.0
        %2314 = vmatpush1.msra.mxu0 0.0
        %2315 = vmatprep.subr.mxu0 0.0
        %2316 = vmatpush1.msra.mxu0 0.0
        %2317 = vmatprep.subr.mxu0 0.0
        %2318 = vmatpush1.msra.mxu0 0.0
        %2319 = vmatprep.subr.mxu0 0.0
        %2320 = vmatpush1.msra.mxu0 0.0
        %2321 = vmatprep.subr.mxu0 0.0
        %2322 = vmatpush1.msra.mxu0 0.0
        %2323 = vmatprep.subr.mxu0 0.0
        %2324 = vmatpush1.msra.mxu0 0.0
        %2325 = vmatprep.subr.mxu0 0.0
        %2326 = vmatpush1.msra.mxu0 0.0
        %2327 = vmatprep.subr.mxu0 0.0
        %2328 = vmatpush1.msra.mxu0 0.0
        %2329 = vmatprep.subr.mxu0 0.0
        %2330 = vmatpush1.msra.mxu0 0.0
        %2331 = vmatprep.subr.mxu0 0.0
        %2332 = vmatpush2.msra.mxu0 0.0
        %2333 = vmatprep.subr.mxu0 0.0
        %2334 = vmatpush2.msra.mxu0 0.0
        %2335 = vmatprep.subr.mxu0 0.0
        %2336 = vmatpush2.msra.mxu0 0.0
        %2337 = vmatprep.subr.mxu0 0.0
        %2338 = vmatpush2.msra.mxu0 0.0
        %2339 = vmatprep.subr.mxu0 0.0
        %2340 = vmatpush2.msra.mxu0 0.0
        %2341 = vmatprep.subr.mxu0 0.0
        %2342 = vmatpush2.msra.mxu0 0.0
        %2343 = vmatprep.subr.mxu0 0.0
        %2344 = vmatpush2.msra.mxu0 0.0
        %2345 = vmatprep.subr.mxu0 0.0
        %2346 = vmatpush2.msra.mxu0 0.0
        %2347 = vmatprep.subr.mxu0 0.0
        %2348 = vmatpush2.msra.mxu0 0.0
        %2349 = vmatprep.subr.mxu0 0.0
        %2350 = vmatpush2.msra.mxu0 0.0
        %2351 = vmatprep.subr.mxu0 0.0
        %2352 = vmatpush2.msra.mxu0 0.0
        %2353 = vmatprep.subr.mxu0 0.0
        %2354 = vmatpush2.msra.mxu0 0.0
        %2355 = vmatprep.subr.mxu0 0.0
        %2356 = vmatpush2.msra.mxu0 0.0
        %2357 = vmatprep.subr.mxu0 0.0
        %2358 = vmatpush2.msra.mxu0 0.0
        %2359 = vmatprep.subr.mxu0 0.0
        %2360 = vmatpush2.msra.mxu0 0.0
        %2361 = vmatprep.subr.mxu0 0.0
        %2362 = vmatpush2.msra.mxu0 0.0
        %2363 = vmatprep.mubr.f32.mxu0 0.0
        %v2364 = vand.u32 %v2007, 4294901760
        %2365 = vmatmul.mubr.f32.gmra.mxu0 %v2364
        %v2366 = vpop.f32.mrf.mxu0
        %v2367 = vadd.f32 %v2296, %v2366
        %v2368 = vpop.f32.mrf.mxu0
        %2369 = vdwg.mxu0
        %2370 = vmatprep.subr.mxu0 0.0
        %2371 = vmatpush1.msra.mxu0 1.0
        %2372 = vmatprep.subr.mxu0 0.0
        %2373 = vmatpush1.msra.mxu0 1.0
        %2374 = vmatprep.subr.mxu0 0.0
        %2375 = vmatpush1.msra.mxu0 1.0
        %2376 = vmatprep.subr.mxu0 0.0
        %2377 = vmatpush1.msra.mxu0 1.0
        %2378 = vmatprep.subr.mxu0 0.0
        %2379 = vmatpush1.msra.mxu0 1.0
        %2380 = vmatprep.subr.mxu0 0.0
        %2381 = vmatpush1.msra.mxu0 1.0
        %2382 = vmatprep.subr.mxu0 0.0
        %2383 = vmatpush1.msra.mxu0 1.0
        %2384 = vmatprep.subr.mxu0 0.0
        %2385 = vmatpush1.msra.mxu0 1.0
        %2386 = vmatprep.subr.mxu0 0.0
        %2387 = vmatpush1.msra.mxu0 1.0
        %2388 = vmatprep.subr.mxu0 0.0
        %2389 = vmatpush1.msra.mxu0 1.0
        %2390 = vmatprep.subr.mxu0 0.0
        %2391 = vmatpush1.msra.mxu0 1.0
        %2392 = vmatprep.subr.mxu0 0.0
        %2393 = vmatpush1.msra.mxu0 1.0
        %2394 = vmatprep.subr.mxu0 0.0
        %2395 = vmatpush1.msra.mxu0 1.0
        %2396 = vmatprep.subr.mxu0 0.0
        %2397 = vmatpush1.msra.mxu0 1.0
        %2398 = vmatprep.subr.mxu0 0.0
        %2399 = vmatpush1.msra.mxu0 1.0
        %2400 = vmatprep.subr.mxu0 0.0
        %2401 = vmatpush1.msra.mxu0 1.0
        %2402 = vmatprep.subr.mxu0 0.0
        %2403 = vmatpush2.msra.mxu0 0.0
        %2404 = vmatprep.subr.mxu0 0.0
        %2405 = vmatpush2.msra.mxu0 0.0
        %2406 = vmatprep.subr.mxu0 0.0
        %2407 = vmatpush2.msra.mxu0 0.0
        %2408 = vmatprep.subr.mxu0 0.0
        %2409 = vmatpush2.msra.mxu0 0.0
        %2410 = vmatprep.subr.mxu0 0.0
        %2411 = vmatpush2.msra.mxu0 0.0
        %2412 = vmatprep.subr.mxu0 0.0
        %2413 = vmatpush2.msra.mxu0 0.0
        %2414 = vmatprep.subr.mxu0 0.0
        %2415 = vmatpush2.msra.mxu0 0.0
        %2416 = vmatprep.subr.mxu0 0.0
        %2417 = vmatpush2.msra.mxu0 0.0
        %2418 = vmatprep.subr.mxu0 0.0
        %2419 = vmatpush2.msra.mxu0 0.0
        %2420 = vmatprep.subr.mxu0 0.0
        %2421 = vmatpush2.msra.mxu0 0.0
        %2422 = vmatprep.subr.mxu0 0.0
        %2423 = vmatpush2.msra.mxu0 0.0
        %2424 = vmatprep.subr.mxu0 0.0
        %2425 = vmatpush2.msra.mxu0 0.0
        %2426 = vmatprep.subr.mxu0 0.0
        %2427 = vmatpush2.msra.mxu0 0.0
        %2428 = vmatprep.subr.mxu0 0.0
        %2429 = vmatpush2.msra.mxu0 0.0
        %2430 = vmatprep.subr.mxu0 0.0
        %2431 = vmatpush2.msra.mxu0 0.0
        %2432 = vmatprep.subr.mxu0 0.0
        %2433 = vmatpush2.msra.mxu0 0.0
        %2434 = vmatprep.mubr.f32.mxu0 0.0
        %v2435 = vand.u32 %v2007, 4294901760
        %2436 = vmatmul.mubr.f32.gmra.mxu0 %v2435
        %v2437 = vpop.f32.mrf.mxu0
        %v2438 = vadd.f32 %v2367, %v2437
        %v2439 = vpop.f32.mrf.mxu0
        %2440 = vdwg.mxu0
        %v2441 = vmul.f32 %v695, %v2006
        %v2442 = vmul.f32 %v2438, %v2441
        %v2443 = vmul.f32 %v2442, 1.442695
        %v2444 = vpow.pop %v2443
        %v2445 = vadd.f32 %v1569, %v2444
        %v2446 = vld [vmem:[%s222 + $0x8] sm:$0xff]
        %v2447 = vmul.f32 %v2446, %v2446
        %2448 = vmatprep.subr.mxu0 0.0
        %2449 = vmatpush1.msra.mxu0 1.0
        %2450 = vmatprep.subr.mxu0 0.0
        %2451 = vmatpush1.msra.mxu0 1.0
        %2452 = vmatprep.subr.mxu0 0.0
        %2453 = vmatpush1.msra.mxu0 1.0
        %2454 = vmatprep.subr.mxu0 0.0
        %2455 = vmatpush1.msra.mxu0 1.0
        %2456 = vmatprep.subr.mxu0 0.0
        %2457 = vmatpush1.msra.mxu0 1.0
        %2458 = vmatprep.subr.mxu0 0.0
        %2459 = vmatpush1.msra.mxu0 1.0
        %2460 = vmatprep.subr.mxu0 0.0
        %2461 = vmatpush1.msra.mxu0 1.0
        %2462 = vmatprep.subr.mxu0 0.0
        %2463 = vmatpush1.msra.mxu0 1.0
        %2464 = vmatprep.subr.mxu0 0.0
        %2465 = vmatpush1.msra.mxu0 1.0
        %2466 = vmatprep.subr.mxu0 0.0
        %2467 = vmatpush1.msra.mxu0 1.0
        %2468 = vmatprep.subr.mxu0 0.0
        %2469 = vmatpush1.msra.mxu0 1.0
        %2470 = vmatprep.subr.mxu0 0.0
        %2471 = vmatpush1.msra.mxu0 1.0
        %2472 = vmatprep.subr.mxu0 0.0
        %2473 = vmatpush1.msra.mxu0 1.0
        %2474 = vmatprep.subr.mxu0 0.0
        %2475 = vmatpush1.msra.mxu0 1.0
        %2476 = vmatprep.subr.mxu0 0.0
        %2477 = vmatpush1.msra.mxu0 1.0
        %2478 = vmatprep.subr.mxu0 0.0
        %2479 = vmatpush1.msra.mxu0 1.0
        %2480 = vmatprep.subr.mxu0 0.0
        %2481 = vmatpush2.msra.mxu0 0.0
        %2482 = vmatprep.subr.mxu0 0.0
        %2483 = vmatpush2.msra.mxu0 0.0
        %2484 = vmatprep.subr.mxu0 0.0
        %2485 = vmatpush2.msra.mxu0 0.0
        %2486 = vmatprep.subr.mxu0 0.0
        %2487 = vmatpush2.msra.mxu0 0.0
        %2488 = vmatprep.subr.mxu0 0.0
        %2489 = vmatpush2.msra.mxu0 0.0
        %2490 = vmatprep.subr.mxu0 0.0
        %2491 = vmatpush2.msra.mxu0 0.0
        %2492 = vmatprep.subr.mxu0 0.0
        %2493 = vmatpush2.msra.mxu0 0.0
        %2494 = vmatprep.subr.mxu0 0.0
        %2495 = vmatpush2.msra.mxu0 0.0
        %2496 = vmatprep.subr.mxu0 0.0
        %2497 = vmatpush2.msra.mxu0 0.0
        %2498 = vmatprep.subr.mxu0 0.0
        %2499 = vmatpush2.msra.mxu0 0.0
        %2500 = vmatprep.subr.mxu0 0.0
        %2501 = vmatpush2.msra.mxu0 0.0
        %2502 = vmatprep.subr.mxu0 0.0
        %2503 = vmatpush2.msra.mxu0 0.0
        %2504 = vmatprep.subr.mxu0 0.0
        %2505 = vmatpush2.msra.mxu0 0.0
        %2506 = vmatprep.subr.mxu0 0.0
        %2507 = vmatpush2.msra.mxu0 0.0
        %2508 = vmatprep.subr.mxu0 0.0
        %2509 = vmatpush2.msra.mxu0 0.0
        %2510 = vmatprep.subr.mxu0 0.0
        %2511 = vmatpush2.msra.mxu0 0.0
        %2512 = vmatprep.mubr.f32.mxu0 0.0
        %v2513 = vand.u32 %v2447, 4294901760
        %v2514 = vsub.f32 %v2447, %v2513
        %v2515 = vand.u32 %v2514, 4294901760
        %v2516 = vsub.f32 %v2514, %v2515
        %v2517 = vand.u32 %v2516, 4294901760
        %2518 = vmatmul.mubr.f32.gmra.mxu0 %v2517
        %v2519 = vpop.f32.mrf.mxu0
        %v2520 = vadd.f32 0.0, %v2519
        %v2521 = vpop.f32.mrf.mxu0
        %2522 = vdwg.mxu0
        %2523 = vmatprep.subr.mxu0 0.0
        %2524 = vmatpush1.msra.mxu0 0.0
        %2525 = vmatprep.subr.mxu0 0.0
        %2526 = vmatpush1.msra.mxu0 0.0
        %2527 = vmatprep.subr.mxu0 0.0
        %2528 = vmatpush1.msra.mxu0 0.0
        %2529 = vmatprep.subr.mxu0 0.0
        %2530 = vmatpush1.msra.mxu0 0.0
        %2531 = vmatprep.subr.mxu0 0.0
        %2532 = vmatpush1.msra.mxu0 0.0
        %2533 = vmatprep.subr.mxu0 0.0
        %2534 = vmatpush1.msra.mxu0 0.0
        %2535 = vmatprep.subr.mxu0 0.0
        %2536 = vmatpush1.msra.mxu0 0.0
        %2537 = vmatprep.subr.mxu0 0.0
        %2538 = vmatpush1.msra.mxu0 0.0
        %2539 = vmatprep.subr.mxu0 0.0
        %2540 = vmatpush1.msra.mxu0 0.0
        %2541 = vmatprep.subr.mxu0 0.0
        %2542 = vmatpush1.msra.mxu0 0.0
        %2543 = vmatprep.subr.mxu0 0.0
        %2544 = vmatpush1.msra.mxu0 0.0
        %2545 = vmatprep.subr.mxu0 0.0
        %2546 = vmatpush1.msra.mxu0 0.0
        %2547 = vmatprep.subr.mxu0 0.0
        %2548 = vmatpush1.msra.mxu0 0.0
        %2549 = vmatprep.subr.mxu0 0.0
        %2550 = vmatpush1.msra.mxu0 0.0
        %2551 = vmatprep.subr.mxu0 0.0
        %2552 = vmatpush1.msra.mxu0 0.0
        %2553 = vmatprep.subr.mxu0 0.0
        %2554 = vmatpush1.msra.mxu0 0.0
        %2555 = vmatprep.subr.mxu0 0.0
        %2556 = vmatpush2.msra.mxu0 0.0
        %2557 = vmatprep.subr.mxu0 0.0
        %2558 = vmatpush2.msra.mxu0 0.0
        %2559 = vmatprep.subr.mxu0 0.0
        %2560 = vmatpush2.msra.mxu0 0.0
        %2561 = vmatprep.subr.mxu0 0.0
        %2562 = vmatpush2.msra.mxu0 0.0
        %2563 = vmatprep.subr.mxu0 0.0
        %2564 = vmatpush2.msra.mxu0 0.0
        %2565 = vmatprep.subr.mxu0 0.0
        %2566 = vmatpush2.msra.mxu0 0.0
        %2567 = vmatprep.subr.mxu0 0.0
        %2568 = vmatpush2.msra.mxu0 0.0
        %2569 = vmatprep.subr.mxu0 0.0
        %2570 = vmatpush2.msra.mxu0 0.0
        %2571 = vmatprep.subr.mxu0 0.0
        %2572 = vmatpush2.msra.mxu0 0.0
        %2573 = vmatprep.subr.mxu0 0.0
        %2574 = vmatpush2.msra.mxu0 0.0
        %2575 = vmatprep.subr.mxu0 0.0
        %2576 = vmatpush2.msra.mxu0 0.0
        %2577 = vmatprep.subr.mxu0 0.0
        %2578 = vmatpush2.msra.mxu0 0.0
        %2579 = vmatprep.subr.mxu0 0.0
        %2580 = vmatpush2.msra.mxu0 0.0
        %2581 = vmatprep.subr.mxu0 0.0
        %2582 = vmatpush2.msra.mxu0 0.0
        %2583 = vmatprep.subr.mxu0 0.0
        %2584 = vmatpush2.msra.mxu0 0.0
        %2585 = vmatprep.subr.mxu0 0.0
        %2586 = vmatpush2.msra.mxu0 0.0
        %2587 = vmatprep.mubr.f32.mxu0 0.0
        %v2588 = vand.u32 %v2447, 4294901760
        %2589 = vmatmul.mubr.f32.gmra.mxu0 %v2588
        %v2590 = vpop.f32.mrf.mxu0
        %v2591 = vadd.f32 %v2520, %v2590
        %v2592 = vpop.f32.mrf.mxu0
        %2593 = vdwg.mxu0
        %2594 = vmatprep.subr.mxu0 0.0
        %2595 = vmatpush1.msra.mxu0 0.0
        %2596 = vmatprep.subr.mxu0 0.0
        %2597 = vmatpush1.msra.mxu0 0.0
        %2598 = vmatprep.subr.mxu0 0.0
        %2599 = vmatpush1.msra.mxu0 0.0
        %2600 = vmatprep.subr.mxu0 0.0
        %2601 = vmatpush1.msra.mxu0 0.0
        %2602 = vmatprep.subr.mxu0 0.0
        %2603 = vmatpush1.msra.mxu0 0.0
        %2604 = vmatprep.subr.mxu0 0.0
        %2605 = vmatpush1.msra.mxu0 0.0
        %2606 = vmatprep.subr.mxu0 0.0
        %2607 = vmatpush1.msra.mxu0 0.0
        %2608 = vmatprep.subr.mxu0 0.0
        %2609 = vmatpush1.msra.mxu0 0.0
        %2610 = vmatprep.subr.mxu0 0.0
        %2611 = vmatpush1.msra.mxu0 0.0
        %2612 = vmatprep.subr.mxu0 0.0
        %2613 = vmatpush1.msra.mxu0 0.0
        %2614 = vmatprep.subr.mxu0 0.0
        %2615 = vmatpush1.msra.mxu0 0.0
        %2616 = vmatprep.subr.mxu0 0.0
        %2617 = vmatpush1.msra.mxu0 0.0
        %2618 = vmatprep.subr.mxu0 0.0
        %2619 = vmatpush1.msra.mxu0 0.0
        %2620 = vmatprep.subr.mxu0 0.0
        %2621 = vmatpush1.msra.mxu0 0.0
        %2622 = vmatprep.subr.mxu0 0.0
        %2623 = vmatpush1.msra.mxu0 0.0
        %2624 = vmatprep.subr.mxu0 0.0
        %2625 = vmatpush1.msra.mxu0 0.0
        %2626 = vmatprep.subr.mxu0 0.0
        %2627 = vmatpush2.msra.mxu0 0.0
        %2628 = vmatprep.subr.mxu0 0.0
        %2629 = vmatpush2.msra.mxu0 0.0
        %2630 = vmatprep.subr.mxu0 0.0
        %2631 = vmatpush2.msra.mxu0 0.0
        %2632 = vmatprep.subr.mxu0 0.0
        %2633 = vmatpush2.msra.mxu0 0.0
        %2634 = vmatprep.subr.mxu0 0.0
        %2635 = vmatpush2.msra.mxu0 0.0
        %2636 = vmatprep.subr.mxu0 0.0
        %2637 = vmatpush2.msra.mxu0 0.0
        %2638 = vmatprep.subr.mxu0 0.0
        %2639 = vmatpush2.msra.mxu0 0.0
        %2640 = vmatprep.subr.mxu0 0.0
        %2641 = vmatpush2.msra.mxu0 0.0
        %2642 = vmatprep.subr.mxu0 0.0
        %2643 = vmatpush2.msra.mxu0 0.0
        %2644 = vmatprep.subr.mxu0 0.0
        %2645 = vmatpush2.msra.mxu0 0.0
        %2646 = vmatprep.subr.mxu0 0.0
        %2647 = vmatpush2.msra.mxu0 0.0
        %2648 = vmatprep.subr.mxu0 0.0
        %2649 = vmatpush2.msra.mxu0 0.0
        %2650 = vmatprep.subr.mxu0 0.0
        %2651 = vmatpush2.msra.mxu0 0.0
        %2652 = vmatprep.subr.mxu0 0.0
        %2653 = vmatpush2.msra.mxu0 0.0
        %2654 = vmatprep.subr.mxu0 0.0
        %2655 = vmatpush2.msra.mxu0 0.0
        %2656 = vmatprep.subr.mxu0 0.0
        %2657 = vmatpush2.msra.mxu0 0.0
        %2658 = vmatprep.mubr.f32.mxu0 0.0
        %v2659 = vand.u32 %v2447, 4294901760
        %v2660 = vsub.f32 %v2447, %v2659
        %2661 = vmatmul.mubr.f32.gmra.mxu0 %v2660
        %v2662 = vpop.f32.mrf.mxu0
        %v2663 = vadd.f32 %v2591, %v2662
        %v2664 = vpop.f32.mrf.mxu0
        %2665 = vdwg.mxu0
        %2666 = vmatprep.subr.mxu0 0.0
        %2667 = vmatpush1.msra.mxu0 1.0
        %2668 = vmatprep.subr.mxu0 0.0
        %2669 = vmatpush1.msra.mxu0 1.0
        %2670 = vmatprep.subr.mxu0 0.0
        %2671 = vmatpush1.msra.mxu0 1.0
        %2672 = vmatprep.subr.mxu0 0.0
        %2673 = vmatpush1.msra.mxu0 1.0
        %2674 = vmatprep.subr.mxu0 0.0
        %2675 = vmatpush1.msra.mxu0 1.0
        %2676 = vmatprep.subr.mxu0 0.0
        %2677 = vmatpush1.msra.mxu0 1.0
        %2678 = vmatprep.subr.mxu0 0.0
        %2679 = vmatpush1.msra.mxu0 1.0
        %2680 = vmatprep.subr.mxu0 0.0
        %2681 = vmatpush1.msra.mxu0 1.0
        %2682 = vmatprep.subr.mxu0 0.0
        %2683 = vmatpush1.msra.mxu0 1.0
        %2684 = vmatprep.subr.mxu0 0.0
        %2685 = vmatpush1.msra.mxu0 1.0
        %2686 = vmatprep.subr.mxu0 0.0
        %2687 = vmatpush1.msra.mxu0 1.0
        %2688 = vmatprep.subr.mxu0 0.0
        %2689 = vmatpush1.msra.mxu0 1.0
        %2690 = vmatprep.subr.mxu0 0.0
        %2691 = vmatpush1.msra.mxu0 1.0
        %2692 = vmatprep.subr.mxu0 0.0
        %2693 = vmatpush1.msra.mxu0 1.0
        %2694 = vmatprep.subr.mxu0 0.0
        %2695 = vmatpush1.msra.mxu0 1.0
        %2696 = vmatprep.subr.mxu0 0.0
        %2697 = vmatpush1.msra.mxu0 1.0
        %2698 = vmatprep.subr.mxu0 0.0
        %2699 = vmatpush2.msra.mxu0 0.0
        %2700 = vmatprep.subr.mxu0 0.0
        %2701 = vmatpush2.msra.mxu0 0.0
        %2702 = vmatprep.subr.mxu0 0.0
        %2703 = vmatpush2.msra.mxu0 0.0
        %2704 = vmatprep.subr.mxu0 0.0
        %2705 = vmatpush2.msra.mxu0 0.0
        %2706 = vmatprep.subr.mxu0 0.0
        %2707 = vmatpush2.msra.mxu0 0.0
        %2708 = vmatprep.subr.mxu0 0.0
        %2709 = vmatpush2.msra.mxu0 0.0
        %2710 = vmatprep.subr.mxu0 0.0
        %2711 = vmatpush2.msra.mxu0 0.0
        %2712 = vmatprep.subr.mxu0 0.0
        %2713 = vmatpush2.msra.mxu0 0.0
        %2714 = vmatprep.subr.mxu0 0.0
        %2715 = vmatpush2.msra.mxu0 0.0
        %2716 = vmatprep.subr.mxu0 0.0
        %2717 = vmatpush2.msra.mxu0 0.0
        %2718 = vmatprep.subr.mxu0 0.0
        %2719 = vmatpush2.msra.mxu0 0.0
        %2720 = vmatprep.subr.mxu0 0.0
        %2721 = vmatpush2.msra.mxu0 0.0
        %2722 = vmatprep.subr.mxu0 0.0
        %2723 = vmatpush2.msra.mxu0 0.0
        %2724 = vmatprep.subr.mxu0 0.0
        %2725 = vmatpush2.msra.mxu0 0.0
        %2726 = vmatprep.subr.mxu0 0.0
        %2727 = vmatpush2.msra.mxu0 0.0
        %2728 = vmatprep.subr.mxu0 0.0
        %2729 = vmatpush2.msra.mxu0 0.0
        %2730 = vmatprep.mubr.f32.mxu0 0.0
        %v2731 = vand.u32 %v2447, 4294901760
        %v2732 = vsub.f32 %v2447, %v2731
        %v2733 = vand.u32 %v2732, 4294901760
        %2734 = vmatmul.mubr.f32.gmra.mxu0 %v2733
        %v2735 = vpop.f32.mrf.mxu0
        %v2736 = vadd.f32 %v2663, %v2735
        %v2737 = vpop.f32.mrf.mxu0
        %2738 = vdwg.mxu0
        %2739 = vmatprep.subr.mxu0 0.0
        %2740 = vmatpush1.msra.mxu0 0.0
        %2741 = vmatprep.subr.mxu0 0.0
        %2742 = vmatpush1.msra.mxu0 0.0
        %2743 = vmatprep.subr.mxu0 0.0
        %2744 = vmatpush1.msra.mxu0 0.0
        %2745 = vmatprep.subr.mxu0 0.0
        %2746 = vmatpush1.msra.mxu0 0.0
        %2747 = vmatprep.subr.mxu0 0.0
        %2748 = vmatpush1.msra.mxu0 0.0
        %2749 = vmatprep.subr.mxu0 0.0
        %2750 = vmatpush1.msra.mxu0 0.0
        %2751 = vmatprep.subr.mxu0 0.0
        %2752 = vmatpush1.msra.mxu0 0.0
        %2753 = vmatprep.subr.mxu0 0.0
        %2754 = vmatpush1.msra.mxu0 0.0
        %2755 = vmatprep.subr.mxu0 0.0
        %2756 = vmatpush1.msra.mxu0 0.0
        %2757 = vmatprep.subr.mxu0 0.0
        %2758 = vmatpush1.msra.mxu0 0.0
        %2759 = vmatprep.subr.mxu0 0.0
        %2760 = vmatpush1.msra.mxu0 0.0
        %2761 = vmatprep.subr.mxu0 0.0
        %2762 = vmatpush1.msra.mxu0 0.0
        %2763 = vmatprep.subr.mxu0 0.0
        %2764 = vmatpush1.msra.mxu0 0.0
        %2765 = vmatprep.subr.mxu0 0.0
        %2766 = vmatpush1.msra.mxu0 0.0
        %2767 = vmatprep.subr.mxu0 0.0
        %2768 = vmatpush1.msra.mxu0 0.0
        %2769 = vmatprep.subr.mxu0 0.0
        %2770 = vmatpush1.msra.mxu0 0.0
        %2771 = vmatprep.subr.mxu0 0.0
        %2772 = vmatpush2.msra.mxu0 0.0
        %2773 = vmatprep.subr.mxu0 0.0
        %2774 = vmatpush2.msra.mxu0 0.0
        %2775 = vmatprep.subr.mxu0 0.0
        %2776 = vmatpush2.msra.mxu0 0.0
        %2777 = vmatprep.subr.mxu0 0.0
        %2778 = vmatpush2.msra.mxu0 0.0
        %2779 = vmatprep.subr.mxu0 0.0
        %2780 = vmatpush2.msra.mxu0 0.0
        %2781 = vmatprep.subr.mxu0 0.0
        %2782 = vmatpush2.msra.mxu0 0.0
        %2783 = vmatprep.subr.mxu0 0.0
        %2784 = vmatpush2.msra.mxu0 0.0
        %2785 = vmatprep.subr.mxu0 0.0
        %2786 = vmatpush2.msra.mxu0 0.0
        %2787 = vmatprep.subr.mxu0 0.0
        %2788 = vmatpush2.msra.mxu0 0.0
        %2789 = vmatprep.subr.mxu0 0.0
        %2790 = vmatpush2.msra.mxu0 0.0
        %2791 = vmatprep.subr.mxu0 0.0
        %2792 = vmatpush2.msra.mxu0 0.0
        %2793 = vmatprep.subr.mxu0 0.0
        %2794 = vmatpush2.msra.mxu0 0.0
        %2795 = vmatprep.subr.mxu0 0.0
        %2796 = vmatpush2.msra.mxu0 0.0
        %2797 = vmatprep.subr.mxu0 0.0
        %2798 = vmatpush2.msra.mxu0 0.0
        %2799 = vmatprep.subr.mxu0 0.0
        %2800 = vmatpush2.msra.mxu0 0.0
        %2801 = vmatprep.subr.mxu0 0.0
        %2802 = vmatpush2.msra.mxu0 0.0
        %2803 = vmatprep.mubr.f32.mxu0 0.0
        %v2804 = vand.u32 %v2447, 4294901760
        %2805 = vmatmul.mubr.f32.gmra.mxu0 %v2804
        %v2806 = vpop.f32.mrf.mxu0
        %v2807 = vadd.f32 %v2736, %v2806
        %v2808 = vpop.f32.mrf.mxu0
        %2809 = vdwg.mxu0
        %2810 = vmatprep.subr.mxu0 0.0
        %2811 = vmatpush1.msra.mxu0 1.0
        %2812 = vmatprep.subr.mxu0 0.0
        %2813 = vmatpush1.msra.mxu0 1.0
        %2814 = vmatprep.subr.mxu0 0.0
        %2815 = vmatpush1.msra.mxu0 1.0
        %2816 = vmatprep.subr.mxu0 0.0
        %2817 = vmatpush1.msra.mxu0 1.0
        %2818 = vmatprep.subr.mxu0 0.0
        %2819 = vmatpush1.msra.mxu0 1.0
        %2820 = vmatprep.subr.mxu0 0.0
        %2821 = vmatpush1.msra.mxu0 1.0
        %2822 = vmatprep.subr.mxu0 0.0
        %2823 = vmatpush1.msra.mxu0 1.0
        %2824 = vmatprep.subr.mxu0 0.0
        %2825 = vmatpush1.msra.mxu0 1.0
        %2826 = vmatprep.subr.mxu0 0.0
        %2827 = vmatpush1.msra.mxu0 1.0
        %2828 = vmatprep.subr.mxu0 0.0
        %2829 = vmatpush1.msra.mxu0 1.0
        %2830 = vmatprep.subr.mxu0 0.0
        %2831 = vmatpush1.msra.mxu0 1.0
        %2832 = vmatprep.subr.mxu0 0.0
        %2833 = vmatpush1.msra.mxu0 1.0
        %2834 = vmatprep.subr.mxu0 0.0
        %2835 = vmatpush1.msra.mxu0 1.0
        %2836 = vmatprep.subr.mxu0 0.0
        %2837 = vmatpush1.msra.mxu0 1.0
        %2838 = vmatprep.subr.mxu0 0.0
        %2839 = vmatpush1.msra.mxu0 1.0
        %2840 = vmatprep.subr.mxu0 0.0
        %2841 = vmatpush1.msra.mxu0 1.0
        %2842 = vmatprep.subr.mxu0 0.0
        %2843 = vmatpush2.msra.mxu0 0.0
        %2844 = vmatprep.subr.mxu0 0.0
        %2845 = vmatpush2.msra.mxu0 0.0
        %2846 = vmatprep.subr.mxu0 0.0
        %2847 = vmatpush2.msra.mxu0 0.0
        %2848 = vmatprep.subr.mxu0 0.0
        %2849 = vmatpush2.msra.mxu0 0.0
        %2850 = vmatprep.subr.mxu0 0.0
        %2851 = vmatpush2.msra.mxu0 0.0
        %2852 = vmatprep.subr.mxu0 0.0
        %2853 = vmatpush2.msra.mxu0 0.0
        %2854 = vmatprep.subr.mxu0 0.0
        %2855 = vmatpush2.msra.mxu0 0.0
        %2856 = vmatprep.subr.mxu0 0.0
        %2857 = vmatpush2.msra.mxu0 0.0
        %2858 = vmatprep.subr.mxu0 0.0
        %2859 = vmatpush2.msra.mxu0 0.0
        %2860 = vmatprep.subr.mxu0 0.0
        %2861 = vmatpush2.msra.mxu0 0.0
        %2862 = vmatprep.subr.mxu0 0.0
        %2863 = vmatpush2.msra.mxu0 0.0
        %2864 = vmatprep.subr.mxu0 0.0
        %2865 = vmatpush2.msra.mxu0 0.0
        %2866 = vmatprep.subr.mxu0 0.0
        %2867 = vmatpush2.msra.mxu0 0.0
        %2868 = vmatprep.subr.mxu0 0.0
        %2869 = vmatpush2.msra.mxu0 0.0
        %2870 = vmatprep.subr.mxu0 0.0
        %2871 = vmatpush2.msra.mxu0 0.0
        %2872 = vmatprep.subr.mxu0 0.0
        %2873 = vmatpush2.msra.mxu0 0.0
        %2874 = vmatprep.mubr.f32.mxu0 0.0
        %v2875 = vand.u32 %v2447, 4294901760
        %2876 = vmatmul.mubr.f32.gmra.mxu0 %v2875
        %v2877 = vpop.f32.mrf.mxu0
        %v2878 = vadd.f32 %v2807, %v2877
        %v2879 = vpop.f32.mrf.mxu0
        %2880 = vdwg.mxu0
        %v2881 = vrsqrt.pop %v2878
        %v2882 = vmin.f32 %v2881, 10000000.0
        %v2883 = vmul.f32 %v258, %v2446
        %2884 = vmatprep.subr.mxu0 0.0
        %2885 = vmatpush1.msra.mxu0 1.0
        %2886 = vmatprep.subr.mxu0 0.0
        %2887 = vmatpush1.msra.mxu0 1.0
        %2888 = vmatprep.subr.mxu0 0.0
        %2889 = vmatpush1.msra.mxu0 1.0
        %2890 = vmatprep.subr.mxu0 0.0
        %2891 = vmatpush1.msra.mxu0 1.0
        %2892 = vmatprep.subr.mxu0 0.0
        %2893 = vmatpush1.msra.mxu0 1.0
        %2894 = vmatprep.subr.mxu0 0.0
        %2895 = vmatpush1.msra.mxu0 1.0
        %2896 = vmatprep.subr.mxu0 0.0
        %2897 = vmatpush1.msra.mxu0 1.0
        %2898 = vmatprep.subr.mxu0 0.0
        %2899 = vmatpush1.msra.mxu0 1.0
        %2900 = vmatprep.subr.mxu0 0.0
        %2901 = vmatpush1.msra.mxu0 1.0
        %2902 = vmatprep.subr.mxu0 0.0
        %2903 = vmatpush1.msra.mxu0 1.0
        %2904 = vmatprep.subr.mxu0 0.0
        %2905 = vmatpush1.msra.mxu0 1.0
        %2906 = vmatprep.subr.mxu0 0.0
        %2907 = vmatpush1.msra.mxu0 1.0
        %2908 = vmatprep.subr.mxu0 0.0
        %2909 = vmatpush1.msra.mxu0 1.0
        %2910 = vmatprep.subr.mxu0 0.0
        %2911 = vmatpush1.msra.mxu0 1.0
        %2912 = vmatprep.subr.mxu0 0.0
        %2913 = vmatpush1.msra.mxu0 1.0
        %2914 = vmatprep.subr.mxu0 0.0
        %2915 = vmatpush1.msra.mxu0 1.0
        %2916 = vmatprep.subr.mxu0 0.0
        %2917 = vmatpush2.msra.mxu0 0.0
        %2918 = vmatprep.subr.mxu0 0.0
        %2919 = vmatpush2.msra.mxu0 0.0
        %2920 = vmatprep.subr.mxu0 0.0
        %2921 = vmatpush2.msra.mxu0 0.0
        %2922 = vmatprep.subr.mxu0 0.0
        %2923 = vmatpush2.msra.mxu0 0.0
        %2924 = vmatprep.subr.mxu0 0.0
        %2925 = vmatpush2.msra.mxu0 0.0
        %2926 = vmatprep.subr.mxu0 0.0
        %2927 = vmatpush2.msra.mxu0 0.0
        %2928 = vmatprep.subr.mxu0 0.0
        %2929 = vmatpush2.msra.mxu0 0.0
        %2930 = vmatprep.subr.mxu0 0.0
        %2931 = vmatpush2.msra.mxu0 0.0
        %2932 = vmatprep.subr.mxu0 0.0
        %2933 = vmatpush2.msra.mxu0 0.0
        %2934 = vmatprep.subr.mxu0 0.0
        %2935 = vmatpush2.msra.mxu0 0.0
        %2936 = vmatprep.subr.mxu0 0.0
        %2937 = vmatpush2.msra.mxu0 0.0
        %2938 = vmatprep.subr.mxu0 0.0
        %2939 = vmatpush2.msra.mxu0 0.0
        %2940 = vmatprep.subr.mxu0 0.0
        %2941 = vmatpush2.msra.mxu0 0.0
        %2942 = vmatprep.subr.mxu0 0.0
        %2943 = vmatpush2.msra.mxu0 0.0
        %2944 = vmatprep.subr.mxu0 0.0
        %2945 = vmatpush2.msra.mxu0 0.0
        %2946 = vmatprep.subr.mxu0 0.0
        %2947 = vmatpush2.msra.mxu0 0.0
        %2948 = vmatprep.mubr.f32.mxu0 0.0
        %v2949 = vand.u32 %v2883, 4294901760
        %v2950 = vsub.f32 %v2883, %v2949
        %v2951 = vand.u32 %v2950, 4294901760
        %v2952 = vsub.f32 %v2950, %v2951
        %v2953 = vand.u32 %v2952, 4294901760
        %2954 = vmatmul.mubr.f32.gmra.mxu0 %v2953
        %v2955 = vpop.f32.mrf.mxu0
        %v2956 = vadd.f32 0.0, %v2955
        %v2957 = vpop.f32.mrf.mxu0
        %2958 = vdwg.mxu0
        %2959 = vmatprep.subr.mxu0 0.0
        %2960 = vmatpush1.msra.mxu0 0.0
        %2961 = vmatprep.subr.mxu0 0.0
        %2962 = vmatpush1.msra.mxu0 0.0
        %2963 = vmatprep.subr.mxu0 0.0
        %2964 = vmatpush1.msra.mxu0 0.0
        %2965 = vmatprep.subr.mxu0 0.0
        %2966 = vmatpush1.msra.mxu0 0.0
        %2967 = vmatprep.subr.mxu0 0.0
        %2968 = vmatpush1.msra.mxu0 0.0
        %2969 = vmatprep.subr.mxu0 0.0
        %2970 = vmatpush1.msra.mxu0 0.0
        %2971 = vmatprep.subr.mxu0 0.0
        %2972 = vmatpush1.msra.mxu0 0.0
        %2973 = vmatprep.subr.mxu0 0.0
        %2974 = vmatpush1.msra.mxu0 0.0
        %2975 = vmatprep.subr.mxu0 0.0
        %2976 = vmatpush1.msra.mxu0 0.0
        %2977 = vmatprep.subr.mxu0 0.0
        %2978 = vmatpush1.msra.mxu0 0.0
        %2979 = vmatprep.subr.mxu0 0.0
        %2980 = vmatpush1.msra.mxu0 0.0
        %2981 = vmatprep.subr.mxu0 0.0
        %2982 = vmatpush1.msra.mxu0 0.0
        %2983 = vmatprep.subr.mxu0 0.0
        %2984 = vmatpush1.msra.mxu0 0.0
        %2985 = vmatprep.subr.mxu0 0.0
        %2986 = vmatpush1.msra.mxu0 0.0
        %2987 = vmatprep.subr.mxu0 0.0
        %2988 = vmatpush1.msra.mxu0 0.0
        %2989 = vmatprep.subr.mxu0 0.0
        %2990 = vmatpush1.msra.mxu0 0.0
        %2991 = vmatprep.subr.mxu0 0.0
        %2992 = vmatpush2.msra.mxu0 0.0
        %2993 = vmatprep.subr.mxu0 0.0
        %2994 = vmatpush2.msra.mxu0 0.0
        %2995 = vmatprep.subr.mxu0 0.0
        %2996 = vmatpush2.msra.mxu0 0.0
        %2997 = vmatprep.subr.mxu0 0.0
        %2998 = vmatpush2.msra.mxu0 0.0
        %2999 = vmatprep.subr.mxu0 0.0
        %3000 = vmatpush2.msra.mxu0 0.0
        %3001 = vmatprep.subr.mxu0 0.0
        %3002 = vmatpush2.msra.mxu0 0.0
        %3003 = vmatprep.subr.mxu0 0.0
        %3004 = vmatpush2.msra.mxu0 0.0
        %3005 = vmatprep.subr.mxu0 0.0
        %3006 = vmatpush2.msra.mxu0 0.0
        %3007 = vmatprep.subr.mxu0 0.0
        %3008 = vmatpush2.msra.mxu0 0.0
        %3009 = vmatprep.subr.mxu0 0.0
        %3010 = vmatpush2.msra.mxu0 0.0
        %3011 = vmatprep.subr.mxu0 0.0
        %3012 = vmatpush2.msra.mxu0 0.0
        %3013 = vmatprep.subr.mxu0 0.0
        %3014 = vmatpush2.msra.mxu0 0.0
        %3015 = vmatprep.subr.mxu0 0.0
        %3016 = vmatpush2.msra.mxu0 0.0
        %3017 = vmatprep.subr.mxu0 0.0
        %3018 = vmatpush2.msra.mxu0 0.0
        %3019 = vmatprep.subr.mxu0 0.0
        %3020 = vmatpush2.msra.mxu0 0.0
        %3021 = vmatprep.subr.mxu0 0.0
        %3022 = vmatpush2.msra.mxu0 0.0
        %3023 = vmatprep.mubr.f32.mxu0 0.0
        %v3024 = vand.u32 %v2883, 4294901760
        %3025 = vmatmul.mubr.f32.gmra.mxu0 %v3024
        %v3026 = vpop.f32.mrf.mxu0
        %v3027 = vadd.f32 %v2956, %v3026
        %v3028 = vpop.f32.mrf.mxu0
        %3029 = vdwg.mxu0
        %3030 = vmatprep.subr.mxu0 0.0
        %3031 = vmatpush1.msra.mxu0 0.0
        %3032 = vmatprep.subr.mxu0 0.0
        %3033 = vmatpush1.msra.mxu0 0.0
        %3034 = vmatprep.subr.mxu0 0.0
        %3035 = vmatpush1.msra.mxu0 0.0
        %3036 = vmatprep.subr.mxu0 0.0
        %3037 = vmatpush1.msra.mxu0 0.0
        %3038 = vmatprep.subr.mxu0 0.0
        %3039 = vmatpush1.msra.mxu0 0.0
        %3040 = vmatprep.subr.mxu0 0.0
        %3041 = vmatpush1.msra.mxu0 0.0
        %3042 = vmatprep.subr.mxu0 0.0
        %3043 = vmatpush1.msra.mxu0 0.0
        %3044 = vmatprep.subr.mxu0 0.0
        %3045 = vmatpush1.msra.mxu0 0.0
        %3046 = vmatprep.subr.mxu0 0.0
        %3047 = vmatpush1.msra.mxu0 0.0
        %3048 = vmatprep.subr.mxu0 0.0
        %3049 = vmatpush1.msra.mxu0 0.0
        %3050 = vmatprep.subr.mxu0 0.0
        %3051 = vmatpush1.msra.mxu0 0.0
        %3052 = vmatprep.subr.mxu0 0.0
        %3053 = vmatpush1.msra.mxu0 0.0
        %3054 = vmatprep.subr.mxu0 0.0
        %3055 = vmatpush1.msra.mxu0 0.0
        %3056 = vmatprep.subr.mxu0 0.0
        %3057 = vmatpush1.msra.mxu0 0.0
        %3058 = vmatprep.subr.mxu0 0.0
        %3059 = vmatpush1.msra.mxu0 0.0
        %3060 = vmatprep.subr.mxu0 0.0
        %3061 = vmatpush1.msra.mxu0 0.0
        %3062 = vmatprep.subr.mxu0 0.0
        %3063 = vmatpush2.msra.mxu0 0.0
        %3064 = vmatprep.subr.mxu0 0.0
        %3065 = vmatpush2.msra.mxu0 0.0
        %3066 = vmatprep.subr.mxu0 0.0
        %3067 = vmatpush2.msra.mxu0 0.0
        %3068 = vmatprep.subr.mxu0 0.0
        %3069 = vmatpush2.msra.mxu0 0.0
        %3070 = vmatprep.subr.mxu0 0.0
        %3071 = vmatpush2.msra.mxu0 0.0
        %3072 = vmatprep.subr.mxu0 0.0
        %3073 = vmatpush2.msra.mxu0 0.0
        %3074 = vmatprep.subr.mxu0 0.0
        %3075 = vmatpush2.msra.mxu0 0.0
        %3076 = vmatprep.subr.mxu0 0.0
        %3077 = vmatpush2.msra.mxu0 0.0
        %3078 = vmatprep.subr.mxu0 0.0
        %3079 = vmatpush2.msra.mxu0 0.0
        %3080 = vmatprep.subr.mxu0 0.0
        %3081 = vmatpush2.msra.mxu0 0.0
        %3082 = vmatprep.subr.mxu0 0.0
        %3083 = vmatpush2.msra.mxu0 0.0
        %3084 = vmatprep.subr.mxu0 0.0
        %3085 = vmatpush2.msra.mxu0 0.0
        %3086 = vmatprep.subr.mxu0 0.0
        %3087 = vmatpush2.msra.mxu0 0.0
        %3088 = vmatprep.subr.mxu0 0.0
        %3089 = vmatpush2.msra.mxu0 0.0
        %3090 = vmatprep.subr.mxu0 0.0
        %3091 = vmatpush2.msra.mxu0 0.0
        %3092 = vmatprep.subr.mxu0 0.0
        %3093 = vmatpush2.msra.mxu0 0.0
        %3094 = vmatprep.mubr.f32.mxu0 0.0
        %v3095 = vand.u32 %v2883, 4294901760
        %v3096 = vsub.f32 %v2883, %v3095
        %3097 = vmatmul.mubr.f32.gmra.mxu0 %v3096
        %v3098 = vpop.f32.mrf.mxu0
        %v3099 = vadd.f32 %v3027, %v3098
        %v3100 = vpop.f32.mrf.mxu0
        %3101 = vdwg.mxu0
        %3102 = vmatprep.subr.mxu0 0.0
        %3103 = vmatpush1.msra.mxu0 1.0
        %3104 = vmatprep.subr.mxu0 0.0
        %3105 = vmatpush1.msra.mxu0 1.0
        %3106 = vmatprep.subr.mxu0 0.0
        %3107 = vmatpush1.msra.mxu0 1.0
        %3108 = vmatprep.subr.mxu0 0.0
        %3109 = vmatpush1.msra.mxu0 1.0
        %3110 = vmatprep.subr.mxu0 0.0
        %3111 = vmatpush1.msra.mxu0 1.0
        %3112 = vmatprep.subr.mxu0 0.0
        %3113 = vmatpush1.msra.mxu0 1.0
        %3114 = vmatprep.subr.mxu0 0.0
        %3115 = vmatpush1.msra.mxu0 1.0
        %3116 = vmatprep.subr.mxu0 0.0
        %3117 = vmatpush1.msra.mxu0 1.0
        %3118 = vmatprep.subr.mxu0 0.0
        %3119 = vmatpush1.msra.mxu0 1.0
        %3120 = vmatprep.subr.mxu0 0.0
        %3121 = vmatpush1.msra.mxu0 1.0
        %3122 = vmatprep.subr.mxu0 0.0
        %3123 = vmatpush1.msra.mxu0 1.0
        %3124 = vmatprep.subr.mxu0 0.0
        %3125 = vmatpush1.msra.mxu0 1.0
        %3126 = vmatprep.subr.mxu0 0.0
        %3127 = vmatpush1.msra.mxu0 1.0
        %3128 = vmatprep.subr.mxu0 0.0
        %3129 = vmatpush1.msra.mxu0 1.0
        %3130 = vmatprep.subr.mxu0 0.0
        %3131 = vmatpush1.msra.mxu0 1.0
        %3132 = vmatprep.subr.mxu0 0.0
        %3133 = vmatpush1.msra.mxu0 1.0
        %3134 = vmatprep.subr.mxu0 0.0
        %3135 = vmatpush2.msra.mxu0 0.0
        %3136 = vmatprep.subr.mxu0 0.0
        %3137 = vmatpush2.msra.mxu0 0.0
        %3138 = vmatprep.subr.mxu0 0.0
        %3139 = vmatpush2.msra.mxu0 0.0
        %3140 = vmatprep.subr.mxu0 0.0
        %3141 = vmatpush2.msra.mxu0 0.0
        %3142 = vmatprep.subr.mxu0 0.0
        %3143 = vmatpush2.msra.mxu0 0.0
        %3144 = vmatprep.subr.mxu0 0.0
        %3145 = vmatpush2.msra.mxu0 0.0
        %3146 = vmatprep.subr.mxu0 0.0
        %3147 = vmatpush2.msra.mxu0 0.0
        %3148 = vmatprep.subr.mxu0 0.0
        %3149 = vmatpush2.msra.mxu0 0.0
        %3150 = vmatprep.subr.mxu0 0.0
        %3151 = vmatpush2.msra.mxu0 0.0
        %3152 = vmatprep.subr.mxu0 0.0
        %3153 = vmatpush2.msra.mxu0 0.0
        %3154 = vmatprep.subr.mxu0 0.0
        %3155 = vmatpush2.msra.mxu0 0.0
        %3156 = vmatprep.subr.mxu0 0.0
        %3157 = vmatpush2.msra.mxu0 0.0
        %3158 = vmatprep.subr.mxu0 0.0
        %3159 = vmatpush2.msra.mxu0 0.0
        %3160 = vmatprep.subr.mxu0 0.0
        %3161 = vmatpush2.msra.mxu0 0.0
        %3162 = vmatprep.subr.mxu0 0.0
        %3163 = vmatpush2.msra.mxu0 0.0
        %3164 = vmatprep.subr.mxu0 0.0
        %3165 = vmatpush2.msra.mxu0 0.0
        %3166 = vmatprep.mubr.f32.mxu0 0.0
        %v3167 = vand.u32 %v2883, 4294901760
        %v3168 = vsub.f32 %v2883, %v3167
        %v3169 = vand.u32 %v3168, 4294901760
        %3170 = vmatmul.mubr.f32.gmra.mxu0 %v3169
        %v3171 = vpop.f32.mrf.mxu0
        %v3172 = vadd.f32 %v3099, %v3171
        %v3173 = vpop.f32.mrf.mxu0
        %3174 = vdwg.mxu0
        %3175 = vmatprep.subr.mxu0 0.0
        %3176 = vmatpush1.msra.mxu0 0.0
        %3177 = vmatprep.subr.mxu0 0.0
        %3178 = vmatpush1.msra.mxu0 0.0
        %3179 = vmatprep.subr.mxu0 0.0
        %3180 = vmatpush1.msra.mxu0 0.0
        %3181 = vmatprep.subr.mxu0 0.0
        %3182 = vmatpush1.msra.mxu0 0.0
        %3183 = vmatprep.subr.mxu0 0.0
        %3184 = vmatpush1.msra.mxu0 0.0
        %3185 = vmatprep.subr.mxu0 0.0
        %3186 = vmatpush1.msra.mxu0 0.0
        %3187 = vmatprep.subr.mxu0 0.0
        %3188 = vmatpush1.msra.mxu0 0.0
        %3189 = vmatprep.subr.mxu0 0.0
        %3190 = vmatpush1.msra.mxu0 0.0
        %3191 = vmatprep.subr.mxu0 0.0
        %3192 = vmatpush1.msra.mxu0 0.0
        %3193 = vmatprep.subr.mxu0 0.0
        %3194 = vmatpush1.msra.mxu0 0.0
        %3195 = vmatprep.subr.mxu0 0.0
        %3196 = vmatpush1.msra.mxu0 0.0
        %3197 = vmatprep.subr.mxu0 0.0
        %3198 = vmatpush1.msra.mxu0 0.0
        %3199 = vmatprep.subr.mxu0 0.0
        %3200 = vmatpush1.msra.mxu0 0.0
        %3201 = vmatprep.subr.mxu0 0.0
        %3202 = vmatpush1.msra.mxu0 0.0
        %3203 = vmatprep.subr.mxu0 0.0
        %3204 = vmatpush1.msra.mxu0 0.0
        %3205 = vmatprep.subr.mxu0 0.0
        %3206 = vmatpush1.msra.mxu0 0.0
        %3207 = vmatprep.subr.mxu0 0.0
        %3208 = vmatpush2.msra.mxu0 0.0
        %3209 = vmatprep.subr.mxu0 0.0
        %3210 = vmatpush2.msra.mxu0 0.0
        %3211 = vmatprep.subr.mxu0 0.0
        %3212 = vmatpush2.msra.mxu0 0.0
        %3213 = vmatprep.subr.mxu0 0.0
        %3214 = vmatpush2.msra.mxu0 0.0
        %3215 = vmatprep.subr.mxu0 0.0
        %3216 = vmatpush2.msra.mxu0 0.0
        %3217 = vmatprep.subr.mxu0 0.0
        %3218 = vmatpush2.msra.mxu0 0.0
        %3219 = vmatprep.subr.mxu0 0.0
        %3220 = vmatpush2.msra.mxu0 0.0
        %3221 = vmatprep.subr.mxu0 0.0
        %3222 = vmatpush2.msra.mxu0 0.0
        %3223 = vmatprep.subr.mxu0 0.0
        %3224 = vmatpush2.msra.mxu0 0.0
        %3225 = vmatprep.subr.mxu0 0.0
        %3226 = vmatpush2.msra.mxu0 0.0
        %3227 = vmatprep.subr.mxu0 0.0
        %3228 = vmatpush2.msra.mxu0 0.0
        %3229 = vmatprep.subr.mxu0 0.0
        %3230 = vmatpush2.msra.mxu0 0.0
        %3231 = vmatprep.subr.mxu0 0.0
        %3232 = vmatpush2.msra.mxu0 0.0
        %3233 = vmatprep.subr.mxu0 0.0
        %3234 = vmatpush2.msra.mxu0 0.0
        %3235 = vmatprep.subr.mxu0 0.0
        %3236 = vmatpush2.msra.mxu0 0.0
        %3237 = vmatprep.subr.mxu0 0.0
        %3238 = vmatpush2.msra.mxu0 0.0
        %3239 = vmatprep.mubr.f32.mxu0 0.0
        %v3240 = vand.u32 %v2883, 4294901760
        %3241 = vmatmul.mubr.f32.gmra.mxu0 %v3240
        %v3242 = vpop.f32.mrf.mxu0
        %v3243 = vadd.f32 %v3172, %v3242
        %v3244 = vpop.f32.mrf.mxu0
        %3245 = vdwg.mxu0
        %3246 = vmatprep.subr.mxu0 0.0
        %3247 = vmatpush1.msra.mxu0 1.0
        %3248 = vmatprep.subr.mxu0 0.0
        %3249 = vmatpush1.msra.mxu0 1.0
        %3250 = vmatprep.subr.mxu0 0.0
        %3251 = vmatpush1.msra.mxu0 1.0
        %3252 = vmatprep.subr.mxu0 0.0
        %3253 = vmatpush1.msra.mxu0 1.0
        %3254 = vmatprep.subr.mxu0 0.0
        %3255 = vmatpush1.msra.mxu0 1.0
        %3256 = vmatprep.subr.mxu0 0.0
        %3257 = vmatpush1.msra.mxu0 1.0
        %3258 = vmatprep.subr.mxu0 0.0
        %3259 = vmatpush1.msra.mxu0 1.0
        %3260 = vmatprep.subr.mxu0 0.0
        %3261 = vmatpush1.msra.mxu0 1.0
        %3262 = vmatprep.subr.mxu0 0.0
        %3263 = vmatpush1.msra.mxu0 1.0
        %3264 = vmatprep.subr.mxu0 0.0
        %3265 = vmatpush1.msra.mxu0 1.0
        %3266 = vmatprep.subr.mxu0 0.0
        %3267 = vmatpush1.msra.mxu0 1.0
        %3268 = vmatprep.subr.mxu0 0.0
        %3269 = vmatpush1.msra.mxu0 1.0
        %3270 = vmatprep.subr.mxu0 0.0
        %3271 = vmatpush1.msra.mxu0 1.0
        %3272 = vmatprep.subr.mxu0 0.0
        %3273 = vmatpush1.msra.mxu0 1.0
        %3274 = vmatprep.subr.mxu0 0.0
        %3275 = vmatpush1.msra.mxu0 1.0
        %3276 = vmatprep.subr.mxu0 0.0
        %3277 = vmatpush1.msra.mxu0 1.0
        %3278 = vmatprep.subr.mxu0 0.0
        %3279 = vmatpush2.msra.mxu0 0.0
        %3280 = vmatprep.subr.mxu0 0.0
        %3281 = vmatpush2.msra.mxu0 0.0
        %3282 = vmatprep.subr.mxu0 0.0
        %3283 = vmatpush2.msra.mxu0 0.0
        %3284 = vmatprep.subr.mxu0 0.0
        %3285 = vmatpush2.msra.mxu0 0.0
        %3286 = vmatprep.subr.mxu0 0.0
        %3287 = vmatpush2.msra.mxu0 0.0
        %3288 = vmatprep.subr.mxu0 0.0
        %3289 = vmatpush2.msra.mxu0 0.0
        %3290 = vmatprep.subr.mxu0 0.0
        %3291 = vmatpush2.msra.mxu0 0.0
        %3292 = vmatprep.subr.mxu0 0.0
        %3293 = vmatpush2.msra.mxu0 0.0
        %3294 = vmatprep.subr.mxu0 0.0
        %3295 = vmatpush2.msra.mxu0 0.0
        %3296 = vmatprep.subr.mxu0 0.0
        %3297 = vmatpush2.msra.mxu0 0.0
        %3298 = vmatprep.subr.mxu0 0.0
        %3299 = vmatpush2.msra.mxu0 0.0
        %3300 = vmatprep.subr.mxu0 0.0
        %3301 = vmatpush2.msra.mxu0 0.0
        %3302 = vmatprep.subr.mxu0 0.0
        %3303 = vmatpush2.msra.mxu0 0.0
        %3304 = vmatprep.subr.mxu0 0.0
        %3305 = vmatpush2.msra.mxu0 0.0
        %3306 = vmatprep.subr.mxu0 0.0
        %3307 = vmatpush2.msra.mxu0 0.0
        %3308 = vmatprep.subr.mxu0 0.0
        %3309 = vmatpush2.msra.mxu0 0.0
        %3310 = vmatprep.mubr.f32.mxu0 0.0
        %v3311 = vand.u32 %v2883, 4294901760
        %3312 = vmatmul.mubr.f32.gmra.mxu0 %v3311
        %v3313 = vpop.f32.mrf.mxu0
        %v3314 = vadd.f32 %v3243, %v3313
        %v3315 = vpop.f32.mrf.mxu0
        %3316 = vdwg.mxu0
        %v3317 = vmul.f32 %v695, %v2882
        %v3318 = vmul.f32 %v3314, %v3317
        %v3319 = vmul.f32 %v3318, 1.442695
        %v3320 = vpow.pop %v3319
        %v3321 = vadd.f32 %v2445, %v3320
        %v3322 = vld [vmem:[%s222 + $0x10] sm:$0xff]
        %v3323 = vmul.f32 %v3322, %v3322
        %3324 = vmatprep.subr.mxu0 0.0
        %3325 = vmatpush1.msra.mxu0 1.0
        %3326 = vmatprep.subr.mxu0 0.0
        %3327 = vmatpush1.msra.mxu0 1.0
        %3328 = vmatprep.subr.mxu0 0.0
        %3329 = vmatpush1.msra.mxu0 1.0
        %3330 = vmatprep.subr.mxu0 0.0
        %3331 = vmatpush1.msra.mxu0 1.0
        %3332 = vmatprep.subr.mxu0 0.0
        %3333 = vmatpush1.msra.mxu0 1.0
        %3334 = vmatprep.subr.mxu0 0.0
        %3335 = vmatpush1.msra.mxu0 1.0
        %3336 = vmatprep.subr.mxu0 0.0
        %3337 = vmatpush1.msra.mxu0 1.0
        %3338 = vmatprep.subr.mxu0 0.0
        %3339 = vmatpush1.msra.mxu0 1.0
        %3340 = vmatprep.subr.mxu0 0.0
        %3341 = vmatpush1.msra.mxu0 1.0
        %3342 = vmatprep.subr.mxu0 0.0
        %3343 = vmatpush1.msra.mxu0 1.0
        %3344 = vmatprep.subr.mxu0 0.0
        %3345 = vmatpush1.msra.mxu0 1.0
        %3346 = vmatprep.subr.mxu0 0.0
        %3347 = vmatpush1.msra.mxu0 1.0
        %3348 = vmatprep.subr.mxu0 0.0
        %3349 = vmatpush1.msra.mxu0 1.0
        %3350 = vmatprep.subr.mxu0 0.0
        %3351 = vmatpush1.msra.mxu0 1.0
        %3352 = vmatprep.subr.mxu0 0.0
        %3353 = vmatpush1.msra.mxu0 1.0
        %3354 = vmatprep.subr.mxu0 0.0
        %3355 = vmatpush1.msra.mxu0 1.0
        %3356 = vmatprep.subr.mxu0 0.0
        %3357 = vmatpush2.msra.mxu0 0.0
        %3358 = vmatprep.subr.mxu0 0.0
        %3359 = vmatpush2.msra.mxu0 0.0
        %3360 = vmatprep.subr.mxu0 0.0
        %3361 = vmatpush2.msra.mxu0 0.0
        %3362 = vmatprep.subr.mxu0 0.0
        %3363 = vmatpush2.msra.mxu0 0.0
        %3364 = vmatprep.subr.mxu0 0.0
        %3365 = vmatpush2.msra.mxu0 0.0
        %3366 = vmatprep.subr.mxu0 0.0
        %3367 = vmatpush2.msra.mxu0 0.0
        %3368 = vmatprep.subr.mxu0 0.0
        %3369 = vmatpush2.msra.mxu0 0.0
        %3370 = vmatprep.subr.mxu0 0.0
        %3371 = vmatpush2.msra.mxu0 0.0
        %3372 = vmatprep.subr.mxu0 0.0
        %3373 = vmatpush2.msra.mxu0 0.0
        %3374 = vmatprep.subr.mxu0 0.0
        %3375 = vmatpush2.msra.mxu0 0.0
        %3376 = vmatprep.subr.mxu0 0.0
        %3377 = vmatpush2.msra.mxu0 0.0
        %3378 = vmatprep.subr.mxu0 0.0
        %3379 = vmatpush2.msra.mxu0 0.0
        %3380 = vmatprep.subr.mxu0 0.0
        %3381 = vmatpush2.msra.mxu0 0.0
        %3382 = vmatprep.subr.mxu0 0.0
        %3383 = vmatpush2.msra.mxu0 0.0
        %3384 = vmatprep.subr.mxu0 0.0
        %3385 = vmatpush2.msra.mxu0 0.0
        %3386 = vmatprep.subr.mxu0 0.0
        %3387 = vmatpush2.msra.mxu0 0.0
        %3388 = vmatprep.mubr.f32.mxu0 0.0
        %v3389 = vand.u32 %v3323, 4294901760
        %v3390 = vsub.f32 %v3323, %v3389
        %v3391 = vand.u32 %v3390, 4294901760
        %v3392 = vsub.f32 %v3390, %v3391
        %v3393 = vand.u32 %v3392, 4294901760
        %3394 = vmatmul.mubr.f32.gmra.mxu0 %v3393
        %v3395 = vpop.f32.mrf.mxu0
        %v3396 = vadd.f32 0.0, %v3395
        %v3397 = vpop.f32.mrf.mxu0
        %3398 = vdwg.mxu0
        %3399 = vmatprep.subr.mxu0 0.0
        %3400 = vmatpush1.msra.mxu0 0.0
        %3401 = vmatprep.subr.mxu0 0.0
        %3402 = vmatpush1.msra.mxu0 0.0
        %3403 = vmatprep.subr.mxu0 0.0
        %3404 = vmatpush1.msra.mxu0 0.0
        %3405 = vmatprep.subr.mxu0 0.0
        %3406 = vmatpush1.msra.mxu0 0.0
        %3407 = vmatprep.subr.mxu0 0.0
        %3408 = vmatpush1.msra.mxu0 0.0
        %3409 = vmatprep.subr.mxu0 0.0
        %3410 = vmatpush1.msra.mxu0 0.0
        %3411 = vmatprep.subr.mxu0 0.0
        %3412 = vmatpush1.msra.mxu0 0.0
        %3413 = vmatprep.subr.mxu0 0.0
        %3414 = vmatpush1.msra.mxu0 0.0
        %3415 = vmatprep.subr.mxu0 0.0
        %3416 = vmatpush1.msra.mxu0 0.0
        %3417 = vmatprep.subr.mxu0 0.0
        %3418 = vmatpush1.msra.mxu0 0.0
        %3419 = vmatprep.subr.mxu0 0.0
        %3420 = vmatpush1.msra.mxu0 0.0
        %3421 = vmatprep.subr.mxu0 0.0
        %3422 = vmatpush1.msra.mxu0 0.0
        %3423 = vmatprep.subr.mxu0 0.0
        %3424 = vmatpush1.msra.mxu0 0.0
        %3425 = vmatprep.subr.mxu0 0.0
        %3426 = vmatpush1.msra.mxu0 0.0
        %3427 = vmatprep.subr.mxu0 0.0
        %3428 = vmatpush1.msra.mxu0 0.0
        %3429 = vmatprep.subr.mxu0 0.0
        %3430 = vmatpush1.msra.mxu0 0.0
        %3431 = vmatprep.subr.mxu0 0.0
        %3432 = vmatpush2.msra.mxu0 0.0
        %3433 = vmatprep.subr.mxu0 0.0
        %3434 = vmatpush2.msra.mxu0 0.0
        %3435 = vmatprep.subr.mxu0 0.0
        %3436 = vmatpush2.msra.mxu0 0.0
        %3437 = vmatprep.subr.mxu0 0.0
        %3438 = vmatpush2.msra.mxu0 0.0
        %3439 = vmatprep.subr.mxu0 0.0
        %3440 = vmatpush2.msra.mxu0 0.0
        %3441 = vmatprep.subr.mxu0 0.0
        %3442 = vmatpush2.msra.mxu0 0.0
        %3443 = vmatprep.subr.mxu0 0.0
        %3444 = vmatpush2.msra.mxu0 0.0
        %3445 = vmatprep.subr.mxu0 0.0
        %3446 = vmatpush2.msra.mxu0 0.0
        %3447 = vmatprep.subr.mxu0 0.0
        %3448 = vmatpush2.msra.mxu0 0.0
        %3449 = vmatprep.subr.mxu0 0.0
        %3450 = vmatpush2.msra.mxu0 0.0
        %3451 = vmatprep.subr.mxu0 0.0
        %3452 = vmatpush2.msra.mxu0 0.0
        %3453 = vmatprep.subr.mxu0 0.0
        %3454 = vmatpush2.msra.mxu0 0.0
        %3455 = vmatprep.subr.mxu0 0.0
        %3456 = vmatpush2.msra.mxu0 0.0
        %3457 = vmatprep.subr.mxu0 0.0
        %3458 = vmatpush2.msra.mxu0 0.0
        %3459 = vmatprep.subr.mxu0 0.0
        %3460 = vmatpush2.msra.mxu0 0.0
        %3461 = vmatprep.subr.mxu0 0.0
        %3462 = vmatpush2.msra.mxu0 0.0
        %3463 = vmatprep.mubr.f32.mxu0 0.0
        %v3464 = vand.u32 %v3323, 4294901760
        %3465 = vmatmul.mubr.f32.gmra.mxu0 %v3464
        %v3466 = vpop.f32.mrf.mxu0
        %v3467 = vadd.f32 %v3396, %v3466
        %v3468 = vpop.f32.mrf.mxu0
        %3469 = vdwg.mxu0
        %3470 = vmatprep.subr.mxu0 0.0
        %3471 = vmatpush1.msra.mxu0 0.0
        %3472 = vmatprep.subr.mxu0 0.0
        %3473 = vmatpush1.msra.mxu0 0.0
        %3474 = vmatprep.subr.mxu0 0.0
        %3475 = vmatpush1.msra.mxu0 0.0
        %3476 = vmatprep.subr.mxu0 0.0
        %3477 = vmatpush1.msra.mxu0 0.0
        %3478 = vmatprep.subr.mxu0 0.0
        %3479 = vmatpush1.msra.mxu0 0.0
        %3480 = vmatprep.subr.mxu0 0.0
        %3481 = vmatpush1.msra.mxu0 0.0
        %3482 = vmatprep.subr.mxu0 0.0
        %3483 = vmatpush1.msra.mxu0 0.0
        %3484 = vmatprep.subr.mxu0 0.0
        %3485 = vmatpush1.msra.mxu0 0.0
        %3486 = vmatprep.subr.mxu0 0.0
        %3487 = vmatpush1.msra.mxu0 0.0
        %3488 = vmatprep.subr.mxu0 0.0
        %3489 = vmatpush1.msra.mxu0 0.0
        %3490 = vmatprep.subr.mxu0 0.0
        %3491 = vmatpush1.msra.mxu0 0.0
        %3492 = vmatprep.subr.mxu0 0.0
        %3493 = vmatpush1.msra.mxu0 0.0
        %3494 = vmatprep.subr.mxu0 0.0
        %3495 = vmatpush1.msra.mxu0 0.0
        %3496 = vmatprep.subr.mxu0 0.0
        %3497 = vmatpush1.msra.mxu0 0.0
        %3498 = vmatprep.subr.mxu0 0.0
        %3499 = vmatpush1.msra.mxu0 0.0
        %3500 = vmatprep.subr.mxu0 0.0
        %3501 = vmatpush1.msra.mxu0 0.0
        %3502 = vmatprep.subr.mxu0 0.0
        %3503 = vmatpush2.msra.mxu0 0.0
        %3504 = vmatprep.subr.mxu0 0.0
        %3505 = vmatpush2.msra.mxu0 0.0
        %3506 = vmatprep.subr.mxu0 0.0
        %3507 = vmatpush2.msra.mxu0 0.0
        %3508 = vmatprep.subr.mxu0 0.0
        %3509 = vmatpush2.msra.mxu0 0.0
        %3510 = vmatprep.subr.mxu0 0.0
        %3511 = vmatpush2.msra.mxu0 0.0
        %3512 = vmatprep.subr.mxu0 0.0
        %3513 = vmatpush2.msra.mxu0 0.0
        %3514 = vmatprep.subr.mxu0 0.0
        %3515 = vmatpush2.msra.mxu0 0.0
        %3516 = vmatprep.subr.mxu0 0.0
        %3517 = vmatpush2.msra.mxu0 0.0
        %3518 = vmatprep.subr.mxu0 0.0
        %3519 = vmatpush2.msra.mxu0 0.0
        %3520 = vmatprep.subr.mxu0 0.0
        %3521 = vmatpush2.msra.mxu0 0.0
        %3522 = vmatprep.subr.mxu0 0.0
        %3523 = vmatpush2.msra.mxu0 0.0
        %3524 = vmatprep.subr.mxu0 0.0
        %3525 = vmatpush2.msra.mxu0 0.0
        %3526 = vmatprep.subr.mxu0 0.0
        %3527 = vmatpush2.msra.mxu0 0.0
        %3528 = vmatprep.subr.mxu0 0.0
        %3529 = vmatpush2.msra.mxu0 0.0
        %3530 = vmatprep.subr.mxu0 0.0
        %3531 = vmatpush2.msra.mxu0 0.0
        %3532 = vmatprep.subr.mxu0 0.0
        %3533 = vmatpush2.msra.mxu0 0.0
        %3534 = vmatprep.mubr.f32.mxu0 0.0
        %v3535 = vand.u32 %v3323, 4294901760
        %v3536 = vsub.f32 %v3323, %v3535
        %3537 = vmatmul.mubr.f32.gmra.mxu0 %v3536
        %v3538 = vpop.f32.mrf.mxu0
        %v3539 = vadd.f32 %v3467, %v3538
        %v3540 = vpop.f32.mrf.mxu0
        %3541 = vdwg.mxu0
        %3542 = vmatprep.subr.mxu0 0.0
        %3543 = vmatpush1.msra.mxu0 1.0
        %3544 = vmatprep.subr.mxu0 0.0
        %3545 = vmatpush1.msra.mxu0 1.0
        %3546 = vmatprep.subr.mxu0 0.0
        %3547 = vmatpush1.msra.mxu0 1.0
        %3548 = vmatprep.subr.mxu0 0.0
        %3549 = vmatpush1.msra.mxu0 1.0
        %3550 = vmatprep.subr.mxu0 0.0
        %3551 = vmatpush1.msra.mxu0 1.0
        %3552 = vmatprep.subr.mxu0 0.0
        %3553 = vmatpush1.msra.mxu0 1.0
        %3554 = vmatprep.subr.mxu0 0.0
        %3555 = vmatpush1.msra.mxu0 1.0
        %3556 = vmatprep.subr.mxu0 0.0
        %3557 = vmatpush1.msra.mxu0 1.0
        %3558 = vmatprep.subr.mxu0 0.0
        %3559 = vmatpush1.msra.mxu0 1.0
        %3560 = vmatprep.subr.mxu0 0.0
        %3561 = vmatpush1.msra.mxu0 1.0
        %3562 = vmatprep.subr.mxu0 0.0
        %3563 = vmatpush1.msra.mxu0 1.0
        %3564 = vmatprep.subr.mxu0 0.0
        %3565 = vmatpush1.msra.mxu0 1.0
        %3566 = vmatprep.subr.mxu0 0.0
        %3567 = vmatpush1.msra.mxu0 1.0
        %3568 = vmatprep.subr.mxu0 0.0
        %3569 = vmatpush1.msra.mxu0 1.0
        %3570 = vmatprep.subr.mxu0 0.0
        %3571 = vmatpush1.msra.mxu0 1.0
        %3572 = vmatprep.subr.mxu0 0.0
        %3573 = vmatpush1.msra.mxu0 1.0
        %3574 = vmatprep.subr.mxu0 0.0
        %3575 = vmatpush2.msra.mxu0 0.0
        %3576 = vmatprep.subr.mxu0 0.0
        %3577 = vmatpush2.msra.mxu0 0.0
        %3578 = vmatprep.subr.mxu0 0.0
        %3579 = vmatpush2.msra.mxu0 0.0
        %3580 = vmatprep.subr.mxu0 0.0
        %3581 = vmatpush2.msra.mxu0 0.0
        %3582 = vmatprep.subr.mxu0 0.0
        %3583 = vmatpush2.msra.mxu0 0.0
        %3584 = vmatprep.subr.mxu0 0.0
        %3585 = vmatpush2.msra.mxu0 0.0
        %3586 = vmatprep.subr.mxu0 0.0
        %3587 = vmatpush2.msra.mxu0 0.0
        %3588 = vmatprep.subr.mxu0 0.0
        %3589 = vmatpush2.msra.mxu0 0.0
        %3590 = vmatprep.subr.mxu0 0.0
        %3591 = vmatpush2.msra.mxu0 0.0
        %3592 = vmatprep.subr.mxu0 0.0
        %3593 = vmatpush2.msra.mxu0 0.0
        %3594 = vmatprep.subr.mxu0 0.0
        %3595 = vmatpush2.msra.mxu0 0.0
        %3596 = vmatprep.subr.mxu0 0.0
        %3597 = vmatpush2.msra.mxu0 0.0
        %3598 = vmatprep.subr.mxu0 0.0
        %3599 = vmatpush2.msra.mxu0 0.0
        %3600 = vmatprep.subr.mxu0 0.0
        %3601 = vmatpush2.msra.mxu0 0.0
        %3602 = vmatprep.subr.mxu0 0.0
        %3603 = vmatpush2.msra.mxu0 0.0
        %3604 = vmatprep.subr.mxu0 0.0
        %3605 = vmatpush2.msra.mxu0 0.0
        %3606 = vmatprep.mubr.f32.mxu0 0.0
        %v3607 = vand.u32 %v3323, 4294901760
        %v3608 = vsub.f32 %v3323, %v3607
        %v3609 = vand.u32 %v3608, 4294901760
        %3610 = vmatmul.mubr.f32.gmra.mxu0 %v3609
        %v3611 = vpop.f32.mrf.mxu0
        %v3612 = vadd.f32 %v3539, %v3611
        %v3613 = vpop.f32.mrf.mxu0
        %3614 = vdwg.mxu0
        %3615 = vmatprep.subr.mxu0 0.0
        %3616 = vmatpush1.msra.mxu0 0.0
        %3617 = vmatprep.subr.mxu0 0.0
        %3618 = vmatpush1.msra.mxu0 0.0
        %3619 = vmatprep.subr.mxu0 0.0
        %3620 = vmatpush1.msra.mxu0 0.0
        %3621 = vmatprep.subr.mxu0 0.0
        %3622 = vmatpush1.msra.mxu0 0.0
        %3623 = vmatprep.subr.mxu0 0.0
        %3624 = vmatpush1.msra.mxu0 0.0
        %3625 = vmatprep.subr.mxu0 0.0
        %3626 = vmatpush1.msra.mxu0 0.0
        %3627 = vmatprep.subr.mxu0 0.0
        %3628 = vmatpush1.msra.mxu0 0.0
        %3629 = vmatprep.subr.mxu0 0.0
        %3630 = vmatpush1.msra.mxu0 0.0
        %3631 = vmatprep.subr.mxu0 0.0
        %3632 = vmatpush1.msra.mxu0 0.0
        %3633 = vmatprep.subr.mxu0 0.0
        %3634 = vmatpush1.msra.mxu0 0.0
        %3635 = vmatprep.subr.mxu0 0.0
        %3636 = vmatpush1.msra.mxu0 0.0
        %3637 = vmatprep.subr.mxu0 0.0
        %3638 = vmatpush1.msra.mxu0 0.0
        %3639 = vmatprep.subr.mxu0 0.0
        %3640 = vmatpush1.msra.mxu0 0.0
        %3641 = vmatprep.subr.mxu0 0.0
        %3642 = vmatpush1.msra.mxu0 0.0
        %3643 = vmatprep.subr.mxu0 0.0
        %3644 = vmatpush1.msra.mxu0 0.0
        %3645 = vmatprep.subr.mxu0 0.0
        %3646 = vmatpush1.msra.mxu0 0.0
        %3647 = vmatprep.subr.mxu0 0.0
        %3648 = vmatpush2.msra.mxu0 0.0
        %3649 = vmatprep.subr.mxu0 0.0
        %3650 = vmatpush2.msra.mxu0 0.0
        %3651 = vmatprep.subr.mxu0 0.0
        %3652 = vmatpush2.msra.mxu0 0.0
        %3653 = vmatprep.subr.mxu0 0.0
        %3654 = vmatpush2.msra.mxu0 0.0
        %3655 = vmatprep.subr.mxu0 0.0
        %3656 = vmatpush2.msra.mxu0 0.0
        %3657 = vmatprep.subr.mxu0 0.0
        %3658 = vmatpush2.msra.mxu0 0.0
        %3659 = vmatprep.subr.mxu0 0.0
        %3660 = vmatpush2.msra.mxu0 0.0
        %3661 = vmatprep.subr.mxu0 0.0
        %3662 = vmatpush2.msra.mxu0 0.0
        %3663 = vmatprep.subr.mxu0 0.0
        %3664 = vmatpush2.msra.mxu0 0.0
        %3665 = vmatprep.subr.mxu0 0.0
        %3666 = vmatpush2.msra.mxu0 0.0
        %3667 = vmatprep.subr.mxu0 0.0
        %3668 = vmatpush2.msra.mxu0 0.0
        %3669 = vmatprep.subr.mxu0 0.0
        %3670 = vmatpush2.msra.mxu0 0.0
        %3671 = vmatprep.subr.mxu0 0.0
        %3672 = vmatpush2.msra.mxu0 0.0
        %3673 = vmatprep.subr.mxu0 0.0
        %3674 = vmatpush2.msra.mxu0 0.0
        %3675 = vmatprep.subr.mxu0 0.0
        %3676 = vmatpush2.msra.mxu0 0.0
        %3677 = vmatprep.subr.mxu0 0.0
        %3678 = vmatpush2.msra.mxu0 0.0
        %3679 = vmatprep.mubr.f32.mxu0 0.0
        %v3680 = vand.u32 %v3323, 4294901760
        %3681 = vmatmul.mubr.f32.gmra.mxu0 %v3680
        %v3682 = vpop.f32.mrf.mxu0
        %v3683 = vadd.f32 %v3612, %v3682
        %v3684 = vpop.f32.mrf.mxu0
        %3685 = vdwg.mxu0
        %3686 = vmatprep.subr.mxu0 0.0
        %3687 = vmatpush1.msra.mxu0 1.0
        %3688 = vmatprep.subr.mxu0 0.0
        %3689 = vmatpush1.msra.mxu0 1.0
        %3690 = vmatprep.subr.mxu0 0.0
        %3691 = vmatpush1.msra.mxu0 1.0
        %3692 = vmatprep.subr.mxu0 0.0
        %3693 = vmatpush1.msra.mxu0 1.0
        %3694 = vmatprep.subr.mxu0 0.0
        %3695 = vmatpush1.msra.mxu0 1.0
        %3696 = vmatprep.subr.mxu0 0.0
        %3697 = vmatpush1.msra.mxu0 1.0
        %3698 = vmatprep.subr.mxu0 0.0
        %3699 = vmatpush1.msra.mxu0 1.0
        %3700 = vmatprep.subr.mxu0 0.0
        %3701 = vmatpush1.msra.mxu0 1.0
        %3702 = vmatprep.subr.mxu0 0.0
        %3703 = vmatpush1.msra.mxu0 1.0
        %3704 = vmatprep.subr.mxu0 0.0
        %3705 = vmatpush1.msra.mxu0 1.0
        %3706 = vmatprep.subr.mxu0 0.0
        %3707 = vmatpush1.msra.mxu0 1.0
        %3708 = vmatprep.subr.mxu0 0.0
        %3709 = vmatpush1.msra.mxu0 1.0
        %3710 = vmatprep.subr.mxu0 0.0
        %3711 = vmatpush1.msra.mxu0 1.0
        %3712 = vmatprep.subr.mxu0 0.0
        %3713 = vmatpush1.msra.mxu0 1.0
        %3714 = vmatprep.subr.mxu0 0.0
        %3715 = vmatpush1.msra.mxu0 1.0
        %3716 = vmatprep.subr.mxu0 0.0
        %3717 = vmatpush1.msra.mxu0 1.0
        %3718 = vmatprep.subr.mxu0 0.0
        %3719 = vmatpush2.msra.mxu0 0.0
        %3720 = vmatprep.subr.mxu0 0.0
        %3721 = vmatpush2.msra.mxu0 0.0
        %3722 = vmatprep.subr.mxu0 0.0
        %3723 = vmatpush2.msra.mxu0 0.0
        %3724 = vmatprep.subr.mxu0 0.0
        %3725 = vmatpush2.msra.mxu0 0.0
        %3726 = vmatprep.subr.mxu0 0.0
        %3727 = vmatpush2.msra.mxu0 0.0
        %3728 = vmatprep.subr.mxu0 0.0
        %3729 = vmatpush2.msra.mxu0 0.0
        %3730 = vmatprep.subr.mxu0 0.0
        %3731 = vmatpush2.msra.mxu0 0.0
        %3732 = vmatprep.subr.mxu0 0.0
        %3733 = vmatpush2.msra.mxu0 0.0
        %3734 = vmatprep.subr.mxu0 0.0
        %3735 = vmatpush2.msra.mxu0 0.0
        %3736 = vmatprep.subr.mxu0 0.0
        %3737 = vmatpush2.msra.mxu0 0.0
        %3738 = vmatprep.subr.mxu0 0.0
        %3739 = vmatpush2.msra.mxu0 0.0
        %3740 = vmatprep.subr.mxu0 0.0
        %3741 = vmatpush2.msra.mxu0 0.0
        %3742 = vmatprep.subr.mxu0 0.0
        %3743 = vmatpush2.msra.mxu0 0.0
        %3744 = vmatprep.subr.mxu0 0.0
        %3745 = vmatpush2.msra.mxu0 0.0
        %3746 = vmatprep.subr.mxu0 0.0
        %3747 = vmatpush2.msra.mxu0 0.0
        %3748 = vmatprep.subr.mxu0 0.0
        %3749 = vmatpush2.msra.mxu0 0.0
        %3750 = vmatprep.mubr.f32.mxu0 0.0
        %v3751 = vand.u32 %v3323, 4294901760
        %3752 = vmatmul.mubr.f32.gmra.mxu0 %v3751
        %v3753 = vpop.f32.mrf.mxu0
        %v3754 = vadd.f32 %v3683, %v3753
        %v3755 = vpop.f32.mrf.mxu0
        %3756 = vdwg.mxu0
        %v3757 = vrsqrt.pop %v3754
        %v3758 = vmin.f32 %v3757, 10000000.0
        %v3759 = vmul.f32 %v258, %v3322
        %3760 = vmatprep.subr.mxu0 0.0
        %3761 = vmatpush1.msra.mxu0 1.0
        %3762 = vmatprep.subr.mxu0 0.0
        %3763 = vmatpush1.msra.mxu0 1.0
        %3764 = vmatprep.subr.mxu0 0.0
        %3765 = vmatpush1.msra.mxu0 1.0
        %3766 = vmatprep.subr.mxu0 0.0
        %3767 = vmatpush1.msra.mxu0 1.0
        %3768 = vmatprep.subr.mxu0 0.0
        %3769 = vmatpush1.msra.mxu0 1.0
        %3770 = vmatprep.subr.mxu0 0.0
        %3771 = vmatpush1.msra.mxu0 1.0
        %3772 = vmatprep.subr.mxu0 0.0
        %3773 = vmatpush1.msra.mxu0 1.0
        %3774 = vmatprep.subr.mxu0 0.0
        %3775 = vmatpush1.msra.mxu0 1.0
        %3776 = vmatprep.subr.mxu0 0.0
        %3777 = vmatpush1.msra.mxu0 1.0
        %3778 = vmatprep.subr.mxu0 0.0
        %3779 = vmatpush1.msra.mxu0 1.0
        %3780 = vmatprep.subr.mxu0 0.0
        %3781 = vmatpush1.msra.mxu0 1.0
        %3782 = vmatprep.subr.mxu0 0.0
        %3783 = vmatpush1.msra.mxu0 1.0
        %3784 = vmatprep.subr.mxu0 0.0
        %3785 = vmatpush1.msra.mxu0 1.0
        %3786 = vmatprep.subr.mxu0 0.0
        %3787 = vmatpush1.msra.mxu0 1.0
        %3788 = vmatprep.subr.mxu0 0.0
        %3789 = vmatpush1.msra.mxu0 1.0
        %3790 = vmatprep.subr.mxu0 0.0
        %3791 = vmatpush1.msra.mxu0 1.0
        %3792 = vmatprep.subr.mxu0 0.0
        %3793 = vmatpush2.msra.mxu0 0.0
        %3794 = vmatprep.subr.mxu0 0.0
        %3795 = vmatpush2.msra.mxu0 0.0
        %3796 = vmatprep.subr.mxu0 0.0
        %3797 = vmatpush2.msra.mxu0 0.0
        %3798 = vmatprep.subr.mxu0 0.0
        %3799 = vmatpush2.msra.mxu0 0.0
        %3800 = vmatprep.subr.mxu0 0.0
        %3801 = vmatpush2.msra.mxu0 0.0
        %3802 = vmatprep.subr.mxu0 0.0
        %3803 = vmatpush2.msra.mxu0 0.0
        %3804 = vmatprep.subr.mxu0 0.0
        %3805 = vmatpush2.msra.mxu0 0.0
        %3806 = vmatprep.subr.mxu0 0.0
        %3807 = vmatpush2.msra.mxu0 0.0
        %3808 = vmatprep.subr.mxu0 0.0
        %3809 = vmatpush2.msra.mxu0 0.0
        %3810 = vmatprep.subr.mxu0 0.0
        %3811 = vmatpush2.msra.mxu0 0.0
        %3812 = vmatprep.subr.mxu0 0.0
        %3813 = vmatpush2.msra.mxu0 0.0
        %3814 = vmatprep.subr.mxu0 0.0
        %3815 = vmatpush2.msra.mxu0 0.0
        %3816 = vmatprep.subr.mxu0 0.0
        %3817 = vmatpush2.msra.mxu0 0.0
        %3818 = vmatprep.subr.mxu0 0.0
        %3819 = vmatpush2.msra.mxu0 0.0
        %3820 = vmatprep.subr.mxu0 0.0
        %3821 = vmatpush2.msra.mxu0 0.0
        %3822 = vmatprep.subr.mxu0 0.0
        %3823 = vmatpush2.msra.mxu0 0.0
        %3824 = vmatprep.mubr.f32.mxu0 0.0
        %v3825 = vand.u32 %v3759, 4294901760
        %v3826 = vsub.f32 %v3759, %v3825
        %v3827 = vand.u32 %v3826, 4294901760
        %v3828 = vsub.f32 %v3826, %v3827
        %v3829 = vand.u32 %v3828, 4294901760
        %3830 = vmatmul.mubr.f32.gmra.mxu0 %v3829
        %v3831 = vpop.f32.mrf.mxu0
        %v3832 = vadd.f32 0.0, %v3831
        %v3833 = vpop.f32.mrf.mxu0
        %3834 = vdwg.mxu0
        %3835 = vmatprep.subr.mxu0 0.0
        %3836 = vmatpush1.msra.mxu0 0.0
        %3837 = vmatprep.subr.mxu0 0.0
        %3838 = vmatpush1.msra.mxu0 0.0
        %3839 = vmatprep.subr.mxu0 0.0
        %3840 = vmatpush1.msra.mxu0 0.0
        %3841 = vmatprep.subr.mxu0 0.0
        %3842 = vmatpush1.msra.mxu0 0.0
        %3843 = vmatprep.subr.mxu0 0.0
        %3844 = vmatpush1.msra.mxu0 0.0
        %3845 = vmatprep.subr.mxu0 0.0
        %3846 = vmatpush1.msra.mxu0 0.0
        %3847 = vmatprep.subr.mxu0 0.0
        %3848 = vmatpush1.msra.mxu0 0.0
        %3849 = vmatprep.subr.mxu0 0.0
        %3850 = vmatpush1.msra.mxu0 0.0
        %3851 = vmatprep.subr.mxu0 0.0
        %3852 = vmatpush1.msra.mxu0 0.0
        %3853 = vmatprep.subr.mxu0 0.0
        %3854 = vmatpush1.msra.mxu0 0.0
        %3855 = vmatprep.subr.mxu0 0.0
        %3856 = vmatpush1.msra.mxu0 0.0
        %3857 = vmatprep.subr.mxu0 0.0
        %3858 = vmatpush1.msra.mxu0 0.0
        %3859 = vmatprep.subr.mxu0 0.0
        %3860 = vmatpush1.msra.mxu0 0.0
        %3861 = vmatprep.subr.mxu0 0.0
        %3862 = vmatpush1.msra.mxu0 0.0
        %3863 = vmatprep.subr.mxu0 0.0
        %3864 = vmatpush1.msra.mxu0 0.0
        %3865 = vmatprep.subr.mxu0 0.0
        %3866 = vmatpush1.msra.mxu0 0.0
        %3867 = vmatprep.subr.mxu0 0.0
        %3868 = vmatpush2.msra.mxu0 0.0
        %3869 = vmatprep.subr.mxu0 0.0
        %3870 = vmatpush2.msra.mxu0 0.0
        %3871 = vmatprep.subr.mxu0 0.0
        %3872 = vmatpush2.msra.mxu0 0.0
        %3873 = vmatprep.subr.mxu0 0.0
        %3874 = vmatpush2.msra.mxu0 0.0
        %3875 = vmatprep.subr.mxu0 0.0
        %3876 = vmatpush2.msra.mxu0 0.0
        %3877 = vmatprep.subr.mxu0 0.0
        %3878 = vmatpush2.msra.mxu0 0.0
        %3879 = vmatprep.subr.mxu0 0.0
        %3880 = vmatpush2.msra.mxu0 0.0
        %3881 = vmatprep.subr.mxu0 0.0
        %3882 = vmatpush2.msra.mxu0 0.0
        %3883 = vmatprep.subr.mxu0 0.0
        %3884 = vmatpush2.msra.mxu0 0.0
        %3885 = vmatprep.subr.mxu0 0.0
        %3886 = vmatpush2.msra.mxu0 0.0
        %3887 = vmatprep.subr.mxu0 0.0
        %3888 = vmatpush2.msra.mxu0 0.0
        %3889 = vmatprep.subr.mxu0 0.0
        %3890 = vmatpush2.msra.mxu0 0.0
        %3891 = vmatprep.subr.mxu0 0.0
        %3892 = vmatpush2.msra.mxu0 0.0
        %3893 = vmatprep.subr.mxu0 0.0
        %3894 = vmatpush2.msra.mxu0 0.0
        %3895 = vmatprep.subr.mxu0 0.0
        %3896 = vmatpush2.msra.mxu0 0.0
        %3897 = vmatprep.subr.mxu0 0.0
        %3898 = vmatpush2.msra.mxu0 0.0
        %3899 = vmatprep.mubr.f32.mxu0 0.0
        %v3900 = vand.u32 %v3759, 4294901760
        %3901 = vmatmul.mubr.f32.gmra.mxu0 %v3900
        %v3902 = vpop.f32.mrf.mxu0
        %v3903 = vadd.f32 %v3832, %v3902
        %v3904 = vpop.f32.mrf.mxu0
        %3905 = vdwg.mxu0
        %3906 = vmatprep.subr.mxu0 0.0
        %3907 = vmatpush1.msra.mxu0 0.0
        %3908 = vmatprep.subr.mxu0 0.0
        %3909 = vmatpush1.msra.mxu0 0.0
        %3910 = vmatprep.subr.mxu0 0.0
        %3911 = vmatpush1.msra.mxu0 0.0
        %3912 = vmatprep.subr.mxu0 0.0
        %3913 = vmatpush1.msra.mxu0 0.0
        %3914 = vmatprep.subr.mxu0 0.0
        %3915 = vmatpush1.msra.mxu0 0.0
        %3916 = vmatprep.subr.mxu0 0.0
        %3917 = vmatpush1.msra.mxu0 0.0
        %3918 = vmatprep.subr.mxu0 0.0
        %3919 = vmatpush1.msra.mxu0 0.0
        %3920 = vmatprep.subr.mxu0 0.0
        %3921 = vmatpush1.msra.mxu0 0.0
        %3922 = vmatprep.subr.mxu0 0.0
        %3923 = vmatpush1.msra.mxu0 0.0
        %3924 = vmatprep.subr.mxu0 0.0
        %3925 = vmatpush1.msra.mxu0 0.0
        %3926 = vmatprep.subr.mxu0 0.0
        %3927 = vmatpush1.msra.mxu0 0.0
        %3928 = vmatprep.subr.mxu0 0.0
        %3929 = vmatpush1.msra.mxu0 0.0
        %3930 = vmatprep.subr.mxu0 0.0
        %3931 = vmatpush1.msra.mxu0 0.0
        %3932 = vmatprep.subr.mxu0 0.0
        %3933 = vmatpush1.msra.mxu0 0.0
        %3934 = vmatprep.subr.mxu0 0.0
        %3935 = vmatpush1.msra.mxu0 0.0
        %3936 = vmatprep.subr.mxu0 0.0
        %3937 = vmatpush1.msra.mxu0 0.0
        %3938 = vmatprep.subr.mxu0 0.0
        %3939 = vmatpush2.msra.mxu0 0.0
        %3940 = vmatprep.subr.mxu0 0.0
        %3941 = vmatpush2.msra.mxu0 0.0
        %3942 = vmatprep.subr.mxu0 0.0
        %3943 = vmatpush2.msra.mxu0 0.0
        %3944 = vmatprep.subr.mxu0 0.0
        %3945 = vmatpush2.msra.mxu0 0.0
        %3946 = vmatprep.subr.mxu0 0.0
        %3947 = vmatpush2.msra.mxu0 0.0
        %3948 = vmatprep.subr.mxu0 0.0
        %3949 = vmatpush2.msra.mxu0 0.0
        %3950 = vmatprep.subr.mxu0 0.0
        %3951 = vmatpush2.msra.mxu0 0.0
        %3952 = vmatprep.subr.mxu0 0.0
        %3953 = vmatpush2.msra.mxu0 0.0
        %3954 = vmatprep.subr.mxu0 0.0
        %3955 = vmatpush2.msra.mxu0 0.0
        %3956 = vmatprep.subr.mxu0 0.0
        %3957 = vmatpush2.msra.mxu0 0.0
        %3958 = vmatprep.subr.mxu0 0.0
        %3959 = vmatpush2.msra.mxu0 0.0
        %3960 = vmatprep.subr.mxu0 0.0
        %3961 = vmatpush2.msra.mxu0 0.0
        %3962 = vmatprep.subr.mxu0 0.0
        %3963 = vmatpush2.msra.mxu0 0.0
        %3964 = vmatprep.subr.mxu0 0.0
        %3965 = vmatpush2.msra.mxu0 0.0
        %3966 = vmatprep.subr.mxu0 0.0
        %3967 = vmatpush2.msra.mxu0 0.0
        %3968 = vmatprep.subr.mxu0 0.0
        %3969 = vmatpush2.msra.mxu0 0.0
        %3970 = vmatprep.mubr.f32.mxu0 0.0
        %v3971 = vand.u32 %v3759, 4294901760
        %v3972 = vsub.f32 %v3759, %v3971
        %3973 = vmatmul.mubr.f32.gmra.mxu0 %v3972
        %v3974 = vpop.f32.mrf.mxu0
        %v3975 = vadd.f32 %v3903, %v3974
        %v3976 = vpop.f32.mrf.mxu0
        %3977 = vdwg.mxu0
        %3978 = vmatprep.subr.mxu0 0.0
        %3979 = vmatpush1.msra.mxu0 1.0
        %3980 = vmatprep.subr.mxu0 0.0
        %3981 = vmatpush1.msra.mxu0 1.0
        %3982 = vmatprep.subr.mxu0 0.0
        %3983 = vmatpush1.msra.mxu0 1.0
        %3984 = vmatprep.subr.mxu0 0.0
        %3985 = vmatpush1.msra.mxu0 1.0
        %3986 = vmatprep.subr.mxu0 0.0
        %3987 = vmatpush1.msra.mxu0 1.0
        %3988 = vmatprep.subr.mxu0 0.0
        %3989 = vmatpush1.msra.mxu0 1.0
        %3990 = vmatprep.subr.mxu0 0.0
        %3991 = vmatpush1.msra.mxu0 1.0
        %3992 = vmatprep.subr.mxu0 0.0
        %3993 = vmatpush1.msra.mxu0 1.0
        %3994 = vmatprep.subr.mxu0 0.0
        %3995 = vmatpush1.msra.mxu0 1.0
        %3996 = vmatprep.subr.mxu0 0.0
        %3997 = vmatpush1.msra.mxu0 1.0
        %3998 = vmatprep.subr.mxu0 0.0
        %3999 = vmatpush1.msra.mxu0 1.0
        %4000 = vmatprep.subr.mxu0 0.0
        %4001 = vmatpush1.msra.mxu0 1.0
        %4002 = vmatprep.subr.mxu0 0.0
        %4003 = vmatpush1.msra.mxu0 1.0
        %4004 = vmatprep.subr.mxu0 0.0
        %4005 = vmatpush1.msra.mxu0 1.0
        %4006 = vmatprep.subr.mxu0 0.0
        %4007 = vmatpush1.msra.mxu0 1.0
        %4008 = vmatprep.subr.mxu0 0.0
        %4009 = vmatpush1.msra.mxu0 1.0
        %4010 = vmatprep.subr.mxu0 0.0
        %4011 = vmatpush2.msra.mxu0 0.0
        %4012 = vmatprep.subr.mxu0 0.0
        %4013 = vmatpush2.msra.mxu0 0.0
        %4014 = vmatprep.subr.mxu0 0.0
        %4015 = vmatpush2.msra.mxu0 0.0
        %4016 = vmatprep.subr.mxu0 0.0
        %4017 = vmatpush2.msra.mxu0 0.0
        %4018 = vmatprep.subr.mxu0 0.0
        %4019 = vmatpush2.msra.mxu0 0.0
        %4020 = vmatprep.subr.mxu0 0.0
        %4021 = vmatpush2.msra.mxu0 0.0
        %4022 = vmatprep.subr.mxu0 0.0
        %4023 = vmatpush2.msra.mxu0 0.0
        %4024 = vmatprep.subr.mxu0 0.0
        %4025 = vmatpush2.msra.mxu0 0.0
        %4026 = vmatprep.subr.mxu0 0.0
        %4027 = vmatpush2.msra.mxu0 0.0
        %4028 = vmatprep.subr.mxu0 0.0
        %4029 = vmatpush2.msra.mxu0 0.0
        %4030 = vmatprep.subr.mxu0 0.0
        %4031 = vmatpush2.msra.mxu0 0.0
        %4032 = vmatprep.subr.mxu0 0.0
        %4033 = vmatpush2.msra.mxu0 0.0
        %4034 = vmatprep.subr.mxu0 0.0
        %4035 = vmatpush2.msra.mxu0 0.0
        %4036 = vmatprep.subr.mxu0 0.0
        %4037 = vmatpush2.msra.mxu0 0.0
        %4038 = vmatprep.subr.mxu0 0.0
        %4039 = vmatpush2.msra.mxu0 0.0
        %4040 = vmatprep.subr.mxu0 0.0
        %4041 = vmatpush2.msra.mxu0 0.0
        %4042 = vmatprep.mubr.f32.mxu0 0.0
        %v4043 = vand.u32 %v3759, 4294901760
        %v4044 = vsub.f32 %v3759, %v4043
        %v4045 = vand.u32 %v4044, 4294901760
        %4046 = vmatmul.mubr.f32.gmra.mxu0 %v4045
        %v4047 = vpop.f32.mrf.mxu0
        %v4048 = vadd.f32 %v3975, %v4047
        %v4049 = vpop.f32.mrf.mxu0
        %4050 = vdwg.mxu0
        %4051 = vmatprep.subr.mxu0 0.0
        %4052 = vmatpush1.msra.mxu0 0.0
        %4053 = vmatprep.subr.mxu0 0.0
        %4054 = vmatpush1.msra.mxu0 0.0
        %4055 = vmatprep.subr.mxu0 0.0
        %4056 = vmatpush1.msra.mxu0 0.0
        %4057 = vmatprep.subr.mxu0 0.0
        %4058 = vmatpush1.msra.mxu0 0.0
        %4059 = vmatprep.subr.mxu0 0.0
        %4060 = vmatpush1.msra.mxu0 0.0
        %4061 = vmatprep.subr.mxu0 0.0
        %4062 = vmatpush1.msra.mxu0 0.0
        %4063 = vmatprep.subr.mxu0 0.0
        %4064 = vmatpush1.msra.mxu0 0.0
        %4065 = vmatprep.subr.mxu0 0.0
        %4066 = vmatpush1.msra.mxu0 0.0
        %4067 = vmatprep.subr.mxu0 0.0
        %4068 = vmatpush1.msra.mxu0 0.0
        %4069 = vmatprep.subr.mxu0 0.0
        %4070 = vmatpush1.msra.mxu0 0.0
        %4071 = vmatprep.subr.mxu0 0.0
        %4072 = vmatpush1.msra.mxu0 0.0
        %4073 = vmatprep.subr.mxu0 0.0
        %4074 = vmatpush1.msra.mxu0 0.0
        %4075 = vmatprep.subr.mxu0 0.0
        %4076 = vmatpush1.msra.mxu0 0.0
        %4077 = vmatprep.subr.mxu0 0.0
        %4078 = vmatpush1.msra.mxu0 0.0
        %4079 = vmatprep.subr.mxu0 0.0
        %4080 = vmatpush1.msra.mxu0 0.0
        %4081 = vmatprep.subr.mxu0 0.0
        %4082 = vmatpush1.msra.mxu0 0.0
        %4083 = vmatprep.subr.mxu0 0.0
        %4084 = vmatpush2.msra.mxu0 0.0
        %4085 = vmatprep.subr.mxu0 0.0
        %4086 = vmatpush2.msra.mxu0 0.0
        %4087 = vmatprep.subr.mxu0 0.0
        %4088 = vmatpush2.msra.mxu0 0.0
        %4089 = vmatprep.subr.mxu0 0.0
        %4090 = vmatpush2.msra.mxu0 0.0
        %4091 = vmatprep.subr.mxu0 0.0
        %4092 = vmatpush2.msra.mxu0 0.0
        %4093 = vmatprep.subr.mxu0 0.0
        %4094 = vmatpush2.msra.mxu0 0.0
        %4095 = vmatprep.subr.mxu0 0.0
        %4096 = vmatpush2.msra.mxu0 0.0
        %4097 = vmatprep.subr.mxu0 0.0
        %4098 = vmatpush2.msra.mxu0 0.0
        %4099 = vmatprep.subr.mxu0 0.0
        %4100 = vmatpush2.msra.mxu0 0.0
        %4101 = vmatprep.subr.mxu0 0.0
        %4102 = vmatpush2.msra.mxu0 0.0
        %4103 = vmatprep.subr.mxu0 0.0
        %4104 = vmatpush2.msra.mxu0 0.0
        %4105 = vmatprep.subr.mxu0 0.0
        %4106 = vmatpush2.msra.mxu0 0.0
        %4107 = vmatprep.subr.mxu0 0.0
        %4108 = vmatpush2.msra.mxu0 0.0
        %4109 = vmatprep.subr.mxu0 0.0
        %4110 = vmatpush2.msra.mxu0 0.0
        %4111 = vmatprep.subr.mxu0 0.0
        %4112 = vmatpush2.msra.mxu0 0.0
        %4113 = vmatprep.subr.mxu0 0.0
        %4114 = vmatpush2.msra.mxu0 0.0
        %4115 = vmatprep.mubr.f32.mxu0 0.0
        %v4116 = vand.u32 %v3759, 4294901760
        %4117 = vmatmul.mubr.f32.gmra.mxu0 %v4116
        %v4118 = vpop.f32.mrf.mxu0
        %v4119 = vadd.f32 %v4048, %v4118
        %v4120 = vpop.f32.mrf.mxu0
        %4121 = vdwg.mxu0
        %4122 = vmatprep.subr.mxu0 0.0
        %4123 = vmatpush1.msra.mxu0 1.0
        %4124 = vmatprep.subr.mxu0 0.0
        %4125 = vmatpush1.msra.mxu0 1.0
        %4126 = vmatprep.subr.mxu0 0.0
        %4127 = vmatpush1.msra.mxu0 1.0
        %4128 = vmatprep.subr.mxu0 0.0
        %4129 = vmatpush1.msra.mxu0 1.0
        %4130 = vmatprep.subr.mxu0 0.0
        %4131 = vmatpush1.msra.mxu0 1.0
        %4132 = vmatprep.subr.mxu0 0.0
        %4133 = vmatpush1.msra.mxu0 1.0
        %4134 = vmatprep.subr.mxu0 0.0
        %4135 = vmatpush1.msra.mxu0 1.0
        %4136 = vmatprep.subr.mxu0 0.0
        %4137 = vmatpush1.msra.mxu0 1.0
        %4138 = vmatprep.subr.mxu0 0.0
        %4139 = vmatpush1.msra.mxu0 1.0
        %4140 = vmatprep.subr.mxu0 0.0
        %4141 = vmatpush1.msra.mxu0 1.0
        %4142 = vmatprep.subr.mxu0 0.0
        %4143 = vmatpush1.msra.mxu0 1.0
        %4144 = vmatprep.subr.mxu0 0.0
        %4145 = vmatpush1.msra.mxu0 1.0
        %4146 = vmatprep.subr.mxu0 0.0
        %4147 = vmatpush1.msra.mxu0 1.0
        %4148 = vmatprep.subr.mxu0 0.0
        %4149 = vmatpush1.msra.mxu0 1.0
        %4150 = vmatprep.subr.mxu0 0.0
        %4151 = vmatpush1.msra.mxu0 1.0
        %4152 = vmatprep.subr.mxu0 0.0
        %4153 = vmatpush1.msra.mxu0 1.0
        %4154 = vmatprep.subr.mxu0 0.0
        %4155 = vmatpush2.msra.mxu0 0.0
        %4156 = vmatprep.subr.mxu0 0.0
        %4157 = vmatpush2.msra.mxu0 0.0
        %4158 = vmatprep.subr.mxu0 0.0
        %4159 = vmatpush2.msra.mxu0 0.0
        %4160 = vmatprep.subr.mxu0 0.0
        %4161 = vmatpush2.msra.mxu0 0.0
        %4162 = vmatprep.subr.mxu0 0.0
        %4163 = vmatpush2.msra.mxu0 0.0
        %4164 = vmatprep.subr.mxu0 0.0
        %4165 = vmatpush2.msra.mxu0 0.0
        %4166 = vmatprep.subr.mxu0 0.0
        %4167 = vmatpush2.msra.mxu0 0.0
        %4168 = vmatprep.subr.mxu0 0.0
        %4169 = vmatpush2.msra.mxu0 0.0
        %4170 = vmatprep.subr.mxu0 0.0
        %4171 = vmatpush2.msra.mxu0 0.0
        %4172 = vmatprep.subr.mxu0 0.0
        %4173 = vmatpush2.msra.mxu0 0.0
        %4174 = vmatprep.subr.mxu0 0.0
        %4175 = vmatpush2.msra.mxu0 0.0
        %4176 = vmatprep.subr.mxu0 0.0
        %4177 = vmatpush2.msra.mxu0 0.0
        %4178 = vmatprep.subr.mxu0 0.0
        %4179 = vmatpush2.msra.mxu0 0.0
        %4180 = vmatprep.subr.mxu0 0.0
        %4181 = vmatpush2.msra.mxu0 0.0
        %4182 = vmatprep.subr.mxu0 0.0
        %4183 = vmatpush2.msra.mxu0 0.0
        %4184 = vmatprep.subr.mxu0 0.0
        %4185 = vmatpush2.msra.mxu0 0.0
        %4186 = vmatprep.mubr.f32.mxu0 0.0
        %v4187 = vand.u32 %v3759, 4294901760
        %4188 = vmatmul.mubr.f32.gmra.mxu0 %v4187
        %v4189 = vpop.f32.mrf.mxu0
        %v4190 = vadd.f32 %v4119, %v4189
        %v4191 = vpop.f32.mrf.mxu0
        %4192 = vdwg.mxu0
        %v4193 = vmul.f32 %v695, %v3758
        %v4194 = vmul.f32 %v4190, %v4193
        %v4195 = vmul.f32 %v4194, 1.442695
        %v4196 = vpow.pop %v4195
        %v4197 = vadd.f32 %v3321, %v4196
        %v4198 = vld [vmem:[%s222 + $0x18] sm:$0xff]
        %v4199 = vmul.f32 %v4198, %v4198
        %4200 = vmatprep.subr.mxu0 0.0
        %4201 = vmatpush1.msra.mxu0 1.0
        %4202 = vmatprep.subr.mxu0 0.0
        %4203 = vmatpush1.msra.mxu0 1.0
        %4204 = vmatprep.subr.mxu0 0.0
        %4205 = vmatpush1.msra.mxu0 1.0
        %4206 = vmatprep.subr.mxu0 0.0
        %4207 = vmatpush1.msra.mxu0 1.0
        %4208 = vmatprep.subr.mxu0 0.0
        %4209 = vmatpush1.msra.mxu0 1.0
        %4210 = vmatprep.subr.mxu0 0.0
        %4211 = vmatpush1.msra.mxu0 1.0
        %4212 = vmatprep.subr.mxu0 0.0
        %4213 = vmatpush1.msra.mxu0 1.0
        %4214 = vmatprep.subr.mxu0 0.0
        %4215 = vmatpush1.msra.mxu0 1.0
        %4216 = vmatprep.subr.mxu0 0.0
        %4217 = vmatpush1.msra.mxu0 1.0
        %4218 = vmatprep.subr.mxu0 0.0
        %4219 = vmatpush1.msra.mxu0 1.0
        %4220 = vmatprep.subr.mxu0 0.0
        %4221 = vmatpush1.msra.mxu0 1.0
        %4222 = vmatprep.subr.mxu0 0.0
        %4223 = vmatpush1.msra.mxu0 1.0
        %4224 = vmatprep.subr.mxu0 0.0
        %4225 = vmatpush1.msra.mxu0 1.0
        %4226 = vmatprep.subr.mxu0 0.0
        %4227 = vmatpush1.msra.mxu0 1.0
        %4228 = vmatprep.subr.mxu0 0.0
        %4229 = vmatpush1.msra.mxu0 1.0
        %4230 = vmatprep.subr.mxu0 0.0
        %4231 = vmatpush1.msra.mxu0 1.0
        %4232 = vmatprep.subr.mxu0 0.0
        %4233 = vmatpush2.msra.mxu0 0.0
        %4234 = vmatprep.subr.mxu0 0.0
        %4235 = vmatpush2.msra.mxu0 0.0
        %4236 = vmatprep.subr.mxu0 0.0
        %4237 = vmatpush2.msra.mxu0 0.0
        %4238 = vmatprep.subr.mxu0 0.0
        %4239 = vmatpush2.msra.mxu0 0.0
        %4240 = vmatprep.subr.mxu0 0.0
        %4241 = vmatpush2.msra.mxu0 0.0
        %4242 = vmatprep.subr.mxu0 0.0
        %4243 = vmatpush2.msra.mxu0 0.0
        %4244 = vmatprep.subr.mxu0 0.0
        %4245 = vmatpush2.msra.mxu0 0.0
        %4246 = vmatprep.subr.mxu0 0.0
        %4247 = vmatpush2.msra.mxu0 0.0
        %4248 = vmatprep.subr.mxu0 0.0
        %4249 = vmatpush2.msra.mxu0 0.0
        %4250 = vmatprep.subr.mxu0 0.0
        %4251 = vmatpush2.msra.mxu0 0.0
        %4252 = vmatprep.subr.mxu0 0.0
        %4253 = vmatpush2.msra.mxu0 0.0
        %4254 = vmatprep.subr.mxu0 0.0
        %4255 = vmatpush2.msra.mxu0 0.0
        %4256 = vmatprep.subr.mxu0 0.0
        %4257 = vmatpush2.msra.mxu0 0.0
        %4258 = vmatprep.subr.mxu0 0.0
        %4259 = vmatpush2.msra.mxu0 0.0
        %4260 = vmatprep.subr.mxu0 0.0
        %4261 = vmatpush2.msra.mxu0 0.0
        %4262 = vmatprep.subr.mxu0 0.0
        %4263 = vmatpush2.msra.mxu0 0.0
        %4264 = vmatprep.mubr.f32.mxu0 0.0
        %v4265 = vand.u32 %v4199, 4294901760
        %v4266 = vsub.f32 %v4199, %v4265
        %v4267 = vand.u32 %v4266, 4294901760
        %v4268 = vsub.f32 %v4266, %v4267
        %v4269 = vand.u32 %v4268, 4294901760
        %4270 = vmatmul.mubr.f32.gmra.mxu0 %v4269
        %v4271 = vpop.f32.mrf.mxu0
        %v4272 = vadd.f32 0.0, %v4271
        %v4273 = vpop.f32.mrf.mxu0
        %4274 = vdwg.mxu0
        %4275 = vmatprep.subr.mxu0 0.0
        %4276 = vmatpush1.msra.mxu0 0.0
        %4277 = vmatprep.subr.mxu0 0.0
        %4278 = vmatpush1.msra.mxu0 0.0
        %4279 = vmatprep.subr.mxu0 0.0
        %4280 = vmatpush1.msra.mxu0 0.0
        %4281 = vmatprep.subr.mxu0 0.0
        %4282 = vmatpush1.msra.mxu0 0.0
        %4283 = vmatprep.subr.mxu0 0.0
        %4284 = vmatpush1.msra.mxu0 0.0
        %4285 = vmatprep.subr.mxu0 0.0
        %4286 = vmatpush1.msra.mxu0 0.0
        %4287 = vmatprep.subr.mxu0 0.0
        %4288 = vmatpush1.msra.mxu0 0.0
        %4289 = vmatprep.subr.mxu0 0.0
        %4290 = vmatpush1.msra.mxu0 0.0
        %4291 = vmatprep.subr.mxu0 0.0
        %4292 = vmatpush1.msra.mxu0 0.0
        %4293 = vmatprep.subr.mxu0 0.0
        %4294 = vmatpush1.msra.mxu0 0.0
        %4295 = vmatprep.subr.mxu0 0.0
        %4296 = vmatpush1.msra.mxu0 0.0
        %4297 = vmatprep.subr.mxu0 0.0
        %4298 = vmatpush1.msra.mxu0 0.0
        %4299 = vmatprep.subr.mxu0 0.0
        %4300 = vmatpush1.msra.mxu0 0.0
        %4301 = vmatprep.subr.mxu0 0.0
        %4302 = vmatpush1.msra.mxu0 0.0
        %4303 = vmatprep.subr.mxu0 0.0
        %4304 = vmatpush1.msra.mxu0 0.0
        %4305 = vmatprep.subr.mxu0 0.0
        %4306 = vmatpush1.msra.mxu0 0.0
        %4307 = vmatprep.subr.mxu0 0.0
        %4308 = vmatpush2.msra.mxu0 0.0
        %4309 = vmatprep.subr.mxu0 0.0
        %4310 = vmatpush2.msra.mxu0 0.0
        %4311 = vmatprep.subr.mxu0 0.0
        %4312 = vmatpush2.msra.mxu0 0.0
        %4313 = vmatprep.subr.mxu0 0.0
        %4314 = vmatpush2.msra.mxu0 0.0
        %4315 = vmatprep.subr.mxu0 0.0
        %4316 = vmatpush2.msra.mxu0 0.0
        %4317 = vmatprep.subr.mxu0 0.0
        %4318 = vmatpush2.msra.mxu0 0.0
        %4319 = vmatprep.subr.mxu0 0.0
        %4320 = vmatpush2.msra.mxu0 0.0
        %4321 = vmatprep.subr.mxu0 0.0
        %4322 = vmatpush2.msra.mxu0 0.0
        %4323 = vmatprep.subr.mxu0 0.0
        %4324 = vmatpush2.msra.mxu0 0.0
        %4325 = vmatprep.subr.mxu0 0.0
        %4326 = vmatpush2.msra.mxu0 0.0
        %4327 = vmatprep.subr.mxu0 0.0
        %4328 = vmatpush2.msra.mxu0 0.0
        %4329 = vmatprep.subr.mxu0 0.0
        %4330 = vmatpush2.msra.mxu0 0.0
        %4331 = vmatprep.subr.mxu0 0.0
        %4332 = vmatpush2.msra.mxu0 0.0
        %4333 = vmatprep.subr.mxu0 0.0
        %4334 = vmatpush2.msra.mxu0 0.0
        %4335 = vmatprep.subr.mxu0 0.0
        %4336 = vmatpush2.msra.mxu0 0.0
        %4337 = vmatprep.subr.mxu0 0.0
        %4338 = vmatpush2.msra.mxu0 0.0
        %4339 = vmatprep.mubr.f32.mxu0 0.0
        %v4340 = vand.u32 %v4199, 4294901760
        %4341 = vmatmul.mubr.f32.gmra.mxu0 %v4340
        %v4342 = vpop.f32.mrf.mxu0
        %v4343 = vadd.f32 %v4272, %v4342
        %v4344 = vpop.f32.mrf.mxu0
        %4345 = vdwg.mxu0
        %4346 = vmatprep.subr.mxu0 0.0
        %4347 = vmatpush1.msra.mxu0 0.0
        %4348 = vmatprep.subr.mxu0 0.0
        %4349 = vmatpush1.msra.mxu0 0.0
        %4350 = vmatprep.subr.mxu0 0.0
        %4351 = vmatpush1.msra.mxu0 0.0
        %4352 = vmatprep.subr.mxu0 0.0
        %4353 = vmatpush1.msra.mxu0 0.0
        %4354 = vmatprep.subr.mxu0 0.0
        %4355 = vmatpush1.msra.mxu0 0.0
        %4356 = vmatprep.subr.mxu0 0.0
        %4357 = vmatpush1.msra.mxu0 0.0
        %4358 = vmatprep.subr.mxu0 0.0
        %4359 = vmatpush1.msra.mxu0 0.0
        %4360 = vmatprep.subr.mxu0 0.0
        %4361 = vmatpush1.msra.mxu0 0.0
        %4362 = vmatprep.subr.mxu0 0.0
        %4363 = vmatpush1.msra.mxu0 0.0
        %4364 = vmatprep.subr.mxu0 0.0
        %4365 = vmatpush1.msra.mxu0 0.0
        %4366 = vmatprep.subr.mxu0 0.0
        %4367 = vmatpush1.msra.mxu0 0.0
        %4368 = vmatprep.subr.mxu0 0.0
        %4369 = vmatpush1.msra.mxu0 0.0
        %4370 = vmatprep.subr.mxu0 0.0
        %4371 = vmatpush1.msra.mxu0 0.0
        %4372 = vmatprep.subr.mxu0 0.0
        %4373 = vmatpush1.msra.mxu0 0.0
        %4374 = vmatprep.subr.mxu0 0.0
        %4375 = vmatpush1.msra.mxu0 0.0
        %4376 = vmatprep.subr.mxu0 0.0
        %4377 = vmatpush1.msra.mxu0 0.0
        %4378 = vmatprep.subr.mxu0 0.0
        %4379 = vmatpush2.msra.mxu0 0.0
        %4380 = vmatprep.subr.mxu0 0.0
        %4381 = vmatpush2.msra.mxu0 0.0
        %4382 = vmatprep.subr.mxu0 0.0
        %4383 = vmatpush2.msra.mxu0 0.0
        %4384 = vmatprep.subr.mxu0 0.0
        %4385 = vmatpush2.msra.mxu0 0.0
        %4386 = vmatprep.subr.mxu0 0.0
        %4387 = vmatpush2.msra.mxu0 0.0
        %4388 = vmatprep.subr.mxu0 0.0
        %4389 = vmatpush2.msra.mxu0 0.0
        %4390 = vmatprep.subr.mxu0 0.0
        %4391 = vmatpush2.msra.mxu0 0.0
        %4392 = vmatprep.subr.mxu0 0.0
        %4393 = vmatpush2.msra.mxu0 0.0
        %4394 = vmatprep.subr.mxu0 0.0
        %4395 = vmatpush2.msra.mxu0 0.0
        %4396 = vmatprep.subr.mxu0 0.0
        %4397 = vmatpush2.msra.mxu0 0.0
        %4398 = vmatprep.subr.mxu0 0.0
        %4399 = vmatpush2.msra.mxu0 0.0
        %4400 = vmatprep.subr.mxu0 0.0
        %4401 = vmatpush2.msra.mxu0 0.0
        %4402 = vmatprep.subr.mxu0 0.0
        %4403 = vmatpush2.msra.mxu0 0.0
        %4404 = vmatprep.subr.mxu0 0.0
        %4405 = vmatpush2.msra.mxu0 0.0
        %4406 = vmatprep.subr.mxu0 0.0
        %4407 = vmatpush2.msra.mxu0 0.0
        %4408 = vmatprep.subr.mxu0 0.0
        %4409 = vmatpush2.msra.mxu0 0.0
        %4410 = vmatprep.mubr.f32.mxu0 0.0
        %v4411 = vand.u32 %v4199, 4294901760
        %v4412 = vsub.f32 %v4199, %v4411
        %4413 = vmatmul.mubr.f32.gmra.mxu0 %v4412
        %v4414 = vpop.f32.mrf.mxu0
        %v4415 = vadd.f32 %v4343, %v4414
        %v4416 = vpop.f32.mrf.mxu0
        %4417 = vdwg.mxu0
        %4418 = vmatprep.subr.mxu0 0.0
        %4419 = vmatpush1.msra.mxu0 1.0
        %4420 = vmatprep.subr.mxu0 0.0
        %4421 = vmatpush1.msra.mxu0 1.0
        %4422 = vmatprep.subr.mxu0 0.0
        %4423 = vmatpush1.msra.mxu0 1.0
        %4424 = vmatprep.subr.mxu0 0.0
        %4425 = vmatpush1.msra.mxu0 1.0
        %4426 = vmatprep.subr.mxu0 0.0
        %4427 = vmatpush1.msra.mxu0 1.0
        %4428 = vmatprep.subr.mxu0 0.0
        %4429 = vmatpush1.msra.mxu0 1.0
        %4430 = vmatprep.subr.mxu0 0.0
        %4431 = vmatpush1.msra.mxu0 1.0
        %4432 = vmatprep.subr.mxu0 0.0
        %4433 = vmatpush1.msra.mxu0 1.0
        %4434 = vmatprep.subr.mxu0 0.0
        %4435 = vmatpush1.msra.mxu0 1.0
        %4436 = vmatprep.subr.mxu0 0.0
        %4437 = vmatpush1.msra.mxu0 1.0
        %4438 = vmatprep.subr.mxu0 0.0
        %4439 = vmatpush1.msra.mxu0 1.0
        %4440 = vmatprep.subr.mxu0 0.0
        %4441 = vmatpush1.msra.mxu0 1.0
        %4442 = vmatprep.subr.mxu0 0.0
        %4443 = vmatpush1.msra.mxu0 1.0
        %4444 = vmatprep.subr.mxu0 0.0
        %4445 = vmatpush1.msra.mxu0 1.0
        %4446 = vmatprep.subr.mxu0 0.0
        %4447 = vmatpush1.msra.mxu0 1.0
        %4448 = vmatprep.subr.mxu0 0.0
        %4449 = vmatpush1.msra.mxu0 1.0
        %4450 = vmatprep.subr.mxu0 0.0
        %4451 = vmatpush2.msra.mxu0 0.0
        %4452 = vmatprep.subr.mxu0 0.0
        %4453 = vmatpush2.msra.mxu0 0.0
        %4454 = vmatprep.subr.mxu0 0.0
        %4455 = vmatpush2.msra.mxu0 0.0
        %4456 = vmatprep.subr.mxu0 0.0
        %4457 = vmatpush2.msra.mxu0 0.0
        %4458 = vmatprep.subr.mxu0 0.0
        %4459 = vmatpush2.msra.mxu0 0.0
        %4460 = vmatprep.subr.mxu0 0.0
        %4461 = vmatpush2.msra.mxu0 0.0
        %4462 = vmatprep.subr.mxu0 0.0
        %4463 = vmatpush2.msra.mxu0 0.0
        %4464 = vmatprep.subr.mxu0 0.0
        %4465 = vmatpush2.msra.mxu0 0.0
        %4466 = vmatprep.subr.mxu0 0.0
        %4467 = vmatpush2.msra.mxu0 0.0
        %4468 = vmatprep.subr.mxu0 0.0
        %4469 = vmatpush2.msra.mxu0 0.0
        %4470 = vmatprep.subr.mxu0 0.0
        %4471 = vmatpush2.msra.mxu0 0.0
        %4472 = vmatprep.subr.mxu0 0.0
        %4473 = vmatpush2.msra.mxu0 0.0
        %4474 = vmatprep.subr.mxu0 0.0
        %4475 = vmatpush2.msra.mxu0 0.0
        %4476 = vmatprep.subr.mxu0 0.0
        %4477 = vmatpush2.msra.mxu0 0.0
        %4478 = vmatprep.subr.mxu0 0.0
        %4479 = vmatpush2.msra.mxu0 0.0
        %4480 = vmatprep.subr.mxu0 0.0
        %4481 = vmatpush2.msra.mxu0 0.0
        %4482 = vmatprep.mubr.f32.mxu0 0.0
        %v4483 = vand.u32 %v4199, 4294901760
        %v4484 = vsub.f32 %v4199, %v4483
        %v4485 = vand.u32 %v4484, 4294901760
        %4486 = vmatmul.mubr.f32.gmra.mxu0 %v4485
        %v4487 = vpop.f32.mrf.mxu0
        %v4488 = vadd.f32 %v4415, %v4487
        %v4489 = vpop.f32.mrf.mxu0
        %4490 = vdwg.mxu0
        %4491 = vmatprep.subr.mxu0 0.0
        %4492 = vmatpush1.msra.mxu0 0.0
        %4493 = vmatprep.subr.mxu0 0.0
        %4494 = vmatpush1.msra.mxu0 0.0
        %4495 = vmatprep.subr.mxu0 0.0
        %4496 = vmatpush1.msra.mxu0 0.0
        %4497 = vmatprep.subr.mxu0 0.0
        %4498 = vmatpush1.msra.mxu0 0.0
        %4499 = vmatprep.subr.mxu0 0.0
        %4500 = vmatpush1.msra.mxu0 0.0
        %4501 = vmatprep.subr.mxu0 0.0
        %4502 = vmatpush1.msra.mxu0 0.0
        %4503 = vmatprep.subr.mxu0 0.0
        %4504 = vmatpush1.msra.mxu0 0.0
        %4505 = vmatprep.subr.mxu0 0.0
        %4506 = vmatpush1.msra.mxu0 0.0
        %4507 = vmatprep.subr.mxu0 0.0
        %4508 = vmatpush1.msra.mxu0 0.0
        %4509 = vmatprep.subr.mxu0 0.0
        %4510 = vmatpush1.msra.mxu0 0.0
        %4511 = vmatprep.subr.mxu0 0.0
        %4512 = vmatpush1.msra.mxu0 0.0
        %4513 = vmatprep.subr.mxu0 0.0
        %4514 = vmatpush1.msra.mxu0 0.0
        %4515 = vmatprep.subr.mxu0 0.0
        %4516 = vmatpush1.msra.mxu0 0.0
        %4517 = vmatprep.subr.mxu0 0.0
        %4518 = vmatpush1.msra.mxu0 0.0
        %4519 = vmatprep.subr.mxu0 0.0
        %4520 = vmatpush1.msra.mxu0 0.0
        %4521 = vmatprep.subr.mxu0 0.0
        %4522 = vmatpush1.msra.mxu0 0.0
        %4523 = vmatprep.subr.mxu0 0.0
        %4524 = vmatpush2.msra.mxu0 0.0
        %4525 = vmatprep.subr.mxu0 0.0
        %4526 = vmatpush2.msra.mxu0 0.0
        %4527 = vmatprep.subr.mxu0 0.0
        %4528 = vmatpush2.msra.mxu0 0.0
        %4529 = vmatprep.subr.mxu0 0.0
        %4530 = vmatpush2.msra.mxu0 0.0
        %4531 = vmatprep.subr.mxu0 0.0
        %4532 = vmatpush2.msra.mxu0 0.0
        %4533 = vmatprep.subr.mxu0 0.0
        %4534 = vmatpush2.msra.mxu0 0.0
        %4535 = vmatprep.subr.mxu0 0.0
        %4536 = vmatpush2.msra.mxu0 0.0
        %4537 = vmatprep.subr.mxu0 0.0
        %4538 = vmatpush2.msra.mxu0 0.0
        %4539 = vmatprep.subr.mxu0 0.0
        %4540 = vmatpush2.msra.mxu0 0.0
        %4541 = vmatprep.subr.mxu0 0.0
        %4542 = vmatpush2.msra.mxu0 0.0
        %4543 = vmatprep.subr.mxu0 0.0
        %4544 = vmatpush2.msra.mxu0 0.0
        %4545 = vmatprep.subr.mxu0 0.0
        %4546 = vmatpush2.msra.mxu0 0.0
        %4547 = vmatprep.subr.mxu0 0.0
        %4548 = vmatpush2.msra.mxu0 0.0
        %4549 = vmatprep.subr.mxu0 0.0
        %4550 = vmatpush2.msra.mxu0 0.0
        %4551 = vmatprep.subr.mxu0 0.0
        %4552 = vmatpush2.msra.mxu0 0.0
        %4553 = vmatprep.subr.mxu0 0.0
        %4554 = vmatpush2.msra.mxu0 0.0
        %4555 = vmatprep.mubr.f32.mxu0 0.0
        %v4556 = vand.u32 %v4199, 4294901760
        %4557 = vmatmul.mubr.f32.gmra.mxu0 %v4556
        %v4558 = vpop.f32.mrf.mxu0
        %v4559 = vadd.f32 %v4488, %v4558
        %v4560 = vpop.f32.mrf.mxu0
        %4561 = vdwg.mxu0
        %4562 = vmatprep.subr.mxu0 0.0
        %4563 = vmatpush1.msra.mxu0 1.0
        %4564 = vmatprep.subr.mxu0 0.0
        %4565 = vmatpush1.msra.mxu0 1.0
        %4566 = vmatprep.subr.mxu0 0.0
        %4567 = vmatpush1.msra.mxu0 1.0
        %4568 = vmatprep.subr.mxu0 0.0
        %4569 = vmatpush1.msra.mxu0 1.0
        %4570 = vmatprep.subr.mxu0 0.0
        %4571 = vmatpush1.msra.mxu0 1.0
        %4572 = vmatprep.subr.mxu0 0.0
        %4573 = vmatpush1.msra.mxu0 1.0
        %4574 = vmatprep.subr.mxu0 0.0
        %4575 = vmatpush1.msra.mxu0 1.0
        %4576 = vmatprep.subr.mxu0 0.0
        %4577 = vmatpush1.msra.mxu0 1.0
        %4578 = vmatprep.subr.mxu0 0.0
        %4579 = vmatpush1.msra.mxu0 1.0
        %4580 = vmatprep.subr.mxu0 0.0
        %4581 = vmatpush1.msra.mxu0 1.0
        %4582 = vmatprep.subr.mxu0 0.0
        %4583 = vmatpush1.msra.mxu0 1.0
        %4584 = vmatprep.subr.mxu0 0.0
        %4585 = vmatpush1.msra.mxu0 1.0
        %4586 = vmatprep.subr.mxu0 0.0
        %4587 = vmatpush1.msra.mxu0 1.0
        %4588 = vmatprep.subr.mxu0 0.0
        %4589 = vmatpush1.msra.mxu0 1.0
        %4590 = vmatprep.subr.mxu0 0.0
        %4591 = vmatpush1.msra.mxu0 1.0
        %4592 = vmatprep.subr.mxu0 0.0
        %4593 = vmatpush1.msra.mxu0 1.0
        %4594 = vmatprep.subr.mxu0 0.0
        %4595 = vmatpush2.msra.mxu0 0.0
        %4596 = vmatprep.subr.mxu0 0.0
        %4597 = vmatpush2.msra.mxu0 0.0
        %4598 = vmatprep.subr.mxu0 0.0
        %4599 = vmatpush2.msra.mxu0 0.0
        %4600 = vmatprep.subr.mxu0 0.0
        %4601 = vmatpush2.msra.mxu0 0.0
        %4602 = vmatprep.subr.mxu0 0.0
        %4603 = vmatpush2.msra.mxu0 0.0
        %4604 = vmatprep.subr.mxu0 0.0
        %4605 = vmatpush2.msra.mxu0 0.0
        %4606 = vmatprep.subr.mxu0 0.0
        %4607 = vmatpush2.msra.mxu0 0.0
        %4608 = vmatprep.subr.mxu0 0.0
        %4609 = vmatpush2.msra.mxu0 0.0
        %4610 = vmatprep.subr.mxu0 0.0
        %4611 = vmatpush2.msra.mxu0 0.0
        %4612 = vmatprep.subr.mxu0 0.0
        %4613 = vmatpush2.msra.mxu0 0.0
        %4614 = vmatprep.subr.mxu0 0.0
        %4615 = vmatpush2.msra.mxu0 0.0
        %4616 = vmatprep.subr.mxu0 0.0
        %4617 = vmatpush2.msra.mxu0 0.0
        %4618 = vmatprep.subr.mxu0 0.0
        %4619 = vmatpush2.msra.mxu0 0.0
        %4620 = vmatprep.subr.mxu0 0.0
        %4621 = vmatpush2.msra.mxu0 0.0
        %4622 = vmatprep.subr.mxu0 0.0
        %4623 = vmatpush2.msra.mxu0 0.0
        %4624 = vmatprep.subr.mxu0 0.0
        %4625 = vmatpush2.msra.mxu0 0.0
        %4626 = vmatprep.mubr.f32.mxu0 0.0
        %v4627 = vand.u32 %v4199, 4294901760
        %4628 = vmatmul.mubr.f32.gmra.mxu0 %v4627
        %v4629 = vpop.f32.mrf.mxu0
        %v4630 = vadd.f32 %v4559, %v4629
        %v4631 = vpop.f32.mrf.mxu0
        %4632 = vdwg.mxu0
        %v4633 = vrsqrt.pop %v4630
        %v4634 = vmin.f32 %v4633, 10000000.0
        %v4635 = vmul.f32 %v258, %v4198
        %4636 = vmatprep.subr.mxu0 0.0
        %4637 = vmatpush1.msra.mxu0 1.0
        %4638 = vmatprep.subr.mxu0 0.0
        %4639 = vmatpush1.msra.mxu0 1.0
        %4640 = vmatprep.subr.mxu0 0.0
        %4641 = vmatpush1.msra.mxu0 1.0
        %4642 = vmatprep.subr.mxu0 0.0
        %4643 = vmatpush1.msra.mxu0 1.0
        %4644 = vmatprep.subr.mxu0 0.0
        %4645 = vmatpush1.msra.mxu0 1.0
        %4646 = vmatprep.subr.mxu0 0.0
        %4647 = vmatpush1.msra.mxu0 1.0
        %4648 = vmatprep.subr.mxu0 0.0
        %4649 = vmatpush1.msra.mxu0 1.0
        %4650 = vmatprep.subr.mxu0 0.0
        %4651 = vmatpush1.msra.mxu0 1.0
        %4652 = vmatprep.subr.mxu0 0.0
        %4653 = vmatpush1.msra.mxu0 1.0
        %4654 = vmatprep.subr.mxu0 0.0
        %4655 = vmatpush1.msra.mxu0 1.0
        %4656 = vmatprep.subr.mxu0 0.0
        %4657 = vmatpush1.msra.mxu0 1.0
        %4658 = vmatprep.subr.mxu0 0.0
        %4659 = vmatpush1.msra.mxu0 1.0
        %4660 = vmatprep.subr.mxu0 0.0
        %4661 = vmatpush1.msra.mxu0 1.0
        %4662 = vmatprep.subr.mxu0 0.0
        %4663 = vmatpush1.msra.mxu0 1.0
        %4664 = vmatprep.subr.mxu0 0.0
        %4665 = vmatpush1.msra.mxu0 1.0
        %4666 = vmatprep.subr.mxu0 0.0
        %4667 = vmatpush1.msra.mxu0 1.0
        %4668 = vmatprep.subr.mxu0 0.0
        %4669 = vmatpush2.msra.mxu0 0.0
        %4670 = vmatprep.subr.mxu0 0.0
        %4671 = vmatpush2.msra.mxu0 0.0
        %4672 = vmatprep.subr.mxu0 0.0
        %4673 = vmatpush2.msra.mxu0 0.0
        %4674 = vmatprep.subr.mxu0 0.0
        %4675 = vmatpush2.msra.mxu0 0.0
        %4676 = vmatprep.subr.mxu0 0.0
        %4677 = vmatpush2.msra.mxu0 0.0
        %4678 = vmatprep.subr.mxu0 0.0
        %4679 = vmatpush2.msra.mxu0 0.0
        %4680 = vmatprep.subr.mxu0 0.0
        %4681 = vmatpush2.msra.mxu0 0.0
        %4682 = vmatprep.subr.mxu0 0.0
        %4683 = vmatpush2.msra.mxu0 0.0
        %4684 = vmatprep.subr.mxu0 0.0
        %4685 = vmatpush2.msra.mxu0 0.0
        %4686 = vmatprep.subr.mxu0 0.0
        %4687 = vmatpush2.msra.mxu0 0.0
        %4688 = vmatprep.subr.mxu0 0.0
        %4689 = vmatpush2.msra.mxu0 0.0
        %4690 = vmatprep.subr.mxu0 0.0
        %4691 = vmatpush2.msra.mxu0 0.0
        %4692 = vmatprep.subr.mxu0 0.0
        %4693 = vmatpush2.msra.mxu0 0.0
        %4694 = vmatprep.subr.mxu0 0.0
        %4695 = vmatpush2.msra.mxu0 0.0
        %4696 = vmatprep.subr.mxu0 0.0
        %4697 = vmatpush2.msra.mxu0 0.0
        %4698 = vmatprep.subr.mxu0 0.0
        %4699 = vmatpush2.msra.mxu0 0.0
        %4700 = vmatprep.mubr.f32.mxu0 0.0
        %v4701 = vand.u32 %v4635, 4294901760
        %v4702 = vsub.f32 %v4635, %v4701
        %v4703 = vand.u32 %v4702, 4294901760
        %v4704 = vsub.f32 %v4702, %v4703
        %v4705 = vand.u32 %v4704, 4294901760
        %4706 = vmatmul.mubr.f32.gmra.mxu0 %v4705
        %v4707 = vpop.f32.mrf.mxu0
        %v4708 = vadd.f32 0.0, %v4707
        %v4709 = vpop.f32.mrf.mxu0
        %4710 = vdwg.mxu0
        %4711 = vmatprep.subr.mxu0 0.0
        %4712 = vmatpush1.msra.mxu0 0.0
        %4713 = vmatprep.subr.mxu0 0.0
        %4714 = vmatpush1.msra.mxu0 0.0
        %4715 = vmatprep.subr.mxu0 0.0
        %4716 = vmatpush1.msra.mxu0 0.0
        %4717 = vmatprep.subr.mxu0 0.0
        %4718 = vmatpush1.msra.mxu0 0.0
        %4719 = vmatprep.subr.mxu0 0.0
        %4720 = vmatpush1.msra.mxu0 0.0
        %4721 = vmatprep.subr.mxu0 0.0
        %4722 = vmatpush1.msra.mxu0 0.0
        %4723 = vmatprep.subr.mxu0 0.0
        %4724 = vmatpush1.msra.mxu0 0.0
        %4725 = vmatprep.subr.mxu0 0.0
        %4726 = vmatpush1.msra.mxu0 0.0
        %4727 = vmatprep.subr.mxu0 0.0
        %4728 = vmatpush1.msra.mxu0 0.0
        %4729 = vmatprep.subr.mxu0 0.0
        %4730 = vmatpush1.msra.mxu0 0.0
        %4731 = vmatprep.subr.mxu0 0.0
        %4732 = vmatpush1.msra.mxu0 0.0
        %4733 = vmatprep.subr.mxu0 0.0
        %4734 = vmatpush1.msra.mxu0 0.0
        %4735 = vmatprep.subr.mxu0 0.0
        %4736 = vmatpush1.msra.mxu0 0.0
        %4737 = vmatprep.subr.mxu0 0.0
        %4738 = vmatpush1.msra.mxu0 0.0
        %4739 = vmatprep.subr.mxu0 0.0
        %4740 = vmatpush1.msra.mxu0 0.0
        %4741 = vmatprep.subr.mxu0 0.0
        %4742 = vmatpush1.msra.mxu0 0.0
        %4743 = vmatprep.subr.mxu0 0.0
        %4744 = vmatpush2.msra.mxu0 0.0
        %4745 = vmatprep.subr.mxu0 0.0
        %4746 = vmatpush2.msra.mxu0 0.0
        %4747 = vmatprep.subr.mxu0 0.0
        %4748 = vmatpush2.msra.mxu0 0.0
        %4749 = vmatprep.subr.mxu0 0.0
        %4750 = vmatpush2.msra.mxu0 0.0
        %4751 = vmatprep.subr.mxu0 0.0
        %4752 = vmatpush2.msra.mxu0 0.0
        %4753 = vmatprep.subr.mxu0 0.0
        %4754 = vmatpush2.msra.mxu0 0.0
        %4755 = vmatprep.subr.mxu0 0.0
        %4756 = vmatpush2.msra.mxu0 0.0
        %4757 = vmatprep.subr.mxu0 0.0
        %4758 = vmatpush2.msra.mxu0 0.0
        %4759 = vmatprep.subr.mxu0 0.0
        %4760 = vmatpush2.msra.mxu0 0.0
        %4761 = vmatprep.subr.mxu0 0.0
        %4762 = vmatpush2.msra.mxu0 0.0
        %4763 = vmatprep.subr.mxu0 0.0
        %4764 = vmatpush2.msra.mxu0 0.0
        %4765 = vmatprep.subr.mxu0 0.0
        %4766 = vmatpush2.msra.mxu0 0.0
        %4767 = vmatprep.subr.mxu0 0.0
        %4768 = vmatpush2.msra.mxu0 0.0
        %4769 = vmatprep.subr.mxu0 0.0
        %4770 = vmatpush2.msra.mxu0 0.0
        %4771 = vmatprep.subr.mxu0 0.0
        %4772 = vmatpush2.msra.mxu0 0.0
        %4773 = vmatprep.subr.mxu0 0.0
        %4774 = vmatpush2.msra.mxu0 0.0
        %4775 = vmatprep.mubr.f32.mxu0 0.0
        %v4776 = vand.u32 %v4635, 4294901760
        %4777 = vmatmul.mubr.f32.gmra.mxu0 %v4776
        %v4778 = vpop.f32.mrf.mxu0
        %v4779 = vadd.f32 %v4708, %v4778
        %v4780 = vpop.f32.mrf.mxu0
        %4781 = vdwg.mxu0
        %4782 = vmatprep.subr.mxu0 0.0
        %4783 = vmatpush1.msra.mxu0 0.0
        %4784 = vmatprep.subr.mxu0 0.0
        %4785 = vmatpush1.msra.mxu0 0.0
        %4786 = vmatprep.subr.mxu0 0.0
        %4787 = vmatpush1.msra.mxu0 0.0
        %4788 = vmatprep.subr.mxu0 0.0
        %4789 = vmatpush1.msra.mxu0 0.0
        %4790 = vmatprep.subr.mxu0 0.0
        %4791 = vmatpush1.msra.mxu0 0.0
        %4792 = vmatprep.subr.mxu0 0.0
        %4793 = vmatpush1.msra.mxu0 0.0
        %4794 = vmatprep.subr.mxu0 0.0
        %4795 = vmatpush1.msra.mxu0 0.0
        %4796 = vmatprep.subr.mxu0 0.0
        %4797 = vmatpush1.msra.mxu0 0.0
        %4798 = vmatprep.subr.mxu0 0.0
        %4799 = vmatpush1.msra.mxu0 0.0
        %4800 = vmatprep.subr.mxu0 0.0
        %4801 = vmatpush1.msra.mxu0 0.0
        %4802 = vmatprep.subr.mxu0 0.0
        %4803 = vmatpush1.msra.mxu0 0.0
        %4804 = vmatprep.subr.mxu0 0.0
        %4805 = vmatpush1.msra.mxu0 0.0
        %4806 = vmatprep.subr.mxu0 0.0
        %4807 = vmatpush1.msra.mxu0 0.0
        %4808 = vmatprep.subr.mxu0 0.0
        %4809 = vmatpush1.msra.mxu0 0.0
        %4810 = vmatprep.subr.mxu0 0.0
        %4811 = vmatpush1.msra.mxu0 0.0
        %4812 = vmatprep.subr.mxu0 0.0
        %4813 = vmatpush1.msra.mxu0 0.0
        %4814 = vmatprep.subr.mxu0 0.0
        %4815 = vmatpush2.msra.mxu0 0.0
        %4816 = vmatprep.subr.mxu0 0.0
        %4817 = vmatpush2.msra.mxu0 0.0
        %4818 = vmatprep.subr.mxu0 0.0
        %4819 = vmatpush2.msra.mxu0 0.0
        %4820 = vmatprep.subr.mxu0 0.0
        %4821 = vmatpush2.msra.mxu0 0.0
        %4822 = vmatprep.subr.mxu0 0.0
        %4823 = vmatpush2.msra.mxu0 0.0
        %4824 = vmatprep.subr.mxu0 0.0
        %4825 = vmatpush2.msra.mxu0 0.0
        %4826 = vmatprep.subr.mxu0 0.0
        %4827 = vmatpush2.msra.mxu0 0.0
        %4828 = vmatprep.subr.mxu0 0.0
        %4829 = vmatpush2.msra.mxu0 0.0
        %4830 = vmatprep.subr.mxu0 0.0
        %4831 = vmatpush2.msra.mxu0 0.0
        %4832 = vmatprep.subr.mxu0 0.0
        %4833 = vmatpush2.msra.mxu0 0.0
        %4834 = vmatprep.subr.mxu0 0.0
        %4835 = vmatpush2.msra.mxu0 0.0
        %4836 = vmatprep.subr.mxu0 0.0
        %4837 = vmatpush2.msra.mxu0 0.0
        %4838 = vmatprep.subr.mxu0 0.0
        %4839 = vmatpush2.msra.mxu0 0.0
        %4840 = vmatprep.subr.mxu0 0.0
        %4841 = vmatpush2.msra.mxu0 0.0
        %4842 = vmatprep.subr.mxu0 0.0
        %4843 = vmatpush2.msra.mxu0 0.0
        %4844 = vmatprep.subr.mxu0 0.0
        %4845 = vmatpush2.msra.mxu0 0.0
        %4846 = vmatprep.mubr.f32.mxu0 0.0
        %v4847 = vand.u32 %v4635, 4294901760
        %v4848 = vsub.f32 %v4635, %v4847
        %4849 = vmatmul.mubr.f32.gmra.mxu0 %v4848
        %v4850 = vpop.f32.mrf.mxu0
        %v4851 = vadd.f32 %v4779, %v4850
        %v4852 = vpop.f32.mrf.mxu0
        %4853 = vdwg.mxu0
        %4854 = vmatprep.subr.mxu0 0.0
        %4855 = vmatpush1.msra.mxu0 1.0
        %4856 = vmatprep.subr.mxu0 0.0
        %4857 = vmatpush1.msra.mxu0 1.0
        %4858 = vmatprep.subr.mxu0 0.0
        %4859 = vmatpush1.msra.mxu0 1.0
        %4860 = vmatprep.subr.mxu0 0.0
        %4861 = vmatpush1.msra.mxu0 1.0
        %4862 = vmatprep.subr.mxu0 0.0
        %4863 = vmatpush1.msra.mxu0 1.0
        %4864 = vmatprep.subr.mxu0 0.0
        %4865 = vmatpush1.msra.mxu0 1.0
        %4866 = vmatprep.subr.mxu0 0.0
        %4867 = vmatpush1.msra.mxu0 1.0
        %4868 = vmatprep.subr.mxu0 0.0
        %4869 = vmatpush1.msra.mxu0 1.0
        %4870 = vmatprep.subr.mxu0 0.0
        %4871 = vmatpush1.msra.mxu0 1.0
        %4872 = vmatprep.subr.mxu0 0.0
        %4873 = vmatpush1.msra.mxu0 1.0
        %4874 = vmatprep.subr.mxu0 0.0
        %4875 = vmatpush1.msra.mxu0 1.0
        %4876 = vmatprep.subr.mxu0 0.0
        %4877 = vmatpush1.msra.mxu0 1.0
        %4878 = vmatprep.subr.mxu0 0.0
        %4879 = vmatpush1.msra.mxu0 1.0
        %4880 = vmatprep.subr.mxu0 0.0
        %4881 = vmatpush1.msra.mxu0 1.0
        %4882 = vmatprep.subr.mxu0 0.0
        %4883 = vmatpush1.msra.mxu0 1.0
        %4884 = vmatprep.subr.mxu0 0.0
        %4885 = vmatpush1.msra.mxu0 1.0
        %4886 = vmatprep.subr.mxu0 0.0
        %4887 = vmatpush2.msra.mxu0 0.0
        %4888 = vmatprep.subr.mxu0 0.0
        %4889 = vmatpush2.msra.mxu0 0.0
        %4890 = vmatprep.subr.mxu0 0.0
        %4891 = vmatpush2.msra.mxu0 0.0
        %4892 = vmatprep.subr.mxu0 0.0
        %4893 = vmatpush2.msra.mxu0 0.0
        %4894 = vmatprep.subr.mxu0 0.0
        %4895 = vmatpush2.msra.mxu0 0.0
        %4896 = vmatprep.subr.mxu0 0.0
        %4897 = vmatpush2.msra.mxu0 0.0
        %4898 = vmatprep.subr.mxu0 0.0
        %4899 = vmatpush2.msra.mxu0 0.0
        %4900 = vmatprep.subr.mxu0 0.0
        %4901 = vmatpush2.msra.mxu0 0.0
        %4902 = vmatprep.subr.mxu0 0.0
        %4903 = vmatpush2.msra.mxu0 0.0
        %4904 = vmatprep.subr.mxu0 0.0
        %4905 = vmatpush2.msra.mxu0 0.0
        %4906 = vmatprep.subr.mxu0 0.0
        %4907 = vmatpush2.msra.mxu0 0.0
        %4908 = vmatprep.subr.mxu0 0.0
        %4909 = vmatpush2.msra.mxu0 0.0
        %4910 = vmatprep.subr.mxu0 0.0
        %4911 = vmatpush2.msra.mxu0 0.0
        %4912 = vmatprep.subr.mxu0 0.0
        %4913 = vmatpush2.msra.mxu0 0.0
        %4914 = vmatprep.subr.mxu0 0.0
        %4915 = vmatpush2.msra.mxu0 0.0
        %4916 = vmatprep.subr.mxu0 0.0
        %4917 = vmatpush2.msra.mxu0 0.0
        %4918 = vmatprep.mubr.f32.mxu0 0.0
        %v4919 = vand.u32 %v4635, 4294901760
        %v4920 = vsub.f32 %v4635, %v4919
        %v4921 = vand.u32 %v4920, 4294901760
        %4922 = vmatmul.mubr.f32.gmra.mxu0 %v4921
        %v4923 = vpop.f32.mrf.mxu0
        %v4924 = vadd.f32 %v4851, %v4923
        %v4925 = vpop.f32.mrf.mxu0
        %4926 = vdwg.mxu0
        %4927 = vmatprep.subr.mxu0 0.0
        %4928 = vmatpush1.msra.mxu0 0.0
        %4929 = vmatprep.subr.mxu0 0.0
        %4930 = vmatpush1.msra.mxu0 0.0
        %4931 = vmatprep.subr.mxu0 0.0
        %4932 = vmatpush1.msra.mxu0 0.0
        %4933 = vmatprep.subr.mxu0 0.0
        %4934 = vmatpush1.msra.mxu0 0.0
        %4935 = vmatprep.subr.mxu0 0.0
        %4936 = vmatpush1.msra.mxu0 0.0
        %4937 = vmatprep.subr.mxu0 0.0
        %4938 = vmatpush1.msra.mxu0 0.0
        %4939 = vmatprep.subr.mxu0 0.0
        %4940 = vmatpush1.msra.mxu0 0.0
        %4941 = vmatprep.subr.mxu0 0.0
        %4942 = vmatpush1.msra.mxu0 0.0
        %4943 = vmatprep.subr.mxu0 0.0
        %4944 = vmatpush1.msra.mxu0 0.0
        %4945 = vmatprep.subr.mxu0 0.0
        %4946 = vmatpush1.msra.mxu0 0.0
        %4947 = vmatprep.subr.mxu0 0.0
        %4948 = vmatpush1.msra.mxu0 0.0
        %4949 = vmatprep.subr.mxu0 0.0
        %4950 = vmatpush1.msra.mxu0 0.0
        %4951 = vmatprep.subr.mxu0 0.0
        %4952 = vmatpush1.msra.mxu0 0.0
        %4953 = vmatprep.subr.mxu0 0.0
        %4954 = vmatpush1.msra.mxu0 0.0
        %4955 = vmatprep.subr.mxu0 0.0
        %4956 = vmatpush1.msra.mxu0 0.0
        %4957 = vmatprep.subr.mxu0 0.0
        %4958 = vmatpush1.msra.mxu0 0.0
        %4959 = vmatprep.subr.mxu0 0.0
        %4960 = vmatpush2.msra.mxu0 0.0
        %4961 = vmatprep.subr.mxu0 0.0
        %4962 = vmatpush2.msra.mxu0 0.0
        %4963 = vmatprep.subr.mxu0 0.0
        %4964 = vmatpush2.msra.mxu0 0.0
        %4965 = vmatprep.subr.mxu0 0.0
        %4966 = vmatpush2.msra.mxu0 0.0
        %4967 = vmatprep.subr.mxu0 0.0
        %4968 = vmatpush2.msra.mxu0 0.0
        %4969 = vmatprep.subr.mxu0 0.0
        %4970 = vmatpush2.msra.mxu0 0.0
        %4971 = vmatprep.subr.mxu0 0.0
        %4972 = vmatpush2.msra.mxu0 0.0
        %4973 = vmatprep.subr.mxu0 0.0
        %4974 = vmatpush2.msra.mxu0 0.0
        %4975 = vmatprep.subr.mxu0 0.0
        %4976 = vmatpush2.msra.mxu0 0.0
        %4977 = vmatprep.subr.mxu0 0.0
        %4978 = vmatpush2.msra.mxu0 0.0
        %4979 = vmatprep.subr.mxu0 0.0
        %4980 = vmatpush2.msra.mxu0 0.0
        %4981 = vmatprep.subr.mxu0 0.0
        %4982 = vmatpush2.msra.mxu0 0.0
        %4983 = vmatprep.subr.mxu0 0.0
        %4984 = vmatpush2.msra.mxu0 0.0
        %4985 = vmatprep.subr.mxu0 0.0
        %4986 = vmatpush2.msra.mxu0 0.0
        %4987 = vmatprep.subr.mxu0 0.0
        %4988 = vmatpush2.msra.mxu0 0.0
        %4989 = vmatprep.subr.mxu0 0.0
        %4990 = vmatpush2.msra.mxu0 0.0
        %4991 = vmatprep.mubr.f32.mxu0 0.0
        %v4992 = vand.u32 %v4635, 4294901760
        %4993 = vmatmul.mubr.f32.gmra.mxu0 %v4992
        %v4994 = vpop.f32.mrf.mxu0
        %v4995 = vadd.f32 %v4924, %v4994
        %v4996 = vpop.f32.mrf.mxu0
        %4997 = vdwg.mxu0
        %4998 = vmatprep.subr.mxu0 0.0
        %4999 = vmatpush1.msra.mxu0 1.0
        %5000 = vmatprep.subr.mxu0 0.0
        %5001 = vmatpush1.msra.mxu0 1.0
        %5002 = vmatprep.subr.mxu0 0.0
        %5003 = vmatpush1.msra.mxu0 1.0
        %5004 = vmatprep.subr.mxu0 0.0
        %5005 = vmatpush1.msra.mxu0 1.0
        %5006 = vmatprep.subr.mxu0 0.0
        %5007 = vmatpush1.msra.mxu0 1.0
        %5008 = vmatprep.subr.mxu0 0.0
        %5009 = vmatpush1.msra.mxu0 1.0
        %5010 = vmatprep.subr.mxu0 0.0
        %5011 = vmatpush1.msra.mxu0 1.0
        %5012 = vmatprep.subr.mxu0 0.0
        %5013 = vmatpush1.msra.mxu0 1.0
        %5014 = vmatprep.subr.mxu0 0.0
        %5015 = vmatpush1.msra.mxu0 1.0
        %5016 = vmatprep.subr.mxu0 0.0
        %5017 = vmatpush1.msra.mxu0 1.0
        %5018 = vmatprep.subr.mxu0 0.0
        %5019 = vmatpush1.msra.mxu0 1.0
        %5020 = vmatprep.subr.mxu0 0.0
        %5021 = vmatpush1.msra.mxu0 1.0
        %5022 = vmatprep.subr.mxu0 0.0
        %5023 = vmatpush1.msra.mxu0 1.0
        %5024 = vmatprep.subr.mxu0 0.0
        %5025 = vmatpush1.msra.mxu0 1.0
        %5026 = vmatprep.subr.mxu0 0.0
        %5027 = vmatpush1.msra.mxu0 1.0
        %5028 = vmatprep.subr.mxu0 0.0
        %5029 = vmatpush1.msra.mxu0 1.0
        %5030 = vmatprep.subr.mxu0 0.0
        %5031 = vmatpush2.msra.mxu0 0.0
        %5032 = vmatprep.subr.mxu0 0.0
        %5033 = vmatpush2.msra.mxu0 0.0
        %5034 = vmatprep.subr.mxu0 0.0
        %5035 = vmatpush2.msra.mxu0 0.0
        %5036 = vmatprep.subr.mxu0 0.0
        %5037 = vmatpush2.msra.mxu0 0.0
        %5038 = vmatprep.subr.mxu0 0.0
        %5039 = vmatpush2.msra.mxu0 0.0
        %5040 = vmatprep.subr.mxu0 0.0
        %5041 = vmatpush2.msra.mxu0 0.0
        %5042 = vmatprep.subr.mxu0 0.0
        %5043 = vmatpush2.msra.mxu0 0.0
        %5044 = vmatprep.subr.mxu0 0.0
        %5045 = vmatpush2.msra.mxu0 0.0
        %5046 = vmatprep.subr.mxu0 0.0
        %5047 = vmatpush2.msra.mxu0 0.0
        %5048 = vmatprep.subr.mxu0 0.0
        %5049 = vmatpush2.msra.mxu0 0.0
        %5050 = vmatprep.subr.mxu0 0.0
        %5051 = vmatpush2.msra.mxu0 0.0
        %5052 = vmatprep.subr.mxu0 0.0
        %5053 = vmatpush2.msra.mxu0 0.0
        %5054 = vmatprep.subr.mxu0 0.0
        %5055 = vmatpush2.msra.mxu0 0.0
        %5056 = vmatprep.subr.mxu0 0.0
        %5057 = vmatpush2.msra.mxu0 0.0
        %5058 = vmatprep.subr.mxu0 0.0
        %5059 = vmatpush2.msra.mxu0 0.0
        %5060 = vmatprep.subr.mxu0 0.0
        %5061 = vmatpush2.msra.mxu0 0.0
        %5062 = vmatprep.mubr.f32.mxu0 0.0
        %v5063 = vand.u32 %v4635, 4294901760
        %5064 = vmatmul.mubr.f32.gmra.mxu0 %v5063
        %v5065 = vpop.f32.mrf.mxu0
        %v5066 = vadd.f32 %v4995, %v5065
        %v5067 = vpop.f32.mrf.mxu0
        %5068 = vdwg.mxu0
        %v5069 = vmul.f32 %v695, %v4634
        %v5070 = vmul.f32 %v5066, %v5069
        %v5071 = vmul.f32 %v5070, 1.442695
        %v5072 = vpow.pop %v5071
        %v5073 = vadd.f32 %v4197, %v5072
        %v5074 = vlog2.pop %v5073
        %v5075 = vmul.f32 %v5074, 0.6931472
        %v5076 = vsub.f32 %v5075, %v1567
        %vm5077 = vcmask 7168
        %5078 = vst.msk [vmem:[%s257] sm:$0xff] %vm5077, %v5076
        %p5079 = scmp.lt.s32.totalorder %s20, 1
        %s5080 = scalar_select %p5079, %s20, 1
        %s5081 = smul.addr %s5080, 8
        %s5082 = scalar_lea.vmem %s3, %s5081
        // Predicated region
        $region45: #{tpu_custom_call.1} parent=31 // pred_check
          %p5083 = pneg %p116
        $region46: #{tpu_custom_call.1} parent=31 // pred_check_branch
          %5085 = sbr.rel (%p5083) target = $region48
        $region47: #{tpu_custom_call.1} parent=31 // pred_region
          _
        $region48: #{tpu_custom_call.1} parent=31 // pred_fallthru
          _
      $region32: #{tpu_custom_call.1} parent=5 // pred_fallthru
        _
      %p5086 = scmp.le.s32.totalorder 2, %s15
      // Predicated region
      $region49: #{tpu_custom_call.1} parent=5 // pred_check
        %p5087 = pneg %p5086
      $region50: #{tpu_custom_call.1} parent=5 // pred_check_branch
        %5089 = sbr.rel (%p5087) target = $region52
      $region51: #{tpu_custom_call.1} parent=5 // pred_region
        %s5090 = ssub.s32 %s15, 2
        // Predicated region
        $region53: #{tpu_custom_call.1} parent=51 // pred_check
          %p5091 = pneg %p122
        $region54: #{tpu_custom_call.1} parent=51 // pred_check_branch
          %5093 = sbr.rel (%p5091) target = $region56
        $region55: #{tpu_custom_call.1} parent=51 // pred_region
          %p5094 = scmp.lt.s32.totalorder %s21, 1
          %s5095 = scalar_select %p5094, %s21, 1
          %s5096 = smul.addr %s5095, 8
          %s5097 = scalar_lea.vmem %s3, %s5096
        $region56: #{tpu_custom_call.1} parent=51 // pred_fallthru
          _
      $region52: #{tpu_custom_call.1} parent=5 // pred_fallthru
        _
    $region6: #{tpu_custom_call.1} parent=1 // loop_footer
      %s19 = sadd.s32 1, %s15
    $region7: #{tpu_custom_call.1} parent=1 // loop_footer_branch
      %14 = sbr.rel target = $region3
    $region8: #{tpu_custom_call.1} parent=1 // loop_exit
      _
    %5098 = vsyncpa [#allocation3], 1
    %s5099 = scalar_lea.sflag [#allocation3], 1
    %5100 = vsyncpa %s5099, 1
    %5101 = vsyncpa [#allocation5], 1
    %s5102 = scalar_lea.sflag [#allocation5], 1
    %5103 = vsyncpa %s5102, 1

</llo_original>
